<compile_context>
chip_gen: v5e
topology: v5e:2x2
jax: 0.10.0
libtpu: 0.0.40
codegen_flags: <defaults>
</compile_context>

<pallas_src>
import functools

import jax
import jax.numpy as jnp
from jax.experimental import pallas as pl
from jax.experimental.pallas import tpu as pltpu

LANE = 128


# --------------------------------------------------------------------------
# Fused kernel: conv(im2col matmul) + avgpool over grid blocks, then on the
# last grid step the LSTM / attention / classifier tail from VMEM scratch.
# --------------------------------------------------------------------------
def _fused_kernel(TT, BB, HW,
                  col_ref, cw_ref, cb_ref,
                  wih0f, whh0f, b0f, wih0b, whh0b, b0b,
                  wih1f, whh1f, b1f, wih1b, whh1b, b1b,
                  wa1, ba1, wa2, ba2, w1c, b1c,
                  fmap_ref, out_ref, pool_ref):
    blk = pl.program_id(0)
    n_img = fmap_ref.shape[0] // HW          # images in this grid block
    Cout = fmap_ref.shape[1]

    # ---- backbone stand-in conv (im2col matmul) + per-image average pool ----
    y = jnp.dot(col_ref[...], cw_ref[...],
                preferred_element_type=jnp.float32) + cb_ref[...]
    fmap_ref[...] = y
    row0 = pl.multiple_of(blk * n_img, 8 if n_img % 8 == 0 else 1)
    pool_ref[pl.ds(row0, n_img), :] = jnp.mean(
        y.reshape(n_img, HW, Cout), axis=1)

    # ---- final grid step: 2-layer biLSTM + attention + classifier ----
    @pl.when(blk == pl.num_programs(0) - 1)
    def _():
        Hd = whh0f.shape[0]
        feats_flat = pool_ref[...]                       # (TT*BB, D)

        def run_dir(x_flat, wih_ref, whh_ref, b_ref, reverse):
            # Hoisted input projection: one bf16 matmul for all timesteps.
            gx = jnp.dot(x_flat.astype(jnp.bfloat16), wih_ref[...],
                         preferred_element_type=jnp.float32) + b_ref[...]
            whh = whh_ref[...]
            h = jnp.zeros((BB, Hd), jnp.float32)
            c = jnp.zeros((BB, Hd), jnp.float32)
            outs = [None] * TT
            order = range(TT - 1, -1, -1) if reverse else range(TT)
            for t in order:                              # TT is tiny & static
                gates = gx[t * BB:(t + 1) * BB, :] + jnp.dot(
                    h, whh, preferred_element_type=jnp.float32)   # (BB, 4H)
                # one full-vreg sigmoid + one full-vreg tanh (4H == 128 lanes)
                sg = jax.nn.sigmoid(gates)
                tg = jnp.tanh(gates)
                i = sg[:, 0 * Hd:1 * Hd]
                f = sg[:, 1 * Hd:2 * Hd]
                g = tg[:, 2 * Hd:3 * Hd]
                o = sg[:, 3 * Hd:4 * Hd]
                c = f * c + i * g
                h = o * jnp.tanh(c)
                outs[t] = h
            return jnp.stack(outs, axis=0)               # (TT, BB, Hd)

        # layer 0 (bidirectional); inter-layer dropout = identity (inference)
        yf0 = run_dir(feats_flat, wih0f, whh0f, b0f, reverse=False)
        yb0 = run_dir(feats_flat, wih0b, whh0b, b0b, reverse=True)
        l0 = jnp.concatenate([yf0, yb0], axis=-1).reshape(TT * BB, 2 * Hd)

        # layer 1 (bidirectional)
        yf1 = run_dir(l0, wih1f, whh1f, b1f, reverse=False)
        yb1 = run_dir(l0, wih1b, whh1b, b1b, reverse=True)
        xl = jnp.concatenate([yf1, yb1], axis=-1)        # (TT, BB, 2H) == x_lstm

        # attention: Linear -> tanh -> Linear(128->1) -> softmax(seq) -> bmm
        Fd = 2 * Hd
        h1 = jnp.tanh(jnp.dot(xl.reshape(TT * BB, Fd), wa1[...],
                              preferred_element_type=jnp.float32) + ba1[...])
        h1 = h1.reshape(TT, BB, -1)                      # (TT, BB, 128)
        scores = jnp.sum(h1 * wa2[...], axis=-1) + ba2[...]   # (TT, BB)
        m = jnp.max(scores, axis=1, keepdims=True)
        e = jnp.exp(scores - m)
        wgt = e / jnp.sum(e, axis=1, keepdims=True)      # softmax over seq
        x_attn = jnp.sum(wgt[:, :, None] * xl, axis=1)   # (TT, 2H)

        # classifier (weights padded to 128 lanes -> dense store); dropout on
        # the logits is identity at inference time.
        out_ref[...] = jnp.dot(x_attn, w1c[...],
                               preferred_element_type=jnp.float32) + b1c[...]


# --------------------------------------------------------------------------
# Full forward pass
# --------------------------------------------------------------------------
def resnext_lstm_forward(x, params):
    # x: (batch, seq, c, h, w), matching the PyTorch input convention.
    B, T, C, H, W = x.shape
    N = B * T
    HW = H * W
    xf = x.reshape(N, C, H, W).transpose(0, 2, 3, 1)     # -> NHWC

    conv_w, conv_b = params['conv_w'], params['conv_b']
    Cout = conv_w.shape[-1]
    KC = 9 * C

    # im2col (XLA glue, bf16 to halve the HBM traffic of the col tensor).
    xpad = jnp.pad(xf.astype(jnp.bfloat16), ((0, 0), (1, 1), (1, 1), (0, 0)))
    patches = [xpad[:, ky:ky + H, kx:kx + W, :]
               for ky in range(3) for kx in range(3)]
    col = jnp.concatenate(patches, axis=-1).reshape(N * HW, KC)
    w_col = conv_w.reshape(KC, Cout).astype(jnp.bfloat16)

    # Grid over image blocks (weights stay VMEM resident; pooled block keeps
    # 8-row sublane alignment).
    img_per_blk = 8 if N % 8 == 0 else N
    n_blk = N // img_per_blk
    TM = img_per_blk * HW

    # classifier / attention weights (pad logits to 128 lanes).
    nc = params['b1'].shape[1]
    assert nc <= LANE
    w1_pad = jnp.pad(params['w1_t'], ((0, 0), (0, LANE - nc)))
    b1_pad = jnp.pad(params['b1'], ((0, 0), (0, LANE - nc)))
    wa2_row = params['wa2_t'].reshape(1, -1)             # (1, 128)

    lp = params['lstm']
    weight_args = []
    for layer in (0, 1):
        for d in ('fwd', 'bwd'):
            wih, whh, b = lp[layer][d]
            weight_args += [wih.astype(jnp.bfloat16), whh, b]   # W_ih in bf16
    weight_args += [params['wa1_t'], params['ba1'], wa2_row, params['ba2'],
                    w1_pad, b1_pad]

    def resident(a):                                     # full array, loaded once
        return pl.BlockSpec(a.shape, lambda i: (0,) * a.ndim)

    kernel = functools.partial(_fused_kernel, B, T, HW)

    fmap_flat, logits_pad = pl.pallas_call(
        kernel,
        out_shape=(jax.ShapeDtypeStruct((N * HW, Cout), jnp.float32),
                   jax.ShapeDtypeStruct((B, LANE), jnp.float32)),
        grid=(n_blk,),
        in_specs=[pl.BlockSpec((TM, KC), lambda i: (i, 0)),
                  resident(w_col), resident(conv_b)]
                 + [resident(a) for a in weight_args],
        out_specs=(pl.BlockSpec((TM, Cout), lambda i: (i, 0)),
                   pl.BlockSpec((B, LANE), lambda i: (0, 0))),
        scratch_shapes=[pltpu.VMEM((N, Cout), jnp.float32)],
        compiler_params=pltpu.CompilerParams(
            dimension_semantics=("arbitrary",)),
    )(col, w_col, conv_b, *weight_args)

    fmap = fmap_flat.reshape(N, H, W, Cout)
    return fmap, logits_pad[:, :nc]


if __name__ == "__main__":
    B, T = 2, 8                 # batch_size, seq_length
    C, H, W = 4, 16, 16         # per-frame channels / spatial
    latent_dim = 128            # lane-dense feature width
    hidden_dim = 32             # 4*hidden = 128 -> full-vreg gate slab
    num_classes = 2

    key = jax.random.PRNGKey(0)
    keys = iter(jax.random.split(key, 32))

    def rnd(shape, scale=0.1):
        return scale * jax.random.normal(next(keys), shape, jnp.float32)

    params = {
        'conv_w': rnd((3, 3, C, latent_dim)),
        'conv_b': rnd((1, latent_dim)),
    }
    lstm_params = []
    in_dim = latent_dim
    for _layer in range(2):
        layer_p = {}
        for d in ('fwd', 'bwd'):
            layer_p[d] = (rnd((in_dim, 4 * hidden_dim)),      # W_ih^T
                          rnd((hidden_dim, 4 * hidden_dim)),  # W_hh^T
                          rnd((1, 4 * hidden_dim)))           # b_ih + b_hh
        lstm_params.append(layer_p)
        in_dim = 2 * hidden_dim                               # bidirectional
    params['lstm'] = lstm_params

    F_dim = 2 * hidden_dim
    params['wa1_t'] = rnd((F_dim, 128))
    params['ba1'] = rnd((1, 128))
    params['wa2_t'] = rnd((128, 1))
    params['ba2'] = rnd((1, 1))
    params['w1_t'] = rnd((F_dim, num_classes))
    params['b1'] = rnd((1, num_classes))

    x = jax.random.normal(next(keys), (B, T, C, H, W), jnp.float32)

    fmap, logits = jax.jit(resnext_lstm_forward)(x, params)
    jax.block_until_ready((fmap, logits))

    assert fmap.shape == (B * T, H, W, latent_dim)
    assert logits.shape == (B, num_classes)
    assert bool(jnp.all(jnp.isfinite(fmap))) and bool(jnp.all(jnp.isfinite(logits)))
    print("KERNEL_OK")
</pallas_src>

<mosaic_0001>
module attributes {stable_mosaic.version = 11 : i64} {
  func.func @_fused_kernel(%arg0: i32, %arg1: memref<2048x36xbf16, #tpu.memory_space<vmem>>, %arg2: memref<36x128xbf16, #tpu.memory_space<vmem>>, %arg3: memref<1x128xf32, #tpu.memory_space<vmem>>, %arg4: memref<128x128xbf16, #tpu.memory_space<vmem>>, %arg5: memref<32x128xf32, #tpu.memory_space<vmem>>, %arg6: memref<1x128xf32, #tpu.memory_space<vmem>>, %arg7: memref<128x128xbf16, #tpu.memory_space<vmem>>, %arg8: memref<32x128xf32, #tpu.memory_space<vmem>>, %arg9: memref<1x128xf32, #tpu.memory_space<vmem>>, %arg10: memref<64x128xbf16, #tpu.memory_space<vmem>>, %arg11: memref<32x128xf32, #tpu.memory_space<vmem>>, %arg12: memref<1x128xf32, #tpu.memory_space<vmem>>, %arg13: memref<64x128xbf16, #tpu.memory_space<vmem>>, %arg14: memref<32x128xf32, #tpu.memory_space<vmem>>, %arg15: memref<1x128xf32, #tpu.memory_space<vmem>>, %arg16: memref<64x128xf32, #tpu.memory_space<vmem>>, %arg17: memref<1x128xf32, #tpu.memory_space<vmem>>, %arg18: memref<1x128xf32, #tpu.memory_space<vmem>>, %arg19: memref<1x1xf32, #tpu.memory_space<vmem>>, %arg20: memref<64x128xf32, #tpu.memory_space<vmem>>, %arg21: memref<1x128xf32, #tpu.memory_space<vmem>>, %arg22: memref<2048x128xf32, #tpu.memory_space<vmem>>, %arg23: memref<2x128xf32, #tpu.memory_space<vmem>>, %arg24: memref<16x128xf32, #tpu.memory_space<vmem>>) attributes {dimension_semantics = [#tpu.dimension_semantics<arbitrary>], iteration_bounds = array<i64: 2>, scalar_prefetch = 0 : i64, scratch_operands = 1 : i64, tpu.core_type = #tpu.core_type<tc>, window_params = [{transform_indices = @transform_0, window_bounds = array<i64: 2048, 36>}, {pipeline_mode = #tpu.pipeline_mode<synchronous>, transform_indices = @transform_1, window_bounds = array<i64: 36, 128>}, {pipeline_mode = #tpu.pipeline_mode<synchronous>, transform_indices = @transform_2, window_bounds = array<i64: 1, 128>}, {pipeline_mode = #tpu.pipeline_mode<synchronous>, transform_indices = @transform_3, window_bounds = array<i64: 128, 128>}, {pipeline_mode = #tpu.pipeline_mode<synchronous>, transform_indices = @transform_4, window_bounds = array<i64: 32, 128>}, {pipeline_mode = #tpu.pipeline_mode<synchronous>, transform_indices = @transform_5, window_bounds = array<i64: 1, 128>}, {pipeline_mode = #tpu.pipeline_mode<synchronous>, transform_indices = @transform_6, window_bounds = array<i64: 128, 128>}, {pipeline_mode = #tpu.pipeline_mode<synchronous>, transform_indices = @transform_7, window_bounds = array<i64: 32, 128>}, {pipeline_mode = #tpu.pipeline_mode<synchronous>, transform_indices = @transform_8, window_bounds = array<i64: 1, 128>}, {pipeline_mode = #tpu.pipeline_mode<synchronous>, transform_indices = @transform_9, window_bounds = array<i64: 64, 128>}, {pipeline_mode = #tpu.pipeline_mode<synchronous>, transform_indices = @transform_10, window_bounds = array<i64: 32, 128>}, {pipeline_mode = #tpu.pipeline_mode<synchronous>, transform_indices = @transform_11, window_bounds = array<i64: 1, 128>}, {pipeline_mode = #tpu.pipeline_mode<synchronous>, transform_indices = @transform_12, window_bounds = array<i64: 64, 128>}, {pipeline_mode = #tpu.pipeline_mode<synchronous>, transform_indices = @transform_13, window_bounds = array<i64: 32, 128>}, {pipeline_mode = #tpu.pipeline_mode<synchronous>, transform_indices = @transform_14, window_bounds = array<i64: 1, 128>}, {pipeline_mode = #tpu.pipeline_mode<synchronous>, transform_indices = @transform_15, window_bounds = array<i64: 64, 128>}, {pipeline_mode = #tpu.pipeline_mode<synchronous>, transform_indices = @transform_16, window_bounds = array<i64: 1, 128>}, {pipeline_mode = #tpu.pipeline_mode<synchronous>, transform_indices = @transform_17, window_bounds = array<i64: 1, 128>}, {pipeline_mode = #tpu.pipeline_mode<synchronous>, transform_indices = @transform_18, window_bounds = array<i64: 1, 1>}, {pipeline_mode = #tpu.pipeline_mode<synchronous>, transform_indices = @transform_19, window_bounds = array<i64: 64, 128>}, {pipeline_mode = #tpu.pipeline_mode<synchronous>, transform_indices = @transform_20, window_bounds = array<i64: 1, 128>}, {transform_indices = @transform_21, window_bounds = array<i64: 2048, 128>}, {pipeline_mode = #tpu.pipeline_mode<synchronous>, transform_indices = @transform_22, window_bounds = array<i64: 2, 128>}]} {
    %c0 = arith.constant 0 : index
    %c0_0 = arith.constant 0 : index
    %0 = vector.load %arg1[%c0, %c0_0] : memref<2048x36xbf16, #tpu.memory_space<vmem>>, vector<2048x36xbf16>
    %c0_1 = arith.constant 0 : index
    %c0_2 = arith.constant 0 : index
    %1 = vector.load %arg2[%c0_1, %c0_2] : memref<36x128xbf16, #tpu.memory_space<vmem>>, vector<36x128xbf16>
    %cst = arith.constant dense<0.000000e+00> : vector<2048x128xf32>
    %2 = tpu.matmul %0, %1, %cst {dimension_numbers = #tpu.dot_dimension_numbers<[1], [0], [0], [1], [0, 0, 1, 1], [], []>} : vector<2048x36xbf16>, vector<36x128xbf16>, vector<2048x128xf32> -> vector<2048x128xf32>
    %c0_3 = arith.constant 0 : index
    %c0_4 = arith.constant 0 : index
    %3 = vector.load %arg3[%c0_3, %c0_4] : memref<1x128xf32, #tpu.memory_space<vmem>>, vector<1x128xf32>
    %4 = vector.broadcast %3 : vector<1x128xf32> to vector<2048x128xf32>
    %5 = arith.addf %2, %4 : vector<2048x128xf32>
    %c0_5 = arith.constant 0 : index
    %c0_6 = arith.constant 0 : index
    %6 = vector.load %arg22[%c0_5, %c0_6] : memref<2048x128xf32, #tpu.memory_space<vmem>>, vector<2048x128xf32>
    tpu.vector_store %arg22[%c0_5, %c0_6], %5 {strides = array<i32>} : memref<2048x128xf32, #tpu.memory_space<vmem>>, vector<2048x128xf32>,
    %c8_i32 = arith.constant 8 : i32
    %7 = arith.muli %arg0, %c8_i32 : i32
    %8 = tpu.assume_multiple %7, 8 : i32
    %9 = vector.shape_cast %5 : vector<2048x128xf32> to vector<8x256x128xf32>
    %cst_7 = arith.constant dense<0.000000e+00> : vector<8x128xf32>
    %10 = vector.multi_reduction <add>, %9, %cst_7 [1] : vector<8x256x128xf32> to vector<8x128xf32>
    %cst_8 = arith.constant 2.560000e+02 : f32
    %11 = vector.broadcast %cst_8 : f32 to vector<8x128xf32>
    %12 = arith.divf %10, %11 : vector<8x128xf32>
    %13 = arith.index_cast %8 : i32 to index
    %c0_9 = arith.constant 0 : index
    %14 = vector.load %arg24[%13, %c0_9] : memref<16x128xf32, #tpu.memory_space<vmem>>, vector<8x128xf32>
    tpu.vector_store %arg24[%13, %c0_9], %12 {strides = array<i32>} : memref<16x128xf32, #tpu.memory_space<vmem>>, vector<8x128xf32>,
    %c1_i32 = arith.constant 1 : i32
    %15 = arith.cmpi eq, %arg0, %c1_i32 : i32
    %16 = arith.extui %15 : i1 to i32
    %c0_i32 = arith.constant 0 : i32
    %17 = arith.cmpi ne, %16, %c0_i32 : i32
    scf.if %17 {
      %c0_10 = arith.constant 0 : index
      %c0_11 = arith.constant 0 : index
      %18 = vector.load %arg24[%c0_10, %c0_11] : memref<16x128xf32, #tpu.memory_space<vmem>>, vector<16x128xf32>
      %19 = arith.truncf %18 : vector<16x128xf32> to vector<16x128xbf16>
      %c0_12 = arith.constant 0 : index
      %c0_13 = arith.constant 0 : index
      %20 = vector.load %arg4[%c0_12, %c0_13] : memref<128x128xbf16, #tpu.memory_space<vmem>>, vector<128x128xbf16>
      %cst_14 = arith.constant dense<0.000000e+00> : vector<16x128xf32>
      %21 = tpu.matmul %19, %20, %cst_14 {dimension_numbers = #tpu.dot_dimension_numbers<[1], [0], [0], [1], [0, 0, 1, 1], [], []>} : vector<16x128xbf16>, vector<128x128xbf16>, vector<16x128xf32> -> vector<16x128xf32>
      %c0_15 = arith.constant 0 : index
      %c0_16 = arith.constant 0 : index
      %22 = vector.load %arg6[%c0_15, %c0_16] : memref<1x128xf32, #tpu.memory_space<vmem>>, vector<1x128xf32>
      %23 = vector.broadcast %22 : vector<1x128xf32> to vector<16x128xf32>
      %24 = arith.addf %21, %23 : vector<16x128xf32>
      %c0_17 = arith.constant 0 : index
      %c0_18 = arith.constant 0 : index
      %25 = vector.load %arg5[%c0_17, %c0_18] : memref<32x128xf32, #tpu.memory_space<vmem>>, vector<32x128xf32>
      %cst_19 = arith.constant 0.000000e+00 : f32
      %26 = vector.broadcast %cst_19 : f32 to vector<8x32xf32>
      %cst_20 = arith.constant 0.000000e+00 : f32
      %27 = vector.broadcast %cst_20 : f32 to vector<8x32xf32>
      %28 = vector.extract_strided_slice %24 {offsets = [0, 0], sizes = [8, 128], strides = [1, 1]} : vector<16x128xf32> to vector<8x128xf32>
      %cst_21 = arith.constant dense<0.000000e+00> : vector<8x128xf32>
      %29 = tpu.matmul %26, %25, %cst_21 {dimension_numbers = #tpu.dot_dimension_numbers<[1], [0], [0], [1], [0, 0, 1, 1], [], []>} : vector<8x32xf32>, vector<32x128xf32>, vector<8x128xf32> -> vector<8x128xf32>
      %30 = arith.addf %28, %29 : vector<8x128xf32>
      %31 = arith.negf %30 : vector<8x128xf32>
      %32 = math.exp %31 : vector<8x128xf32>
      %cst_22 = arith.constant 1.000000e+00 : f32
      %33 = vector.broadcast %cst_22 : f32 to vector<8x128xf32>
      %34 = arith.addf %33, %32 : vector<8x128xf32>
      %35 = arith.divf %33, %34 : vector<8x128xf32>
      %36 = math.tanh %30 : vector<8x128xf32>
      %37 = vector.extract_strided_slice %35 {offsets = [0, 0], sizes = [8, 32], strides = [1, 1]} : vector<8x128xf32> to vector<8x32xf32>
      %38 = vector.extract_strided_slice %35 {offsets = [0, 32], sizes = [8, 32], strides = [1, 1]} : vector<8x128xf32> to vector<8x32xf32>
      %39 = vector.extract_strided_slice %36 {offsets = [0, 64], sizes = [8, 32], strides = [1, 1]} : vector<8x128xf32> to vector<8x32xf32>
      %40 = vector.extract_strided_slice %35 {offsets = [0, 96], sizes = [8, 32], strides = [1, 1]} : vector<8x128xf32> to vector<8x32xf32>
      %41 = arith.mulf %38, %27 : vector<8x32xf32>
      %42 = arith.mulf %37, %39 : vector<8x32xf32>
      %43 = arith.addf %41, %42 : vector<8x32xf32>
      %44 = math.tanh %43 : vector<8x32xf32>
      %45 = arith.mulf %40, %44 : vector<8x32xf32>
      %46 = vector.extract_strided_slice %24 {offsets = [8, 0], sizes = [8, 128], strides = [1, 1]} : vector<16x128xf32> to vector<8x128xf32>
      %cst_23 = arith.constant dense<0.000000e+00> : vector<8x128xf32>
      %47 = tpu.matmul %45, %25, %cst_23 {dimension_numbers = #tpu.dot_dimension_numbers<[1], [0], [0], [1], [0, 0, 1, 1], [], []>} : vector<8x32xf32>, vector<32x128xf32>, vector<8x128xf32> -> vector<8x128xf32>
      %48 = arith.addf %46, %47 : vector<8x128xf32>
      %49 = arith.negf %48 : vector<8x128xf32>
      %50 = math.exp %49 : vector<8x128xf32>
      %cst_24 = arith.constant 1.000000e+00 : f32
      %51 = vector.broadcast %cst_24 : f32 to vector<8x128xf32>
      %52 = arith.addf %51, %50 : vector<8x128xf32>
      %53 = arith.divf %51, %52 : vector<8x128xf32>
      %54 = math.tanh %48 : vector<8x128xf32>
      %55 = vector.extract_strided_slice %53 {offsets = [0, 0], sizes = [8, 32], strides = [1, 1]} : vector<8x128xf32> to vector<8x32xf32>
      %56 = vector.extract_strided_slice %53 {offsets = [0, 32], sizes = [8, 32], strides = [1, 1]} : vector<8x128xf32> to vector<8x32xf32>
      %57 = vector.extract_strided_slice %54 {offsets = [0, 64], sizes = [8, 32], strides = [1, 1]} : vector<8x128xf32> to vector<8x32xf32>
      %58 = vector.extract_strided_slice %53 {offsets = [0, 96], sizes = [8, 32], strides = [1, 1]} : vector<8x128xf32> to vector<8x32xf32>
      %59 = arith.mulf %56, %43 : vector<8x32xf32>
      %60 = arith.mulf %55, %57 : vector<8x32xf32>
      %61 = arith.addf %59, %60 : vector<8x32xf32>
      %62 = math.tanh %61 : vector<8x32xf32>
      %63 = arith.mulf %58, %62 : vector<8x32xf32>
      %64 = vector.shape_cast %45 : vector<8x32xf32> to vector<1x8x32xf32>
      %65 = vector.shape_cast %63 : vector<8x32xf32> to vector<1x8x32xf32>
      %66 = tpu.concatenate %64, %65 in 0 : vector<1x8x32xf32>, vector<1x8x32xf32> -> vector<2x8x32xf32>
      %67 = arith.truncf %18 : vector<16x128xf32> to vector<16x128xbf16>
      %c0_25 = arith.constant 0 : index
      %c0_26 = arith.constant 0 : index
      %68 = vector.load %arg7[%c0_25, %c0_26] : memref<128x128xbf16, #tpu.memory_space<vmem>>, vector<128x128xbf16>
      %cst_27 = arith.constant dense<0.000000e+00> : vector<16x128xf32>
      %69 = tpu.matmul %67, %68, %cst_27 {dimension_numbers = #tpu.dot_dimension_numbers<[1], [0], [0], [1], [0, 0, 1, 1], [], []>} : vector<16x128xbf16>, vector<128x128xbf16>, vector<16x128xf32> -> vector<16x128xf32>
      %c0_28 = arith.constant 0 : index
      %c0_29 = arith.constant 0 : index
      %70 = vector.load %arg9[%c0_28, %c0_29] : memref<1x128xf32, #tpu.memory_space<vmem>>, vector<1x128xf32>
      %71 = vector.broadcast %70 : vector<1x128xf32> to vector<16x128xf32>
      %72 = arith.addf %69, %71 : vector<16x128xf32>
      %c0_30 = arith.constant 0 : index
      %c0_31 = arith.constant 0 : index
      %73 = vector.load %arg8[%c0_30, %c0_31] : memref<32x128xf32, #tpu.memory_space<vmem>>, vector<32x128xf32>
      %cst_32 = arith.constant 0.000000e+00 : f32
      %74 = vector.broadcast %cst_32 : f32 to vector<8x32xf32>
      %cst_33 = arith.constant 0.000000e+00 : f32
      %75 = vector.broadcast %cst_33 : f32 to vector<8x32xf32>
      %76 = vector.extract_strided_slice %72 {offsets = [8, 0], sizes = [8, 128], strides = [1, 1]} : vector<16x128xf32> to vector<8x128xf32>
      %cst_34 = arith.constant dense<0.000000e+00> : vector<8x128xf32>
      %77 = tpu.matmul %74, %73, %cst_34 {dimension_numbers = #tpu.dot_dimension_numbers<[1], [0], [0], [1], [0, 0, 1, 1], [], []>} : vector<8x32xf32>, vector<32x128xf32>, vector<8x128xf32> -> vector<8x128xf32>
      %78 = arith.addf %76, %77 : vector<8x128xf32>
      %79 = arith.negf %78 : vector<8x128xf32>
      %80 = math.exp %79 : vector<8x128xf32>
      %cst_35 = arith.constant 1.000000e+00 : f32
      %81 = vector.broadcast %cst_35 : f32 to vector<8x128xf32>
      %82 = arith.addf %81, %80 : vector<8x128xf32>
      %83 = arith.divf %81, %82 : vector<8x128xf32>
      %84 = math.tanh %78 : vector<8x128xf32>
      %85 = vector.extract_strided_slice %83 {offsets = [0, 0], sizes = [8, 32], strides = [1, 1]} : vector<8x128xf32> to vector<8x32xf32>
      %86 = vector.extract_strided_slice %83 {offsets = [0, 32], sizes = [8, 32], strides = [1, 1]} : vector<8x128xf32> to vector<8x32xf32>
      %87 = vector.extract_strided_slice %84 {offsets = [0, 64], sizes = [8, 32], strides = [1, 1]} : vector<8x128xf32> to vector<8x32xf32>
      %88 = vector.extract_strided_slice %83 {offsets = [0, 96], sizes = [8, 32], strides = [1, 1]} : vector<8x128xf32> to vector<8x32xf32>
      %89 = arith.mulf %86, %75 : vector<8x32xf32>
      %90 = arith.mulf %85, %87 : vector<8x32xf32>
      %91 = arith.addf %89, %90 : vector<8x32xf32>
      %92 = math.tanh %91 : vector<8x32xf32>
      %93 = arith.mulf %88, %92 : vector<8x32xf32>
      %94 = vector.extract_strided_slice %72 {offsets = [0, 0], sizes = [8, 128], strides = [1, 1]} : vector<16x128xf32> to vector<8x128xf32>
      %cst_36 = arith.constant dense<0.000000e+00> : vector<8x128xf32>
      %95 = tpu.matmul %93, %73, %cst_36 {dimension_numbers = #tpu.dot_dimension_numbers<[1], [0], [0], [1], [0, 0, 1, 1], [], []>} : vector<8x32xf32>, vector<32x128xf32>, vector<8x128xf32> -> vector<8x128xf32>
      %96 = arith.addf %94, %95 : vector<8x128xf32>
      %97 = arith.negf %96 : vector<8x128xf32>
      %98 = math.exp %97 : vector<8x128xf32>
      %cst_37 = arith.constant 1.000000e+00 : f32
      %99 = vector.broadcast %cst_37 : f32 to vector<8x128xf32>
      %100 = arith.addf %99, %98 : vector<8x128xf32>
      %101 = arith.divf %99, %100 : vector<8x128xf32>
      %102 = math.tanh %96 : vector<8x128xf32>
      %103 = vector.extract_strided_slice %101 {offsets = [0, 0], sizes = [8, 32], strides = [1, 1]} : vector<8x128xf32> to vector<8x32xf32>
      %104 = vector.extract_strided_slice %101 {offsets = [0, 32], sizes = [8, 32], strides = [1, 1]} : vector<8x128xf32> to vector<8x32xf32>
      %105 = vector.extract_strided_slice %102 {offsets = [0, 64], sizes = [8, 32], strides = [1, 1]} : vector<8x128xf32> to vector<8x32xf32>
      %106 = vector.extract_strided_slice %101 {offsets = [0, 96], sizes = [8, 32], strides = [1, 1]} : vector<8x128xf32> to vector<8x32xf32>
      %107 = arith.mulf %104, %91 : vector<8x32xf32>
      %108 = arith.mulf %103, %105 : vector<8x32xf32>
      %109 = arith.addf %107, %108 : vector<8x32xf32>
      %110 = math.tanh %109 : vector<8x32xf32>
      %111 = arith.mulf %106, %110 : vector<8x32xf32>
      %112 = vector.shape_cast %111 : vector<8x32xf32> to vector<1x8x32xf32>
      %113 = vector.shape_cast %93 : vector<8x32xf32> to vector<1x8x32xf32>
      %114 = tpu.concatenate %112, %113 in 0 : vector<1x8x32xf32>, vector<1x8x32xf32> -> vector<2x8x32xf32>
      %115 = tpu.concatenate %66, %114 in 2 : vector<2x8x32xf32>, vector<2x8x32xf32> -> vector<2x8x64xf32>
      %116 = vector.shape_cast %115 : vector<2x8x64xf32> to vector<16x64xf32>
      %117 = arith.truncf %116 : vector<16x64xf32> to vector<16x64xbf16>
      %c0_38 = arith.constant 0 : index
      %c0_39 = arith.constant 0 : index
      %118 = vector.load %arg10[%c0_38, %c0_39] : memref<64x128xbf16, #tpu.memory_space<vmem>>, vector<64x128xbf16>
      %cst_40 = arith.constant dense<0.000000e+00> : vector<16x128xf32>
      %119 = tpu.matmul %117, %118, %cst_40 {dimension_numbers = #tpu.dot_dimension_numbers<[1], [0], [0], [1], [0, 0, 1, 1], [], []>} : vector<16x64xbf16>, vector<64x128xbf16>, vector<16x128xf32> -> vector<16x128xf32>
      %c0_41 = arith.constant 0 : index
      %c0_42 = arith.constant 0 : index
      %120 = vector.load %arg12[%c0_41, %c0_42] : memref<1x128xf32, #tpu.memory_space<vmem>>, vector<1x128xf32>
      %121 = vector.broadcast %120 : vector<1x128xf32> to vector<16x128xf32>
      %122 = arith.addf %119, %121 : vector<16x128xf32>
      %c0_43 = arith.constant 0 : index
      %c0_44 = arith.constant 0 : index
      %123 = vector.load %arg11[%c0_43, %c0_44] : memref<32x128xf32, #tpu.memory_space<vmem>>, vector<32x128xf32>
      %cst_45 = arith.constant 0.000000e+00 : f32
      %124 = vector.broadcast %cst_45 : f32 to vector<8x32xf32>
      %cst_46 = arith.constant 0.000000e+00 : f32
      %125 = vector.broadcast %cst_46 : f32 to vector<8x32xf32>
      %126 = vector.extract_strided_slice %122 {offsets = [0, 0], sizes = [8, 128], strides = [1, 1]} : vector<16x128xf32> to vector<8x128xf32>
      %cst_47 = arith.constant dense<0.000000e+00> : vector<8x128xf32>
      %127 = tpu.matmul %124, %123, %cst_47 {dimension_numbers = #tpu.dot_dimension_numbers<[1], [0], [0], [1], [0, 0, 1, 1], [], []>} : vector<8x32xf32>, vector<32x128xf32>, vector<8x128xf32> -> vector<8x128xf32>
      %128 = arith.addf %126, %127 : vector<8x128xf32>
      %129 = arith.negf %128 : vector<8x128xf32>
      %130 = math.exp %129 : vector<8x128xf32>
      %cst_48 = arith.constant 1.000000e+00 : f32
      %131 = vector.broadcast %cst_48 : f32 to vector<8x128xf32>
      %132 = arith.addf %131, %130 : vector<8x128xf32>
      %133 = arith.divf %131, %132 : vector<8x128xf32>
      %134 = math.tanh %128 : vector<8x128xf32>
      %135 = vector.extract_strided_slice %133 {offsets = [0, 0], sizes = [8, 32], strides = [1, 1]} : vector<8x128xf32> to vector<8x32xf32>
      %136 = vector.extract_strided_slice %133 {offsets = [0, 32], sizes = [8, 32], strides = [1, 1]} : vector<8x128xf32> to vector<8x32xf32>
      %137 = vector.extract_strided_slice %134 {offsets = [0, 64], sizes = [8, 32], strides = [1, 1]} : vector<8x128xf32> to vector<8x32xf32>
      %138 = vector.extract_strided_slice %133 {offsets = [0, 96], sizes = [8, 32], strides = [1, 1]} : vector<8x128xf32> to vector<8x32xf32>
      %139 = arith.mulf %136, %125 : vector<8x32xf32>
      %140 = arith.mulf %135, %137 : vector<8x32xf32>
      %141 = arith.addf %139, %140 : vector<8x32xf32>
      %142 = math.tanh %141 : vector<8x32xf32>
      %143 = arith.mulf %138, %142 : vector<8x32xf32>
      %144 = vector.extract_strided_slice %122 {offsets = [8, 0], sizes = [8, 128], strides = [1, 1]} : vector<16x128xf32> to vector<8x128xf32>
      %cst_49 = arith.constant dense<0.000000e+00> : vector<8x128xf32>
      %145 = tpu.matmul %143, %123, %cst_49 {dimension_numbers = #tpu.dot_dimension_numbers<[1], [0], [0], [1], [0, 0, 1, 1], [], []>} : vector<8x32xf32>, vector<32x128xf32>, vector<8x128xf32> -> vector<8x128xf32>
      %146 = arith.addf %144, %145 : vector<8x128xf32>
      %147 = arith.negf %146 : vector<8x128xf32>
      %148 = math.exp %147 : vector<8x128xf32>
      %cst_50 = arith.constant 1.000000e+00 : f32
      %149 = vector.broadcast %cst_50 : f32 to vector<8x128xf32>
      %150 = arith.addf %149, %148 : vector<8x128xf32>
      %151 = arith.divf %149, %150 : vector<8x128xf32>
      %152 = math.tanh %146 : vector<8x128xf32>
      %153 = vector.extract_strided_slice %151 {offsets = [0, 0], sizes = [8, 32], strides = [1, 1]} : vector<8x128xf32> to vector<8x32xf32>
      %154 = vector.extract_strided_slice %151 {offsets = [0, 32], sizes = [8, 32], strides = [1, 1]} : vector<8x128xf32> to vector<8x32xf32>
      %155 = vector.extract_strided_slice %152 {offsets = [0, 64], sizes = [8, 32], strides = [1, 1]} : vector<8x128xf32> to vector<8x32xf32>
      %156 = vector.extract_strided_slice %151 {offsets = [0, 96], sizes = [8, 32], strides = [1, 1]} : vector<8x128xf32> to vector<8x32xf32>
      %157 = arith.mulf %154, %141 : vector<8x32xf32>
      %158 = arith.mulf %153, %155 : vector<8x32xf32>
      %159 = arith.addf %157, %158 : vector<8x32xf32>
      %160 = math.tanh %159 : vector<8x32xf32>
      %161 = arith.mulf %156, %160 : vector<8x32xf32>
      %162 = vector.shape_cast %143 : vector<8x32xf32> to vector<1x8x32xf32>
      %163 = vector.shape_cast %161 : vector<8x32xf32> to vector<1x8x32xf32>
      %164 = tpu.concatenate %162, %163 in 0 : vector<1x8x32xf32>, vector<1x8x32xf32> -> vector<2x8x32xf32>
      %165 = arith.truncf %116 : vector<16x64xf32> to vector<16x64xbf16>
      %c0_51 = arith.constant 0 : index
      %c0_52 = arith.constant 0 : index
      %166 = vector.load %arg13[%c0_51, %c0_52] : memref<64x128xbf16, #tpu.memory_space<vmem>>, vector<64x128xbf16>
      %cst_53 = arith.constant dense<0.000000e+00> : vector<16x128xf32>
      %167 = tpu.matmul %165, %166, %cst_53 {dimension_numbers = #tpu.dot_dimension_numbers<[1], [0], [0], [1], [0, 0, 1, 1], [], []>} : vector<16x64xbf16>, vector<64x128xbf16>, vector<16x128xf32> -> vector<16x128xf32>
      %c0_54 = arith.constant 0 : index
      %c0_55 = arith.constant 0 : index
      %168 = vector.load %arg15[%c0_54, %c0_55] : memref<1x128xf32, #tpu.memory_space<vmem>>, vector<1x128xf32>
      %169 = vector.broadcast %168 : vector<1x128xf32> to vector<16x128xf32>
      %170 = arith.addf %167, %169 : vector<16x128xf32>
      %c0_56 = arith.constant 0 : index
      %c0_57 = arith.constant 0 : index
      %171 = vector.load %arg14[%c0_56, %c0_57] : memref<32x128xf32, #tpu.memory_space<vmem>>, vector<32x128xf32>
      %cst_58 = arith.constant 0.000000e+00 : f32
      %172 = vector.broadcast %cst_58 : f32 to vector<8x32xf32>
      %cst_59 = arith.constant 0.000000e+00 : f32
      %173 = vector.broadcast %cst_59 : f32 to vector<8x32xf32>
      %174 = vector.extract_strided_slice %170 {offsets = [8, 0], sizes = [8, 128], strides = [1, 1]} : vector<16x128xf32> to vector<8x128xf32>
      %cst_60 = arith.constant dense<0.000000e+00> : vector<8x128xf32>
      %175 = tpu.matmul %172, %171, %cst_60 {dimension_numbers = #tpu.dot_dimension_numbers<[1], [0], [0], [1], [0, 0, 1, 1], [], []>} : vector<8x32xf32>, vector<32x128xf32>, vector<8x128xf32> -> vector<8x128xf32>
      %176 = arith.addf %174, %175 : vector<8x128xf32>
      %177 = arith.negf %176 : vector<8x128xf32>
      %178 = math.exp %177 : vector<8x128xf32>
      %cst_61 = arith.constant 1.000000e+00 : f32
      %179 = vector.broadcast %cst_61 : f32 to vector<8x128xf32>
      %180 = arith.addf %179, %178 : vector<8x128xf32>
      %181 = arith.divf %179, %180 : vector<8x128xf32>
      %182 = math.tanh %176 : vector<8x128xf32>
      %183 = vector.extract_strided_slice %181 {offsets = [0, 0], sizes = [8, 32], strides = [1, 1]} : vector<8x128xf32> to vector<8x32xf32>
      %184 = vector.extract_strided_slice %181 {offsets = [0, 32], sizes = [8, 32], strides = [1, 1]} : vector<8x128xf32> to vector<8x32xf32>
      %185 = vector.extract_strided_slice %182 {offsets = [0, 64], sizes = [8, 32], strides = [1, 1]} : vector<8x128xf32> to vector<8x32xf32>
      %186 = vector.extract_strided_slice %181 {offsets = [0, 96], sizes = [8, 32], strides = [1, 1]} : vector<8x128xf32> to vector<8x32xf32>
      %187 = arith.mulf %184, %173 : vector<8x32xf32>
      %188 = arith.mulf %183, %185 : vector<8x32xf32>
      %189 = arith.addf %187, %188 : vector<8x32xf32>
      %190 = math.tanh %189 : vector<8x32xf32>
      %191 = arith.mulf %186, %190 : vector<8x32xf32>
      %192 = vector.extract_strided_slice %170 {offsets = [0, 0], sizes = [8, 128], strides = [1, 1]} : vector<16x128xf32> to vector<8x128xf32>
      %cst_62 = arith.constant dense<0.000000e+00> : vector<8x128xf32>
      %193 = tpu.matmul %191, %171, %cst_62 {dimension_numbers = #tpu.dot_dimension_numbers<[1], [0], [0], [1], [0, 0, 1, 1], [], []>} : vector<8x32xf32>, vector<32x128xf32>, vector<8x128xf32> -> vector<8x128xf32>
      %194 = arith.addf %192, %193 : vector<8x128xf32>
      %195 = arith.negf %194 : vector<8x128xf32>
      %196 = math.exp %195 : vector<8x128xf32>
      %cst_63 = arith.constant 1.000000e+00 : f32
      %197 = vector.broadcast %cst_63 : f32 to vector<8x128xf32>
      %198 = arith.addf %197, %196 : vector<8x128xf32>
      %199 = arith.divf %197, %198 : vector<8x128xf32>
      %200 = math.tanh %194 : vector<8x128xf32>
      %201 = vector.extract_strided_slice %199 {offsets = [0, 0], sizes = [8, 32], strides = [1, 1]} : vector<8x128xf32> to vector<8x32xf32>
      %202 = vector.extract_strided_slice %199 {offsets = [0, 32], sizes = [8, 32], strides = [1, 1]} : vector<8x128xf32> to vector<8x32xf32>
      %203 = vector.extract_strided_slice %200 {offsets = [0, 64], sizes = [8, 32], strides = [1, 1]} : vector<8x128xf32> to vector<8x32xf32>
      %204 = vector.extract_strided_slice %199 {offsets = [0, 96], sizes = [8, 32], strides = [1, 1]} : vector<8x128xf32> to vector<8x32xf32>
      %205 = arith.mulf %202, %189 : vector<8x32xf32>
      %206 = arith.mulf %201, %203 : vector<8x32xf32>
      %207 = arith.addf %205, %206 : vector<8x32xf32>
      %208 = math.tanh %207 : vector<8x32xf32>
      %209 = arith.mulf %204, %208 : vector<8x32xf32>
      %210 = vector.shape_cast %209 : vector<8x32xf32> to vector<1x8x32xf32>
      %211 = vector.shape_cast %191 : vector<8x32xf32> to vector<1x8x32xf32>
      %212 = tpu.concatenate %210, %211 in 0 : vector<1x8x32xf32>, vector<1x8x32xf32> -> vector<2x8x32xf32>
      %213 = tpu.concatenate %164, %212 in 2 : vector<2x8x32xf32>, vector<2x8x32xf32> -> vector<2x8x64xf32>
      %214 = vector.shape_cast %213 : vector<2x8x64xf32> to vector<16x64xf32>
      %c0_64 = arith.constant 0 : index
      %c0_65 = arith.constant 0 : index
      %215 = vector.load %arg16[%c0_64, %c0_65] : memref<64x128xf32, #tpu.memory_space<vmem>>, vector<64x128xf32>
      %cst_66 = arith.constant dense<0.000000e+00> : vector<16x128xf32>
      %216 = tpu.matmul %214, %215, %cst_66 {dimension_numbers = #tpu.dot_dimension_numbers<[1], [0], [0], [1], [0, 0, 1, 1], [], []>} : vector<16x64xf32>, vector<64x128xf32>, vector<16x128xf32> -> vector<16x128xf32>
      %c0_67 = arith.constant 0 : index
      %c0_68 = arith.constant 0 : index
      %217 = vector.load %arg17[%c0_67, %c0_68] : memref<1x128xf32, #tpu.memory_space<vmem>>, vector<1x128xf32>
      %218 = vector.broadcast %217 : vector<1x128xf32> to vector<16x128xf32>
      %219 = arith.addf %216, %218 : vector<16x128xf32>
      %220 = math.tanh %219 : vector<16x128xf32>
      %221 = vector.shape_cast %220 : vector<16x128xf32> to vector<2x8x128xf32>
      %c0_69 = arith.constant 0 : index
      %c0_70 = arith.constant 0 : index
      %222 = vector.load %arg18[%c0_69, %c0_70] : memref<1x128xf32, #tpu.memory_space<vmem>>, vector<1x128xf32>
      %223 = vector.shape_cast %222 : vector<1x128xf32> to vector<1x1x128xf32>
      %224 = vector.broadcast %223 : vector<1x1x128xf32> to vector<2x8x128xf32>
      %225 = arith.mulf %221, %224 : vector<2x8x128xf32>
      %cst_71 = arith.constant dense<0.000000e+00> : vector<2x8xf32>
      %226 = vector.multi_reduction <add>, %225, %cst_71 [2] : vector<2x8x128xf32> to vector<2x8xf32>
      %c0_72 = arith.constant 0 : index
      %c0_73 = arith.constant 0 : index
      %227 = vector.load %arg19[%c0_72, %c0_73] : memref<1x1xf32, #tpu.memory_space<vmem>>, vector<1x1xf32>
      %228 = vector.broadcast %227 : vector<1x1xf32> to vector<2x8xf32>
      %229 = arith.addf %226, %228 : vector<2x8xf32>
      %cst_74 = arith.constant dense<0xFF800000> : vector<2xf32>
      %230 = vector.multi_reduction <maximumf>, %229, %cst_74 [1] : vector<2x8xf32> to vector<2xf32>
      %231 = vector.shape_cast %230 : vector<2xf32> to vector<2x1xf32>
      %232 = vector.broadcast %231 : vector<2x1xf32> to vector<2x8xf32>
      %233 = arith.subf %229, %232 : vector<2x8xf32>
      %234 = math.exp %233 : vector<2x8xf32>
      %cst_75 = arith.constant dense<0.000000e+00> : vector<2xf32>
      %235 = vector.multi_reduction <add>, %234, %cst_75 [1] : vector<2x8xf32> to vector<2xf32>
      %236 = vector.shape_cast %235 : vector<2xf32> to vector<2x1xf32>
      %237 = vector.broadcast %236 : vector<2x1xf32> to vector<2x8xf32>
      %238 = arith.divf %234, %237 : vector<2x8xf32>
      %239 = vector.shape_cast %238 : vector<2x8xf32> to vector<2x8x1xf32>
      %240 = vector.broadcast %239 : vector<2x8x1xf32> to vector<2x8x64xf32>
      %241 = arith.mulf %240, %213 : vector<2x8x64xf32>
      %cst_76 = arith.constant dense<0.000000e+00> : vector<2x64xf32>
      %242 = vector.multi_reduction <add>, %241, %cst_76 [1] : vector<2x8x64xf32> to vector<2x64xf32>
      %c0_77 = arith.constant 0 : index
      %c0_78 = arith.constant 0 : index
      %243 = vector.load %arg20[%c0_77, %c0_78] : memref<64x128xf32, #tpu.memory_space<vmem>>, vector<64x128xf32>
      %cst_79 = arith.constant dense<0.000000e+00> : vector<2x128xf32>
      %244 = tpu.matmul %242, %243, %cst_79 {dimension_numbers = #tpu.dot_dimension_numbers<[1], [0], [0], [1], [0, 0, 1, 1], [], []>} : vector<2x64xf32>, vector<64x128xf32>, vector<2x128xf32> -> vector<2x128xf32>
      %c0_80 = arith.constant 0 : index
      %c0_81 = arith.constant 0 : index
      %245 = vector.load %arg21[%c0_80, %c0_81] : memref<1x128xf32, #tpu.memory_space<vmem>>, vector<1x128xf32>
      %246 = vector.broadcast %245 : vector<1x128xf32> to vector<2x128xf32>
      %247 = arith.addf %244, %246 : vector<2x128xf32>
      %c0_82 = arith.constant 0 : index
      %c0_83 = arith.constant 0 : index
      %248 = vector.load %arg23[%c0_82, %c0_83] : memref<2x128xf32, #tpu.memory_space<vmem>>, vector<2x128xf32>
      tpu.vector_store %arg23[%c0_82, %c0_83], %247 {strides = array<i32>} : memref<2x128xf32, #tpu.memory_space<vmem>>, vector<2x128xf32>,
    } else {
    }
    return
  }
  func.func @transform_0(%arg0: i32) -> (i32, i32) {
    %c0_i32 = arith.constant 0 : i32
    %c0_i32_0 = arith.constant 0 : i32
    return %arg0, %c0_i32 : i32, i32
  }
  func.func @transform_1(%arg0: i32) -> (i32, i32) {
    %c0_i32 = arith.constant 0 : i32
    %c0_i32_0 = arith.constant 0 : i32
    %c0_i32_1 = arith.constant 0 : i32
    return %c0_i32, %c0_i32_0 : i32, i32
  }
  func.func @transform_2(%arg0: i32) -> (i32, i32) {
    %c0_i32 = arith.constant 0 : i32
    %c0_i32_0 = arith.constant 0 : i32
    %c0_i32_1 = arith.constant 0 : i32
    return %c0_i32, %c0_i32_0 : i32, i32
  }
  func.func @transform_3(%arg0: i32) -> (i32, i32) {
    %c0_i32 = arith.constant 0 : i32
    %c0_i32_0 = arith.constant 0 : i32
    %c0_i32_1 = arith.constant 0 : i32
    return %c0_i32, %c0_i32_0 : i32, i32
  }
  func.func @transform_4(%arg0: i32) -> (i32, i32) {
    %c0_i32 = arith.constant 0 : i32
    %c0_i32_0 = arith.constant 0 : i32
    %c0_i32_1 = arith.constant 0 : i32
    return %c0_i32, %c0_i32_0 : i32, i32
  }
  func.func @transform_5(%arg0: i32) -> (i32, i32) {
    %c0_i32 = arith.constant 0 : i32
    %c0_i32_0 = arith.constant 0 : i32
    %c0_i32_1 = arith.constant 0 : i32
    return %c0_i32, %c0_i32_0 : i32, i32
  }
  func.func @transform_6(%arg0: i32) -> (i32, i32) {
    %c0_i32 = arith.constant 0 : i32
    %c0_i32_0 = arith.constant 0 : i32
    %c0_i32_1 = arith.constant 0 : i32
    return %c0_i32, %c0_i32_0 : i32, i32
  }
  func.func @transform_7(%arg0: i32) -> (i32, i32) {
    %c0_i32 = arith.constant 0 : i32
    %c0_i32_0 = arith.constant 0 : i32
    %c0_i32_1 = arith.constant 0 : i32
    return %c0_i32, %c0_i32_0 : i32, i32
  }
  func.func @transform_8(%arg0: i32) -> (i32, i32) {
    %c0_i32 = arith.constant 0 : i32
    %c0_i32_0 = arith.constant 0 : i32
    %c0_i32_1 = arith.constant 0 : i32
    return %c0_i32, %c0_i32_0 : i32, i32
  }
  func.func @transform_9(%arg0: i32) -> (i32, i32) {
    %c0_i32 = arith.constant 0 : i32
    %c0_i32_0 = arith.constant 0 : i32
    %c0_i32_1 = arith.constant 0 : i32
    return %c0_i32, %c0_i32_0 : i32, i32
  }
  func.func @transform_10(%arg0: i32) -> (i32, i32) {
    %c0_i32 = arith.constant 0 : i32
    %c0_i32_0 = arith.constant 0 : i32
    %c0_i32_1 = arith.constant 0 : i32
    return %c0_i32, %c0_i32_0 : i32, i32
  }
  func.func @transform_11(%arg0: i32) -> (i32, i32) {
    %c0_i32 = arith.constant 0 : i32
    %c0_i32_0 = arith.constant 0 : i32
    %c0_i32_1 = arith.constant 0 : i32
    return %c0_i32, %c0_i32_0 : i32, i32
  }
  func.func @transform_12(%arg0: i32) -> (i32, i32) {
    %c0_i32 = arith.constant 0 : i32
    %c0_i32_0 = arith.constant 0 : i32
    %c0_i32_1 = arith.constant 0 : i32
    return %c0_i32, %c0_i32_0 : i32, i32
  }
  func.func @transform_13(%arg0: i32) -> (i32, i32) {
    %c0_i32 = arith.constant 0 : i32
    %c0_i32_0 = arith.constant 0 : i32
    %c0_i32_1 = arith.constant 0 : i32
    return %c0_i32, %c0_i32_0 : i32, i32
  }
  func.func @transform_14(%arg0: i32) -> (i32, i32) {
    %c0_i32 = arith.constant 0 : i32
    %c0_i32_0 = arith.constant 0 : i32
    %c0_i32_1 = arith.constant 0 : i32
    return %c0_i32, %c0_i32_0 : i32, i32
  }
  func.func @transform_15(%arg0: i32) -> (i32, i32) {
    %c0_i32 = arith.constant 0 : i32
    %c0_i32_0 = arith.constant 0 : i32
    %c0_i32_1 = arith.constant 0 : i32
    return %c0_i32, %c0_i32_0 : i32, i32
  }
  func.func @transform_16(%arg0: i32) -> (i32, i32) {
    %c0_i32 = arith.constant 0 : i32
    %c0_i32_0 = arith.constant 0 : i32
    %c0_i32_1 = arith.constant 0 : i32
    return %c0_i32, %c0_i32_0 : i32, i32
  }
  func.func @transform_17(%arg0: i32) -> (i32, i32) {
    %c0_i32 = arith.constant 0 : i32
    %c0_i32_0 = arith.constant 0 : i32
    %c0_i32_1 = arith.constant 0 : i32
    return %c0_i32, %c0_i32_0 : i32, i32
  }
  func.func @transform_18(%arg0: i32) -> (i32, i32) {
    %c0_i32 = arith.constant 0 : i32
    %c0_i32_0 = arith.constant 0 : i32
    %c0_i32_1 = arith.constant 0 : i32
    return %c0_i32, %c0_i32_0 : i32, i32
  }
  func.func @transform_19(%arg0: i32) -> (i32, i32) {
    %c0_i32 = arith.constant 0 : i32
    %c0_i32_0 = arith.constant 0 : i32
    %c0_i32_1 = arith.constant 0 : i32
    return %c0_i32, %c0_i32_0 : i32, i32
  }
  func.func @transform_20(%arg0: i32) -> (i32, i32) {
    %c0_i32 = arith.constant 0 : i32
    %c0_i32_0 = arith.constant 0 : i32
    %c0_i32_1 = arith.constant 0 : i32
    return %c0_i32, %c0_i32_0 : i32, i32
  }
  func.func @transform_21(%arg0: i32) -> (i32, i32) {
    %c0_i32 = arith.constant 0 : i32
    %c0_i32_0 = arith.constant 0 : i32
    return %arg0, %c0_i32 : i32, i32
  }
  func.func @transform_22(%arg0: i32) -> (i32, i32) {
    %c0_i32 = arith.constant 0 : i32
    %c0_i32_0 = arith.constant 0 : i32
    %c0_i32_1 = arith.constant 0 : i32
    return %c0_i32, %c0_i32_0 : i32, i32
  }
}

</mosaic_0001>

<llo_original>
// kernel: resnext_lstm_forward.1
$region0: #{resnext_lstm_forward.1}
  #allocation0 [shape = 'u32[]', space=smem, size = 0x4, offset = 0x4, fixed_abs, tag = 'smem constant byte address 0x4 - core index']
  #allocation1 [shape = 'u32[72,128]{1,0:T(1,128)}', space=vmem, size = 0x9000, scoped, tag = 'internal scratch']
  #allocation2 [shape = 'f32[16,128]{1,0:T(8,128)}', space=vmem, size = 0x2000, scoped, tag = 'scratch operand']
  #allocation3 [shape = 'f32[1,1]{1,0:T(1,128)S(1)}', space=vmem, size = 0x200, scoped, tag = 'scoped memory for resnext_lstm_forward.1']
  %s0 = inlined_call_operand.vmem [shape: bf16[4096,36], index: 0, kind: input, shape index: {}]
  %s1 = inlined_call_operand.vmem [shape: bf16[36,128], index: 1, kind: input, shape index: {}]
  %s2 = inlined_call_operand.vmem [shape: f32[1,128], index: 2, kind: input, shape index: {}]
  %s3 = inlined_call_operand.vmem [shape: bf16[128,128], index: 3, kind: input, shape index: {}]
  %s4 = inlined_call_operand.vmem [shape: f32[32,128], index: 4, kind: input, shape index: {}]
  %s5 = inlined_call_operand.vmem [shape: f32[1,128], index: 5, kind: input, shape index: {}]
  %s6 = inlined_call_operand.vmem [shape: bf16[128,128], index: 6, kind: input, shape index: {}]
  %s7 = inlined_call_operand.vmem [shape: f32[32,128], index: 7, kind: input, shape index: {}]
  %s8 = inlined_call_operand.vmem [shape: f32[1,128], index: 8, kind: input, shape index: {}]
  %s9 = inlined_call_operand.vmem [shape: bf16[64,128], index: 9, kind: input, shape index: {}]
  %s10 = inlined_call_operand.vmem [shape: f32[32,128], index: 10, kind: input, shape index: {}]
  %s11 = inlined_call_operand.vmem [shape: f32[1,128], index: 11, kind: input, shape index: {}]
  %s12 = inlined_call_operand.vmem [shape: bf16[64,128], index: 12, kind: input, shape index: {}]
  %s13 = inlined_call_operand.vmem [shape: f32[32,128], index: 13, kind: input, shape index: {}]
  %s14 = inlined_call_operand.vmem [shape: f32[1,128], index: 14, kind: input, shape index: {}]
  %s15 = inlined_call_operand.vmem [shape: f32[64,128], index: 15, kind: input, shape index: {}]
  %s16 = inlined_call_operand.vmem [shape: f32[1,128], index: 16, kind: input, shape index: {}]
  %s17 = inlined_call_operand.vmem [shape: f32[1,128], index: 17, kind: input, shape index: {}]
  %s18 = inlined_call_operand.<no memory space> [shape: f32[1,1], index: 18, kind: input, shape index: {}]
  %s19 = inlined_call_operand.vmem [shape: f32[64,128], index: 19, kind: input, shape index: {}]
  %s20 = inlined_call_operand.vmem [shape: f32[1,128], index: 20, kind: input, shape index: {}]
  %s21 = inlined_call_operand.hbm [shape: f32[4096,128], index: 21, kind: output, shape index: {0}]
  %s22 = inlined_call_operand.hbm [shape: f32[2,128], index: 22, kind: output, shape index: {1}]
  %23 = xla_tuple %s21, %s22
  %s24 = sld [smem:[#allocation0]]
  $region129: #{resnext_lstm_forward.1} parent=0
    _
  %s26 = ssub.s32 1, %s24
  %s27 = scalar_select 0, %s26, %s24
  %v28 = vstv %s18
  %29 = vst [vmem:[#allocation3] sm:$0x1] %v28
  $region1: #{resnext_lstm_forward.1} parent=0
    #allocation4 [shape = 'u8[2097152]{0}', space=vmem, size = 0x200000, scoped, tag = 'output window, operand 0']
    #allocation5 [shape = 's32[2]{0}', space=sflag, size = 0x8, scoped, tag = 'scoped memory for resnext_lstm_forward.1']
    #allocation6 [shape = 'u8[1024]{0}', space=vmem, size = 0x400, scoped, tag = 'output window, operand 1, single buffered']
    #allocation7 [shape = 's32[1]{0}', space=sflag, size = 0x4, scoped, tag = 'scoped memory for resnext_lstm_forward.1']
    %30 = vsyncpa [#allocation5], 0
    %s31 = scalar_lea.sflag [#allocation5], 1
    %32 = vsyncpa %s31, 0
    %33 = vsyncpa [#allocation7], 0
    loop: start=0, step=1, limit=4
    $region2: #{resnext_lstm_forward.1} parent=1 // loop_pre_header
      _
    $region3: #{resnext_lstm_forward.1} parent=1 // loop_header
      %s35 = sphi 0, %s39
      %p36 = scmp.ge.s32.totalorder %s35, 4
      %s45 = sphi 0, %s47
      %s48 = sphi 0, %s45
      %s49 = sphi 0, %s48
      %s65 = sphi 0, %s49
      %s69 = sphi 0, %s69
      %s71 = sphi 0, %s69
      %s72 = sphi 0, %s71
      %s86 = sphi 0, %s72
      %s90 = sphi 0, %s90
      %s92 = sphi 0, %s90
      %s93 = sphi 0, %s92
      %s107 = sphi 0, %s93
      %s111 = sphi 0, %s111
      %s113 = sphi 0, %s111
      %s114 = sphi 0, %s113
      %s128 = sphi 0, %s114
      %s132 = sphi 0, %s132
      %s134 = sphi 0, %s132
      %s135 = sphi 0, %s134
      %s149 = sphi 0, %s135
      %s153 = sphi 0, %s153
      %s155 = sphi 0, %s153
      %s156 = sphi 0, %s155
      %s170 = sphi 0, %s156
      %s174 = sphi 0, %s174
      %s176 = sphi 0, %s174
      %s177 = sphi 0, %s176
      %s191 = sphi 0, %s177
      %s195 = sphi 0, %s195
      %s197 = sphi 0, %s195
      %s198 = sphi 0, %s197
      %s212 = sphi 0, %s198
      %s216 = sphi 0, %s216
      %s218 = sphi 0, %s216
      %s219 = sphi 0, %s218
      %s233 = sphi 0, %s219
      %s237 = sphi 0, %s237
      %s239 = sphi 0, %s237
      %s240 = sphi 0, %s239
      %s254 = sphi 0, %s240
      %s258 = sphi 0, %s258
      %s260 = sphi 0, %s258
      %s261 = sphi 0, %s260
      %s275 = sphi 0, %s261
      %s279 = sphi 0, %s279
      %s281 = sphi 0, %s279
      %s282 = sphi 0, %s281
      %s296 = sphi 0, %s282
      %s300 = sphi 0, %s300
      %s302 = sphi 0, %s300
      %s303 = sphi 0, %s302
      %s317 = sphi 0, %s303
      %s321 = sphi 0, %s321
      %s323 = sphi 0, %s321
      %s324 = sphi 0, %s323
      %s338 = sphi 0, %s324
      %s342 = sphi 0, %s342
      %s344 = sphi 0, %s342
      %s345 = sphi 0, %s344
      %s359 = sphi 0, %s345
      %s363 = sphi 0, %s363
      %s365 = sphi 0, %s363
      %s366 = sphi 0, %s365
      %s380 = sphi 0, %s366
      %s384 = sphi 0, %s384
      %s386 = sphi 0, %s384
      %s387 = sphi 0, %s386
      %s401 = sphi 0, %s387
      %s405 = sphi 0, %s405
      %s407 = sphi 0, %s405
      %s408 = sphi 0, %s407
      %s422 = sphi 0, %s408
      %s426 = sphi 0, %s426
      %s428 = sphi 0, %s426
      %s429 = sphi 0, %s428
      %s443 = sphi 0, %s429
      %s447 = sphi 0, %s447
      %s449 = sphi 0, %s447
      %s450 = sphi 0, %s449
      %s464 = sphi 0, %s450
      %s468 = sphi 0, %s468
      %s470 = sphi 0, %s468
      %s471 = sphi 0, %s470
      %s485 = sphi 0, %s471
      %s491 = sphi 0, %s493
      %s494 = sphi 0, %s491
      %s495 = sphi 0, %s494
      %s511 = sphi 0, %s495
      %s515 = sphi 0, %s515
      %s517 = sphi 0, %s515
      %s518 = sphi 0, %s517
      %s532 = sphi 0, %s518
    $region4: #{resnext_lstm_forward.1} parent=1 // loop_header_branch
      %38 = sbr.rel (%p36) target = $region8
    $region5: #{resnext_lstm_forward.1} parent=1 // loop_body
      %s40 = ssub.s32 %s35, 1
      %s41 = ssub.s32 %s35, 2
      %s42 = sadd.s32 %s35, 1
      %s43 = ssub.s32 %s35, %s42
      %p44 = scmp.eq.s32.totalorder %s43, 0
      %s46 = sadd.s32 %s45, 1
      %s47 = scalar_select %p44, %s45, %s46
      %p50 = pneg %p44
      %p51 = scmp.eq.s32.totalorder %s35, 1
      %p52 = por %p50, %p51
      %p53 = scmp.ne.s32.totalorder %s45, %s48
      %p54 = scmp.eq.s32.totalorder %s35, 0
      %p55 = por %p53, %p54
      %p56 = scmp.ne.s32.totalorder %s45, %s48
      %p57 = scmp.eq.s32.totalorder %s40, 1
      %p58 = por %p56, %p57
      %p59 = scmp.ne.s32.totalorder %s48, %s49
      %p60 = scmp.eq.s32.totalorder %s40, 0
      %p61 = por %p59, %p60
      %p62 = scmp.ne.s32.totalorder %s48, %s49
      %p63 = scmp.eq.s32.totalorder %s41, 1
      %p64 = por %p62, %p63
      %p66 = scmp.ne.s32.totalorder %s49, %s65
      %p67 = scmp.eq.s32.totalorder %s41, 0
      %p68 = por %p66, %p67
      %s70 = sadd.s32 %s69, 1
      %p73 = scmp.eq.s32.totalorder %s35, 1
      %p74 = scmp.ne.s32.totalorder %s69, %s71
      %p75 = scmp.eq.s32.totalorder %s35, 0
      %p76 = por %p74, %p75
      %p77 = scmp.ne.s32.totalorder %s69, %s71
      %p78 = scmp.eq.s32.totalorder %s40, 1
      %p79 = por %p77, %p78
      %p80 = scmp.ne.s32.totalorder %s71, %s72
      %p81 = scmp.eq.s32.totalorder %s40, 0
      %p82 = por %p80, %p81
      %p83 = scmp.ne.s32.totalorder %s71, %s72
      %p84 = scmp.eq.s32.totalorder %s41, 1
      %p85 = por %p83, %p84
      %p87 = scmp.ne.s32.totalorder %s72, %s86
      %p88 = scmp.eq.s32.totalorder %s41, 0
      %p89 = por %p87, %p88
      %s91 = sadd.s32 %s90, 1
      %p94 = scmp.eq.s32.totalorder %s35, 1
      %p95 = scmp.ne.s32.totalorder %s90, %s92
      %p96 = scmp.eq.s32.totalorder %s35, 0
      %p97 = por %p95, %p96
      %p98 = scmp.ne.s32.totalorder %s90, %s92
      %p99 = scmp.eq.s32.totalorder %s40, 1
      %p100 = por %p98, %p99
      %p101 = scmp.ne.s32.totalorder %s92, %s93
      %p102 = scmp.eq.s32.totalorder %s40, 0
      %p103 = por %p101, %p102
      %p104 = scmp.ne.s32.totalorder %s92, %s93
      %p105 = scmp.eq.s32.totalorder %s41, 1
      %p106 = por %p104, %p105
      %p108 = scmp.ne.s32.totalorder %s93, %s107
      %p109 = scmp.eq.s32.totalorder %s41, 0
      %p110 = por %p108, %p109
      %s112 = sadd.s32 %s111, 1
      %p115 = scmp.eq.s32.totalorder %s35, 1
      %p116 = scmp.ne.s32.totalorder %s111, %s113
      %p117 = scmp.eq.s32.totalorder %s35, 0
      %p118 = por %p116, %p117
      %p119 = scmp.ne.s32.totalorder %s111, %s113
      %p120 = scmp.eq.s32.totalorder %s40, 1
      %p121 = por %p119, %p120
      %p122 = scmp.ne.s32.totalorder %s113, %s114
      %p123 = scmp.eq.s32.totalorder %s40, 0
      %p124 = por %p122, %p123
      %p125 = scmp.ne.s32.totalorder %s113, %s114
      %p126 = scmp.eq.s32.totalorder %s41, 1
      %p127 = por %p125, %p126
      %p129 = scmp.ne.s32.totalorder %s114, %s128
      %p130 = scmp.eq.s32.totalorder %s41, 0
      %p131 = por %p129, %p130
      %s133 = sadd.s32 %s132, 1
      %p136 = scmp.eq.s32.totalorder %s35, 1
      %p137 = scmp.ne.s32.totalorder %s132, %s134
      %p138 = scmp.eq.s32.totalorder %s35, 0
      %p139 = por %p137, %p138
      %p140 = scmp.ne.s32.totalorder %s132, %s134
      %p141 = scmp.eq.s32.totalorder %s40, 1
      %p142 = por %p140, %p141
      %p143 = scmp.ne.s32.totalorder %s134, %s135
      %p144 = scmp.eq.s32.totalorder %s40, 0
      %p145 = por %p143, %p144
      %p146 = scmp.ne.s32.totalorder %s134, %s135
      %p147 = scmp.eq.s32.totalorder %s41, 1
      %p148 = por %p146, %p147
      %p150 = scmp.ne.s32.totalorder %s135, %s149
      %p151 = scmp.eq.s32.totalorder %s41, 0
      %p152 = por %p150, %p151
      %s154 = sadd.s32 %s153, 1
      %p157 = scmp.eq.s32.totalorder %s35, 1
      %p158 = scmp.ne.s32.totalorder %s153, %s155
      %p159 = scmp.eq.s32.totalorder %s35, 0
      %p160 = por %p158, %p159
      %p161 = scmp.ne.s32.totalorder %s153, %s155
      %p162 = scmp.eq.s32.totalorder %s40, 1
      %p163 = por %p161, %p162
      %p164 = scmp.ne.s32.totalorder %s155, %s156
      %p165 = scmp.eq.s32.totalorder %s40, 0
      %p166 = por %p164, %p165
      %p167 = scmp.ne.s32.totalorder %s155, %s156
      %p168 = scmp.eq.s32.totalorder %s41, 1
      %p169 = por %p167, %p168
      %p171 = scmp.ne.s32.totalorder %s156, %s170
      %p172 = scmp.eq.s32.totalorder %s41, 0
      %p173 = por %p171, %p172
      %s175 = sadd.s32 %s174, 1
      %p178 = scmp.eq.s32.totalorder %s35, 1
      %p179 = scmp.ne.s32.totalorder %s174, %s176
      %p180 = scmp.eq.s32.totalorder %s35, 0
      %p181 = por %p179, %p180
      %p182 = scmp.ne.s32.totalorder %s174, %s176
      %p183 = scmp.eq.s32.totalorder %s40, 1
      %p184 = por %p182, %p183
      %p185 = scmp.ne.s32.totalorder %s176, %s177
      %p186 = scmp.eq.s32.totalorder %s40, 0
      %p187 = por %p185, %p186
      %p188 = scmp.ne.s32.totalorder %s176, %s177
      %p189 = scmp.eq.s32.totalorder %s41, 1
      %p190 = por %p188, %p189
      %p192 = scmp.ne.s32.totalorder %s177, %s191
      %p193 = scmp.eq.s32.totalorder %s41, 0
      %p194 = por %p192, %p193
      %s196 = sadd.s32 %s195, 1
      %p199 = scmp.eq.s32.totalorder %s35, 1
      %p200 = scmp.ne.s32.totalorder %s195, %s197
      %p201 = scmp.eq.s32.totalorder %s35, 0
      %p202 = por %p200, %p201
      %p203 = scmp.ne.s32.totalorder %s195, %s197
      %p204 = scmp.eq.s32.totalorder %s40, 1
      %p205 = por %p203, %p204
      %p206 = scmp.ne.s32.totalorder %s197, %s198
      %p207 = scmp.eq.s32.totalorder %s40, 0
      %p208 = por %p206, %p207
      %p209 = scmp.ne.s32.totalorder %s197, %s198
      %p210 = scmp.eq.s32.totalorder %s41, 1
      %p211 = por %p209, %p210
      %p213 = scmp.ne.s32.totalorder %s198, %s212
      %p214 = scmp.eq.s32.totalorder %s41, 0
      %p215 = por %p213, %p214
      %s217 = sadd.s32 %s216, 1
      %p220 = scmp.eq.s32.totalorder %s35, 1
      %p221 = scmp.ne.s32.totalorder %s216, %s218
      %p222 = scmp.eq.s32.totalorder %s35, 0
      %p223 = por %p221, %p222
      %p224 = scmp.ne.s32.totalorder %s216, %s218
      %p225 = scmp.eq.s32.totalorder %s40, 1
      %p226 = por %p224, %p225
      %p227 = scmp.ne.s32.totalorder %s218, %s219
      %p228 = scmp.eq.s32.totalorder %s40, 0
      %p229 = por %p227, %p228
      %p230 = scmp.ne.s32.totalorder %s218, %s219
      %p231 = scmp.eq.s32.totalorder %s41, 1
      %p232 = por %p230, %p231
      %p234 = scmp.ne.s32.totalorder %s219, %s233
      %p235 = scmp.eq.s32.totalorder %s41, 0
      %p236 = por %p234, %p235
      %s238 = sadd.s32 %s237, 1
      %p241 = scmp.eq.s32.totalorder %s35, 1
      %p242 = scmp.ne.s32.totalorder %s237, %s239
      %p243 = scmp.eq.s32.totalorder %s35, 0
      %p244 = por %p242, %p243
      %p245 = scmp.ne.s32.totalorder %s237, %s239
      %p246 = scmp.eq.s32.totalorder %s40, 1
      %p247 = por %p245, %p246
      %p248 = scmp.ne.s32.totalorder %s239, %s240
      %p249 = scmp.eq.s32.totalorder %s40, 0
      %p250 = por %p248, %p249
      %p251 = scmp.ne.s32.totalorder %s239, %s240
      %p252 = scmp.eq.s32.totalorder %s41, 1
      %p253 = por %p251, %p252
      %p255 = scmp.ne.s32.totalorder %s240, %s254
      %p256 = scmp.eq.s32.totalorder %s41, 0
      %p257 = por %p255, %p256
      %s259 = sadd.s32 %s258, 1
      %p262 = scmp.eq.s32.totalorder %s35, 1
      %p263 = scmp.ne.s32.totalorder %s258, %s260
      %p264 = scmp.eq.s32.totalorder %s35, 0
      %p265 = por %p263, %p264
      %p266 = scmp.ne.s32.totalorder %s258, %s260
      %p267 = scmp.eq.s32.totalorder %s40, 1
      %p268 = por %p266, %p267
      %p269 = scmp.ne.s32.totalorder %s260, %s261
      %p270 = scmp.eq.s32.totalorder %s40, 0
      %p271 = por %p269, %p270
      %p272 = scmp.ne.s32.totalorder %s260, %s261
      %p273 = scmp.eq.s32.totalorder %s41, 1
      %p274 = por %p272, %p273
      %p276 = scmp.ne.s32.totalorder %s261, %s275
      %p277 = scmp.eq.s32.totalorder %s41, 0
      %p278 = por %p276, %p277
      %s280 = sadd.s32 %s279, 1
      %p283 = scmp.eq.s32.totalorder %s35, 1
      %p284 = scmp.ne.s32.totalorder %s279, %s281
      %p285 = scmp.eq.s32.totalorder %s35, 0
      %p286 = por %p284, %p285
      %p287 = scmp.ne.s32.totalorder %s279, %s281
      %p288 = scmp.eq.s32.totalorder %s40, 1
      %p289 = por %p287, %p288
      %p290 = scmp.ne.s32.totalorder %s281, %s282
      %p291 = scmp.eq.s32.totalorder %s40, 0
      %p292 = por %p290, %p291
      %p293 = scmp.ne.s32.totalorder %s281, %s282
      %p294 = scmp.eq.s32.totalorder %s41, 1
      %p295 = por %p293, %p294
      %p297 = scmp.ne.s32.totalorder %s282, %s296
      %p298 = scmp.eq.s32.totalorder %s41, 0
      %p299 = por %p297, %p298
      %s301 = sadd.s32 %s300, 1
      %p304 = scmp.eq.s32.totalorder %s35, 1
      %p305 = scmp.ne.s32.totalorder %s300, %s302
      %p306 = scmp.eq.s32.totalorder %s35, 0
      %p307 = por %p305, %p306
      %p308 = scmp.ne.s32.totalorder %s300, %s302
      %p309 = scmp.eq.s32.totalorder %s40, 1
      %p310 = por %p308, %p309
      %p311 = scmp.ne.s32.totalorder %s302, %s303
      %p312 = scmp.eq.s32.totalorder %s40, 0
      %p313 = por %p311, %p312
      %p314 = scmp.ne.s32.totalorder %s302, %s303
      %p315 = scmp.eq.s32.totalorder %s41, 1
      %p316 = por %p314, %p315
      %p318 = scmp.ne.s32.totalorder %s303, %s317
      %p319 = scmp.eq.s32.totalorder %s41, 0
      %p320 = por %p318, %p319
      %s322 = sadd.s32 %s321, 1
      %p325 = scmp.eq.s32.totalorder %s35, 1
      %p326 = scmp.ne.s32.totalorder %s321, %s323
      %p327 = scmp.eq.s32.totalorder %s35, 0
      %p328 = por %p326, %p327
      %p329 = scmp.ne.s32.totalorder %s321, %s323
      %p330 = scmp.eq.s32.totalorder %s40, 1
      %p331 = por %p329, %p330
      %p332 = scmp.ne.s32.totalorder %s323, %s324
      %p333 = scmp.eq.s32.totalorder %s40, 0
      %p334 = por %p332, %p333
      %p335 = scmp.ne.s32.totalorder %s323, %s324
      %p336 = scmp.eq.s32.totalorder %s41, 1
      %p337 = por %p335, %p336
      %p339 = scmp.ne.s32.totalorder %s324, %s338
      %p340 = scmp.eq.s32.totalorder %s41, 0
      %p341 = por %p339, %p340
      %s343 = sadd.s32 %s342, 1
      %p346 = scmp.eq.s32.totalorder %s35, 1
      %p347 = scmp.ne.s32.totalorder %s342, %s344
      %p348 = scmp.eq.s32.totalorder %s35, 0
      %p349 = por %p347, %p348
      %p350 = scmp.ne.s32.totalorder %s342, %s344
      %p351 = scmp.eq.s32.totalorder %s40, 1
      %p352 = por %p350, %p351
      %p353 = scmp.ne.s32.totalorder %s344, %s345
      %p354 = scmp.eq.s32.totalorder %s40, 0
      %p355 = por %p353, %p354
      %p356 = scmp.ne.s32.totalorder %s344, %s345
      %p357 = scmp.eq.s32.totalorder %s41, 1
      %p358 = por %p356, %p357
      %p360 = scmp.ne.s32.totalorder %s345, %s359
      %p361 = scmp.eq.s32.totalorder %s41, 0
      %p362 = por %p360, %p361
      %s364 = sadd.s32 %s363, 1
      %p367 = scmp.eq.s32.totalorder %s35, 1
      %p368 = scmp.ne.s32.totalorder %s363, %s365
      %p369 = scmp.eq.s32.totalorder %s35, 0
      %p370 = por %p368, %p369
      %p371 = scmp.ne.s32.totalorder %s363, %s365
      %p372 = scmp.eq.s32.totalorder %s40, 1
      %p373 = por %p371, %p372
      %p374 = scmp.ne.s32.totalorder %s365, %s366
      %p375 = scmp.eq.s32.totalorder %s40, 0
      %p376 = por %p374, %p375
      %p377 = scmp.ne.s32.totalorder %s365, %s366
      %p378 = scmp.eq.s32.totalorder %s41, 1
      %p379 = por %p377, %p378
      %p381 = scmp.ne.s32.totalorder %s366, %s380
      %p382 = scmp.eq.s32.totalorder %s41, 0
      %p383 = por %p381, %p382
      %s385 = sadd.s32 %s384, 1
      %p388 = scmp.eq.s32.totalorder %s35, 1
      %p389 = scmp.ne.s32.totalorder %s384, %s386
      %p390 = scmp.eq.s32.totalorder %s35, 0
      %p391 = por %p389, %p390
      %p392 = scmp.ne.s32.totalorder %s384, %s386
      %p393 = scmp.eq.s32.totalorder %s40, 1
      %p394 = por %p392, %p393
      %p395 = scmp.ne.s32.totalorder %s386, %s387
      %p396 = scmp.eq.s32.totalorder %s40, 0
      %p397 = por %p395, %p396
      %p398 = scmp.ne.s32.totalorder %s386, %s387
      %p399 = scmp.eq.s32.totalorder %s41, 1
      %p400 = por %p398, %p399
      %p402 = scmp.ne.s32.totalorder %s387, %s401
      %p403 = scmp.eq.s32.totalorder %s41, 0
      %p404 = por %p402, %p403
      %s406 = sadd.s32 %s405, 1
      %p409 = scmp.eq.s32.totalorder %s35, 1
      %p410 = scmp.ne.s32.totalorder %s405, %s407
      %p411 = scmp.eq.s32.totalorder %s35, 0
      %p412 = por %p410, %p411
      %p413 = scmp.ne.s32.totalorder %s405, %s407
      %p414 = scmp.eq.s32.totalorder %s40, 1
      %p415 = por %p413, %p414
      %p416 = scmp.ne.s32.totalorder %s407, %s408
      %p417 = scmp.eq.s32.totalorder %s40, 0
      %p418 = por %p416, %p417
      %p419 = scmp.ne.s32.totalorder %s407, %s408
      %p420 = scmp.eq.s32.totalorder %s41, 1
      %p421 = por %p419, %p420
      %p423 = scmp.ne.s32.totalorder %s408, %s422
      %p424 = scmp.eq.s32.totalorder %s41, 0
      %p425 = por %p423, %p424
      %s427 = sadd.s32 %s426, 1
      %p430 = scmp.eq.s32.totalorder %s35, 1
      %p431 = scmp.ne.s32.totalorder %s426, %s428
      %p432 = scmp.eq.s32.totalorder %s35, 0
      %p433 = por %p431, %p432
      %p434 = scmp.ne.s32.totalorder %s426, %s428
      %p435 = scmp.eq.s32.totalorder %s40, 1
      %p436 = por %p434, %p435
      %p437 = scmp.ne.s32.totalorder %s428, %s429
      %p438 = scmp.eq.s32.totalorder %s40, 0
      %p439 = por %p437, %p438
      %p440 = scmp.ne.s32.totalorder %s428, %s429
      %p441 = scmp.eq.s32.totalorder %s41, 1
      %p442 = por %p440, %p441
      %p444 = scmp.ne.s32.totalorder %s429, %s443
      %p445 = scmp.eq.s32.totalorder %s41, 0
      %p446 = por %p444, %p445
      %s448 = sadd.s32 %s447, 1
      %p451 = scmp.eq.s32.totalorder %s35, 1
      %p452 = scmp.ne.s32.totalorder %s447, %s449
      %p453 = scmp.eq.s32.totalorder %s35, 0
      %p454 = por %p452, %p453
      %p455 = scmp.ne.s32.totalorder %s447, %s449
      %p456 = scmp.eq.s32.totalorder %s40, 1
      %p457 = por %p455, %p456
      %p458 = scmp.ne.s32.totalorder %s449, %s450
      %p459 = scmp.eq.s32.totalorder %s40, 0
      %p460 = por %p458, %p459
      %p461 = scmp.ne.s32.totalorder %s449, %s450
      %p462 = scmp.eq.s32.totalorder %s41, 1
      %p463 = por %p461, %p462
      %p465 = scmp.ne.s32.totalorder %s450, %s464
      %p466 = scmp.eq.s32.totalorder %s41, 0
      %p467 = por %p465, %p466
      %s469 = sadd.s32 %s468, 1
      %p472 = scmp.eq.s32.totalorder %s35, 1
      %p473 = scmp.ne.s32.totalorder %s468, %s470
      %p474 = scmp.eq.s32.totalorder %s35, 0
      %p475 = por %p473, %p474
      %p476 = scmp.ne.s32.totalorder %s468, %s470
      %p477 = scmp.eq.s32.totalorder %s40, 1
      %p478 = por %p476, %p477
      %p479 = scmp.ne.s32.totalorder %s470, %s471
      %p480 = scmp.eq.s32.totalorder %s40, 0
      %p481 = por %p479, %p480
      %p482 = scmp.ne.s32.totalorder %s470, %s471
      %p483 = scmp.eq.s32.totalorder %s41, 1
      %p484 = por %p482, %p483
      %p486 = scmp.ne.s32.totalorder %s471, %s485
      %p487 = scmp.eq.s32.totalorder %s41, 0
      %p488 = por %p486, %p487
      %s489 = ssub.s32 %s35, %s42
      %p490 = scmp.eq.s32.totalorder %s489, 0
      %s492 = sadd.s32 %s491, 1
      %s493 = scalar_select %p490, %s491, %s492
      %p496 = pneg %p490
      %p497 = scmp.eq.s32.totalorder %s35, 1
      %p498 = por %p496, %p497
      %p499 = scmp.ne.s32.totalorder %s491, %s494
      %p500 = scmp.eq.s32.totalorder %s35, 0
      %p501 = por %p499, %p500
      %p502 = scmp.ne.s32.totalorder %s491, %s494
      %p503 = scmp.eq.s32.totalorder %s40, 1
      %p504 = por %p502, %p503
      %p505 = scmp.ne.s32.totalorder %s494, %s495
      %p506 = scmp.eq.s32.totalorder %s40, 0
      %p507 = por %p505, %p506
      %p508 = scmp.ne.s32.totalorder %s494, %s495
      %p509 = scmp.eq.s32.totalorder %s41, 1
      %p510 = por %p508, %p509
      %p512 = scmp.ne.s32.totalorder %s495, %s511
      %p513 = scmp.eq.s32.totalorder %s41, 0
      %p514 = por %p512, %p513
      %s516 = sadd.s32 %s515, 1
      %p519 = scmp.eq.s32.totalorder %s35, 1
      %p520 = scmp.ne.s32.totalorder %s515, %s517
      %p521 = scmp.eq.s32.totalorder %s35, 0
      %p522 = por %p520, %p521
      %p523 = scmp.ne.s32.totalorder %s515, %s517
      %p524 = scmp.eq.s32.totalorder %s40, 1
      %p525 = por %p523, %p524
      %p526 = scmp.ne.s32.totalorder %s517, %s518
      %p527 = scmp.eq.s32.totalorder %s40, 0
      %p528 = por %p526, %p527
      %p529 = scmp.ne.s32.totalorder %s517, %s518
      %p530 = scmp.eq.s32.totalorder %s41, 1
      %p531 = por %p529, %p530
      %p533 = scmp.ne.s32.totalorder %s518, %s532
      %p534 = scmp.eq.s32.totalorder %s41, 0
      %p535 = por %p533, %p534
      %p536 = scmp.le.s32.totalorder 1, %s35
      %p537 = scmp.lt.s32.totalorder %s35, 3
      %p538 = pnand %p536, %p537
      %p539 = pneg %p538
      // Predicated region
      $region9: #{resnext_lstm_forward.1} parent=5 // pred_check
        _
      $region10: #{resnext_lstm_forward.1} parent=5 // pred_check_branch
        %541 = sbr.rel (%p538) target = $region12
      $region11: #{resnext_lstm_forward.1} parent=5 // pred_region
        %s542 = ssub.s32 %s35, 1
        // Predicated region
        $region13: #{resnext_lstm_forward.1} parent=11 // pred_check
          %p543 = pneg %p82
        $region14: #{resnext_lstm_forward.1} parent=11 // pred_check_branch
          %545 = sbr.rel (%p543) target = $region16
        $region15: #{resnext_lstm_forward.1} parent=11 // pred_region
          _
        $region16: #{resnext_lstm_forward.1} parent=11 // pred_fallthru
          _
        // Predicated region
        $region17: #{resnext_lstm_forward.1} parent=11 // pred_check
          %p546 = pneg %p103
        $region18: #{resnext_lstm_forward.1} parent=11 // pred_check_branch
          %548 = sbr.rel (%p546) target = $region20
        $region19: #{resnext_lstm_forward.1} parent=11 // pred_region
          _
        $region20: #{resnext_lstm_forward.1} parent=11 // pred_fallthru
          _
        // Predicated region
        $region21: #{resnext_lstm_forward.1} parent=11 // pred_check
          %p549 = pneg %p124
        $region22: #{resnext_lstm_forward.1} parent=11 // pred_check_branch
          %551 = sbr.rel (%p549) target = $region24
        $region23: #{resnext_lstm_forward.1} parent=11 // pred_region
          _
        $region24: #{resnext_lstm_forward.1} parent=11 // pred_fallthru
          _
        // Predicated region
        $region25: #{resnext_lstm_forward.1} parent=11 // pred_check
          %p552 = pneg %p145
        $region26: #{resnext_lstm_forward.1} parent=11 // pred_check_branch
          %554 = sbr.rel (%p552) target = $region28
        $region27: #{resnext_lstm_forward.1} parent=11 // pred_region
          _
        $region28: #{resnext_lstm_forward.1} parent=11 // pred_fallthru
          _
        // Predicated region
        $region29: #{resnext_lstm_forward.1} parent=11 // pred_check
          %p555 = pneg %p166
        $region30: #{resnext_lstm_forward.1} parent=11 // pred_check_branch
          %557 = sbr.rel (%p555) target = $region32
        $region31: #{resnext_lstm_forward.1} parent=11 // pred_region
          _
        $region32: #{resnext_lstm_forward.1} parent=11 // pred_fallthru
          _
        // Predicated region
        $region33: #{resnext_lstm_forward.1} parent=11 // pred_check
          %p558 = pneg %p187
        $region34: #{resnext_lstm_forward.1} parent=11 // pred_check_branch
          %560 = sbr.rel (%p558) target = $region36
        $region35: #{resnext_lstm_forward.1} parent=11 // pred_region
          _
        $region36: #{resnext_lstm_forward.1} parent=11 // pred_fallthru
          _
        // Predicated region
        $region37: #{resnext_lstm_forward.1} parent=11 // pred_check
          %p561 = pneg %p208
        $region38: #{resnext_lstm_forward.1} parent=11 // pred_check_branch
          %563 = sbr.rel (%p561) target = $region40
        $region39: #{resnext_lstm_forward.1} parent=11 // pred_region
          _
        $region40: #{resnext_lstm_forward.1} parent=11 // pred_fallthru
          _
        // Predicated region
        $region41: #{resnext_lstm_forward.1} parent=11 // pred_check
          %p564 = pneg %p229
        $region42: #{resnext_lstm_forward.1} parent=11 // pred_check_branch
          %566 = sbr.rel (%p564) target = $region44
        $region43: #{resnext_lstm_forward.1} parent=11 // pred_region
          _
        $region44: #{resnext_lstm_forward.1} parent=11 // pred_fallthru
          _
        // Predicated region
        $region45: #{resnext_lstm_forward.1} parent=11 // pred_check
          %p567 = pneg %p250
        $region46: #{resnext_lstm_forward.1} parent=11 // pred_check_branch
          %569 = sbr.rel (%p567) target = $region48
        $region47: #{resnext_lstm_forward.1} parent=11 // pred_region
          _
        $region48: #{resnext_lstm_forward.1} parent=11 // pred_fallthru
          _
        // Predicated region
        $region49: #{resnext_lstm_forward.1} parent=11 // pred_check
          %p570 = pneg %p271
        $region50: #{resnext_lstm_forward.1} parent=11 // pred_check_branch
          %572 = sbr.rel (%p570) target = $region52
        $region51: #{resnext_lstm_forward.1} parent=11 // pred_region
          _
        $region52: #{resnext_lstm_forward.1} parent=11 // pred_fallthru
          _
        // Predicated region
        $region53: #{resnext_lstm_forward.1} parent=11 // pred_check
          %p573 = pneg %p292
        $region54: #{resnext_lstm_forward.1} parent=11 // pred_check_branch
          %575 = sbr.rel (%p573) target = $region56
        $region55: #{resnext_lstm_forward.1} parent=11 // pred_region
          _
        $region56: #{resnext_lstm_forward.1} parent=11 // pred_fallthru
          _
        // Predicated region
        $region57: #{resnext_lstm_forward.1} parent=11 // pred_check
          %p576 = pneg %p313
        $region58: #{resnext_lstm_forward.1} parent=11 // pred_check_branch
          %578 = sbr.rel (%p576) target = $region60
        $region59: #{resnext_lstm_forward.1} parent=11 // pred_region
          _
        $region60: #{resnext_lstm_forward.1} parent=11 // pred_fallthru
          _
        // Predicated region
        $region61: #{resnext_lstm_forward.1} parent=11 // pred_check
          %p579 = pneg %p334
        $region62: #{resnext_lstm_forward.1} parent=11 // pred_check_branch
          %581 = sbr.rel (%p579) target = $region64
        $region63: #{resnext_lstm_forward.1} parent=11 // pred_region
          _
        $region64: #{resnext_lstm_forward.1} parent=11 // pred_fallthru
          _
        // Predicated region
        $region65: #{resnext_lstm_forward.1} parent=11 // pred_check
          %p582 = pneg %p355
        $region66: #{resnext_lstm_forward.1} parent=11 // pred_check_branch
          %584 = sbr.rel (%p582) target = $region68
        $region67: #{resnext_lstm_forward.1} parent=11 // pred_region
          _
        $region68: #{resnext_lstm_forward.1} parent=11 // pred_fallthru
          _
        // Predicated region
        $region69: #{resnext_lstm_forward.1} parent=11 // pred_check
          %p585 = pneg %p376
        $region70: #{resnext_lstm_forward.1} parent=11 // pred_check_branch
          %587 = sbr.rel (%p585) target = $region72
        $region71: #{resnext_lstm_forward.1} parent=11 // pred_region
          _
        $region72: #{resnext_lstm_forward.1} parent=11 // pred_fallthru
          _
        // Predicated region
        $region73: #{resnext_lstm_forward.1} parent=11 // pred_check
          %p588 = pneg %p397
        $region74: #{resnext_lstm_forward.1} parent=11 // pred_check_branch
          %590 = sbr.rel (%p588) target = $region76
        $region75: #{resnext_lstm_forward.1} parent=11 // pred_region
          _
        $region76: #{resnext_lstm_forward.1} parent=11 // pred_fallthru
          _
        // Predicated region
        $region77: #{resnext_lstm_forward.1} parent=11 // pred_check
          %p591 = pneg %p418
        $region78: #{resnext_lstm_forward.1} parent=11 // pred_check_branch
          %593 = sbr.rel (%p591) target = $region80
        $region79: #{resnext_lstm_forward.1} parent=11 // pred_region
          _
        $region80: #{resnext_lstm_forward.1} parent=11 // pred_fallthru
          _
        // Predicated region
        $region81: #{resnext_lstm_forward.1} parent=11 // pred_check
          %p594 = pneg %p439
        $region82: #{resnext_lstm_forward.1} parent=11 // pred_check_branch
          %596 = sbr.rel (%p594) target = $region84
        $region83: #{resnext_lstm_forward.1} parent=11 // pred_region
          _
        $region84: #{resnext_lstm_forward.1} parent=11 // pred_fallthru
          _
        // Predicated region
        $region85: #{resnext_lstm_forward.1} parent=11 // pred_check
          %p597 = pneg %p460
        $region86: #{resnext_lstm_forward.1} parent=11 // pred_check_branch
          %599 = sbr.rel (%p597) target = $region88
        $region87: #{resnext_lstm_forward.1} parent=11 // pred_region
          _
        $region88: #{resnext_lstm_forward.1} parent=11 // pred_fallthru
          _
        // Predicated region
        $region89: #{resnext_lstm_forward.1} parent=11 // pred_check
          %p600 = pneg %p481
        $region90: #{resnext_lstm_forward.1} parent=11 // pred_check_branch
          %602 = sbr.rel (%p600) target = $region92
        $region91: #{resnext_lstm_forward.1} parent=11 // pred_region
          _
        $region92: #{resnext_lstm_forward.1} parent=11 // pred_fallthru
          _
      $region12: #{resnext_lstm_forward.1} parent=5 // pred_fallthru
        _
      %p603 = scmp.lt.s32.totalorder %s35, 2
      // Predicated region
      $region93: #{resnext_lstm_forward.1} parent=5 // pred_check
        %p604 = pneg %p603
      $region94: #{resnext_lstm_forward.1} parent=5 // pred_check_branch
        %606 = sbr.rel (%p604) target = $region96
      $region95: #{resnext_lstm_forward.1} parent=5 // pred_region
        // Predicated region
        $region97: #{resnext_lstm_forward.1} parent=95 // pred_check
          %p607 = pneg %p55
        $region98: #{resnext_lstm_forward.1} parent=95 // pred_check_branch
          %609 = sbr.rel (%p607) target = $region100
        $region99: #{resnext_lstm_forward.1} parent=95 // pred_region
          %s610 = smul.u32 256, %s35
          %p611 = scmp.lt.s32.totalorder %s610, 511
          %s612 = scalar_select %p611, %s610, 511
          %s613 = smul.addr %s612, 4
          %s614 = scalar_lea.vmem %s0, %s613
          %s615 = smul.u32 256, %s35
        $region100: #{resnext_lstm_forward.1} parent=95 // pred_fallthru
          _
      $region96: #{resnext_lstm_forward.1} parent=5 // pred_fallthru
        _
      %p616 = scmp.le.s32.totalorder 1, %s35
      %p617 = scmp.lt.s32.totalorder %s35, 3
      %p618 = pnand %p616, %p617
      %p619 = pneg %p618
      // Predicated region
      $region101: #{resnext_lstm_forward.1} parent=5 // pred_check
        _
      $region102: #{resnext_lstm_forward.1} parent=5 // pred_check_branch
        %621 = sbr.rel (%p618) target = $region104
      $region103: #{resnext_lstm_forward.1} parent=5 // pred_region
        %s622 = ssub.s32 %s35, 1
        %s623 = smul.u32 256, %s40
        %p624 = scmp.lt.s32.totalorder %s623, 511
        %s625 = scalar_select %p624, %s623, 511
        %s626 = smul.addr %s625, 4
        %s627 = scalar_lea.vmem %s0, %s626
        %p628 = pneg %p61
        %p629 = pneg %p58
        %p630 = pneg %p82
        %p631 = pneg %p79
        %p632 = pneg %p103
        %p633 = pneg %p100
        %p634 = pneg %p124
        %p635 = pneg %p121
        %p636 = pneg %p145
        %p637 = pneg %p142
        %p638 = pneg %p166
        %p639 = pneg %p163
        %p640 = pneg %p187
        %p641 = pneg %p184
        %p642 = pneg %p208
        %p643 = pneg %p205
        %p644 = pneg %p229
        %p645 = pneg %p226
        %p646 = pneg %p250
        %p647 = pneg %p247
        %p648 = pneg %p271
        %p649 = pneg %p268
        %p650 = pneg %p292
        %p651 = pneg %p289
        %p652 = pneg %p313
        %p653 = pneg %p310
        %p654 = pneg %p334
        %p655 = pneg %p331
        %p656 = pneg %p355
        %p657 = pneg %p352
        %p658 = pneg %p376
        %p659 = pneg %p373
        %p660 = pneg %p397
        %p661 = pneg %p394
        %p662 = pneg %p418
        %p663 = pneg %p415
        %p664 = pneg %p439
        %p665 = pneg %p436
        %p666 = pneg %p460
        %p667 = pneg %p457
        %p668 = pneg %p481
        %p669 = pneg %p478
        %p670 = pneg %p507
        %p671 = pneg %p504
        %s672 = sand.u32 %s494, 1
        %s673 = scalar_lea.sflag [#allocation5], %s672
        %s674 = sand.u32 %s494, 1
        %s675 = smul.addr %s674, 2048
        %s676 = scalar_lea.vmem [#allocation4], %s675
        %p677 = pneg %p528
        %p678 = pneg %p525
        %s679 = smul.u32 256, %s40
        %p680 = scmp.lt.s32.totalorder %s679, 511
        %s681 = scalar_select %p680, %s679, 511
        %s682 = smul.addr %s681, 4
        %s683 = scalar_lea.vmem %s0, %s682
        %s684 = smul.u32 256, %s40
        %s685 = smul.u32 256, %s40
        %v687 = vld [vmem:[%s683] sm:$0xf]
        %v688 = vld [vmem:[%s683 + $0x4] sm:$0xf]
        %v689 = vld [vmem:[%s683 + $0x8] sm:$0xf]
        %v690 = vld [vmem:[%s683 + $0xc] sm:$0xf]
        %v691 = vld [vmem:[%s683 + $0x10] sm:$0xf]
        %v692 = vld [vmem:[%s683 + $0x14] sm:$0xf]
        %v693 = vld [vmem:[%s683 + $0x18] sm:$0xf]
        %v694 = vld [vmem:[%s683 + $0x1c] sm:$0xf]
        %v695 = vld [vmem:[%s683 + $0x20] sm:$0xf]
        %v696 = vld [vmem:[%s683 + $0x24] sm:$0xf]
        %v697 = vld [vmem:[%s683 + $0x28] sm:$0xf]
        %v698 = vld [vmem:[%s683 + $0x2c] sm:$0xf]
        %v699 = vld [vmem:[%s683 + $0x30] sm:$0xf]
        %v700 = vld [vmem:[%s683 + $0x34] sm:$0xf]
        %v701 = vld [vmem:[%s683 + $0x38] sm:$0xf]
        %v702 = vld [vmem:[%s683 + $0x3c] sm:$0xf]
        %v703 = vld [vmem:[%s683 + $0x40] sm:$0xf]
        %v704 = vld [vmem:[%s683 + $0x44] sm:$0xf]
        %v705 = vld [vmem:[%s683 + $0x48] sm:$0xf]
        %v706 = vld [vmem:[%s683 + $0x4c] sm:$0xf]
        %v707 = vld [vmem:[%s683 + $0x50] sm:$0xf]
        %v708 = vld [vmem:[%s683 + $0x54] sm:$0xf]
        %v709 = vld [vmem:[%s683 + $0x58] sm:$0xf]
        %v710 = vld [vmem:[%s683 + $0x5c] sm:$0xf]
        %v711 = vld [vmem:[%s683 + $0x60] sm:$0xf]
        %v712 = vld [vmem:[%s683 + $0x64] sm:$0xf]
        %v713 = vld [vmem:[%s683 + $0x68] sm:$0xf]
        %v714 = vld [vmem:[%s683 + $0x6c] sm:$0xf]
        %v715 = vld [vmem:[%s683 + $0x70] sm:$0xf]
        %v716 = vld [vmem:[%s683 + $0x74] sm:$0xf]
        %v717 = vld [vmem:[%s683 + $0x78] sm:$0xf]
        %v718 = vld [vmem:[%s683 + $0x7c] sm:$0xf]
        %v719 = vld [vmem:[%s683 + $0x80] sm:$0xf]
        %v720 = vld [vmem:[%s683 + $0x84] sm:$0xf]
        %v721 = vld [vmem:[%s683 + $0x88] sm:$0xf]
        %v722 = vld [vmem:[%s683 + $0x8c] sm:$0xf]
        %v723 = vld [vmem:[%s683 + $0x90] sm:$0xf]
        %v724 = vld [vmem:[%s683 + $0x94] sm:$0xf]
        %v725 = vld [vmem:[%s683 + $0x98] sm:$0xf]
        %v726 = vld [vmem:[%s683 + $0x9c] sm:$0xf]
        %v727 = vld [vmem:[%s683 + $0xa0] sm:$0xf]
        %v728 = vld [vmem:[%s683 + $0xa4] sm:$0xf]
        %v729 = vld [vmem:[%s683 + $0xa8] sm:$0xf]
        %v730 = vld [vmem:[%s683 + $0xac] sm:$0xf]
        %v731 = vld [vmem:[%s683 + $0xb0] sm:$0xf]
        %v732 = vld [vmem:[%s683 + $0xb4] sm:$0xf]
        %v733 = vld [vmem:[%s683 + $0xb8] sm:$0xf]
        %v734 = vld [vmem:[%s683 + $0xbc] sm:$0xf]
        %v735 = vld [vmem:[%s683 + $0xc0] sm:$0xf]
        %v736 = vld [vmem:[%s683 + $0xc4] sm:$0xf]
        %v737 = vld [vmem:[%s683 + $0xc8] sm:$0xf]
        %v738 = vld [vmem:[%s683 + $0xcc] sm:$0xf]
        %v739 = vld [vmem:[%s683 + $0xd0] sm:$0xf]
        %v740 = vld [vmem:[%s683 + $0xd4] sm:$0xf]
        %v741 = vld [vmem:[%s683 + $0xd8] sm:$0xf]
        %v742 = vld [vmem:[%s683 + $0xdc] sm:$0xf]
        %v743 = vld [vmem:[%s683 + $0xe0] sm:$0xf]
        %v744 = vld [vmem:[%s683 + $0xe4] sm:$0xf]
        %v745 = vld [vmem:[%s683 + $0xe8] sm:$0xf]
        %v746 = vld [vmem:[%s683 + $0xec] sm:$0xf]
        %v747 = vld [vmem:[%s683 + $0xf0] sm:$0xf]
        %v748 = vld [vmem:[%s683 + $0xf4] sm:$0xf]
        %v749 = vld [vmem:[%s683 + $0xf8] sm:$0xf]
        %v750 = vld [vmem:[%s683 + $0xfc] sm:$0xf]
        %v751 = vld [vmem:[%s683 + $0x100] sm:$0xf]
        %v752 = vld [vmem:[%s683 + $0x104] sm:$0xf]
        %v753 = vld [vmem:[%s683 + $0x108] sm:$0xf]
        %v754 = vld [vmem:[%s683 + $0x10c] sm:$0xf]
        %v755 = vld [vmem:[%s683 + $0x110] sm:$0xf]
        %v756 = vld [vmem:[%s683 + $0x114] sm:$0xf]
        %v757 = vld [vmem:[%s683 + $0x118] sm:$0xf]
        %v758 = vld [vmem:[%s683 + $0x11c] sm:$0xf]
        %v759 = vld [vmem:[%s683 + $0x120] sm:$0xf]
        %v760 = vld [vmem:[%s683 + $0x124] sm:$0xf]
        %v761 = vld [vmem:[%s683 + $0x128] sm:$0xf]
        %v762 = vld [vmem:[%s683 + $0x12c] sm:$0xf]
        %v763 = vld [vmem:[%s683 + $0x130] sm:$0xf]
        %v764 = vld [vmem:[%s683 + $0x134] sm:$0xf]
        %v765 = vld [vmem:[%s683 + $0x138] sm:$0xf]
        %v766 = vld [vmem:[%s683 + $0x13c] sm:$0xf]
        %v767 = vld [vmem:[%s683 + $0x140] sm:$0xf]
        %v768 = vld [vmem:[%s683 + $0x144] sm:$0xf]
        %v769 = vld [vmem:[%s683 + $0x148] sm:$0xf]
        %v770 = vld [vmem:[%s683 + $0x14c] sm:$0xf]
        %v771 = vld [vmem:[%s683 + $0x150] sm:$0xf]
        %v772 = vld [vmem:[%s683 + $0x154] sm:$0xf]
        %v773 = vld [vmem:[%s683 + $0x158] sm:$0xf]
        %v774 = vld [vmem:[%s683 + $0x15c] sm:$0xf]
        %v775 = vld [vmem:[%s683 + $0x160] sm:$0xf]
        %v776 = vld [vmem:[%s683 + $0x164] sm:$0xf]
        %v777 = vld [vmem:[%s683 + $0x168] sm:$0xf]
        %v778 = vld [vmem:[%s683 + $0x16c] sm:$0xf]
        %v779 = vld [vmem:[%s683 + $0x170] sm:$0xf]
        %v780 = vld [vmem:[%s683 + $0x174] sm:$0xf]
        %v781 = vld [vmem:[%s683 + $0x178] sm:$0xf]
        %v782 = vld [vmem:[%s683 + $0x17c] sm:$0xf]
        %v783 = vld [vmem:[%s683 + $0x180] sm:$0xf]
        %v784 = vld [vmem:[%s683 + $0x184] sm:$0xf]
        %v785 = vld [vmem:[%s683 + $0x188] sm:$0xf]
        %v786 = vld [vmem:[%s683 + $0x18c] sm:$0xf]
        %v787 = vld [vmem:[%s683 + $0x190] sm:$0xf]
        %v788 = vld [vmem:[%s683 + $0x194] sm:$0xf]
        %v789 = vld [vmem:[%s683 + $0x198] sm:$0xf]
        %v790 = vld [vmem:[%s683 + $0x19c] sm:$0xf]
        %v791 = vld [vmem:[%s683 + $0x1a0] sm:$0xf]
        %v792 = vld [vmem:[%s683 + $0x1a4] sm:$0xf]
        %v793 = vld [vmem:[%s683 + $0x1a8] sm:$0xf]
        %v794 = vld [vmem:[%s683 + $0x1ac] sm:$0xf]
        %v795 = vld [vmem:[%s683 + $0x1b0] sm:$0xf]
        %v796 = vld [vmem:[%s683 + $0x1b4] sm:$0xf]
        %v797 = vld [vmem:[%s683 + $0x1b8] sm:$0xf]
        %v798 = vld [vmem:[%s683 + $0x1bc] sm:$0xf]
        %v799 = vld [vmem:[%s683 + $0x1c0] sm:$0xf]
        %v800 = vld [vmem:[%s683 + $0x1c4] sm:$0xf]
        %v801 = vld [vmem:[%s683 + $0x1c8] sm:$0xf]
        %v802 = vld [vmem:[%s683 + $0x1cc] sm:$0xf]
        %v803 = vld [vmem:[%s683 + $0x1d0] sm:$0xf]
        %v804 = vld [vmem:[%s683 + $0x1d4] sm:$0xf]
        %v805 = vld [vmem:[%s683 + $0x1d8] sm:$0xf]
        %v806 = vld [vmem:[%s683 + $0x1dc] sm:$0xf]
        %v807 = vld [vmem:[%s683 + $0x1e0] sm:$0xf]
        %v808 = vld [vmem:[%s683 + $0x1e4] sm:$0xf]
        %v809 = vld [vmem:[%s683 + $0x1e8] sm:$0xf]
        %v810 = vld [vmem:[%s683 + $0x1ec] sm:$0xf]
        %v811 = vld [vmem:[%s683 + $0x1f0] sm:$0xf]
        %v812 = vld [vmem:[%s683 + $0x1f4] sm:$0xf]
        %v813 = vld [vmem:[%s683 + $0x1f8] sm:$0xf]
        %v814 = vld [vmem:[%s683 + $0x1fc] sm:$0xf]
        %v815 = vld [vmem:[%s683 + $0x200] sm:$0xf]
        %v816 = vld [vmem:[%s683 + $0x204] sm:$0xf]
        %v817 = vld [vmem:[%s683 + $0x208] sm:$0xf]
        %v818 = vld [vmem:[%s683 + $0x20c] sm:$0xf]
        %v819 = vld [vmem:[%s683 + $0x210] sm:$0xf]
        %v820 = vld [vmem:[%s683 + $0x214] sm:$0xf]
        %v821 = vld [vmem:[%s683 + $0x218] sm:$0xf]
        %v822 = vld [vmem:[%s683 + $0x21c] sm:$0xf]
        %v823 = vld [vmem:[%s683 + $0x220] sm:$0xf]
        %v824 = vld [vmem:[%s683 + $0x224] sm:$0xf]
        %v825 = vld [vmem:[%s683 + $0x228] sm:$0xf]
        %v826 = vld [vmem:[%s683 + $0x22c] sm:$0xf]
        %v827 = vld [vmem:[%s683 + $0x230] sm:$0xf]
        %v828 = vld [vmem:[%s683 + $0x234] sm:$0xf]
        %v829 = vld [vmem:[%s683 + $0x238] sm:$0xf]
        %v830 = vld [vmem:[%s683 + $0x23c] sm:$0xf]
        %v831 = vld [vmem:[%s683 + $0x240] sm:$0xf]
        %v832 = vld [vmem:[%s683 + $0x244] sm:$0xf]
        %v833 = vld [vmem:[%s683 + $0x248] sm:$0xf]
        %v834 = vld [vmem:[%s683 + $0x24c] sm:$0xf]
        %v835 = vld [vmem:[%s683 + $0x250] sm:$0xf]
        %v836 = vld [vmem:[%s683 + $0x254] sm:$0xf]
        %v837 = vld [vmem:[%s683 + $0x258] sm:$0xf]
        %v838 = vld [vmem:[%s683 + $0x25c] sm:$0xf]
        %v839 = vld [vmem:[%s683 + $0x260] sm:$0xf]
        %v840 = vld [vmem:[%s683 + $0x264] sm:$0xf]
        %v841 = vld [vmem:[%s683 + $0x268] sm:$0xf]
        %v842 = vld [vmem:[%s683 + $0x26c] sm:$0xf]
        %v843 = vld [vmem:[%s683 + $0x270] sm:$0xf]
        %v844 = vld [vmem:[%s683 + $0x274] sm:$0xf]
        %v845 = vld [vmem:[%s683 + $0x278] sm:$0xf]
        %v846 = vld [vmem:[%s683 + $0x27c] sm:$0xf]
        %v847 = vld [vmem:[%s683 + $0x280] sm:$0xf]
        %v848 = vld [vmem:[%s683 + $0x284] sm:$0xf]
        %v849 = vld [vmem:[%s683 + $0x288] sm:$0xf]
        %v850 = vld [vmem:[%s683 + $0x28c] sm:$0xf]
        %v851 = vld [vmem:[%s683 + $0x290] sm:$0xf]
        %v852 = vld [vmem:[%s683 + $0x294] sm:$0xf]
        %v853 = vld [vmem:[%s683 + $0x298] sm:$0xf]
        %v854 = vld [vmem:[%s683 + $0x29c] sm:$0xf]
        %v855 = vld [vmem:[%s683 + $0x2a0] sm:$0xf]
        %v856 = vld [vmem:[%s683 + $0x2a4] sm:$0xf]
        %v857 = vld [vmem:[%s683 + $0x2a8] sm:$0xf]
        %v858 = vld [vmem:[%s683 + $0x2ac] sm:$0xf]
        %v859 = vld [vmem:[%s683 + $0x2b0] sm:$0xf]
        %v860 = vld [vmem:[%s683 + $0x2b4] sm:$0xf]
        %v861 = vld [vmem:[%s683 + $0x2b8] sm:$0xf]
        %v862 = vld [vmem:[%s683 + $0x2bc] sm:$0xf]
        %v863 = vld [vmem:[%s683 + $0x2c0] sm:$0xf]
        %v864 = vld [vmem:[%s683 + $0x2c4] sm:$0xf]
        %v865 = vld [vmem:[%s683 + $0x2c8] sm:$0xf]
        %v866 = vld [vmem:[%s683 + $0x2cc] sm:$0xf]
        %v867 = vld [vmem:[%s683 + $0x2d0] sm:$0xf]
        %v868 = vld [vmem:[%s683 + $0x2d4] sm:$0xf]
        %v869 = vld [vmem:[%s683 + $0x2d8] sm:$0xf]
        %v870 = vld [vmem:[%s683 + $0x2dc] sm:$0xf]
        %v871 = vld [vmem:[%s683 + $0x2e0] sm:$0xf]
        %v872 = vld [vmem:[%s683 + $0x2e4] sm:$0xf]
        %v873 = vld [vmem:[%s683 + $0x2e8] sm:$0xf]
        %v874 = vld [vmem:[%s683 + $0x2ec] sm:$0xf]
        %v875 = vld [vmem:[%s683 + $0x2f0] sm:$0xf]
        %v876 = vld [vmem:[%s683 + $0x2f4] sm:$0xf]
        %v877 = vld [vmem:[%s683 + $0x2f8] sm:$0xf]
        %v878 = vld [vmem:[%s683 + $0x2fc] sm:$0xf]
        %v879 = vld [vmem:[%s683 + $0x300] sm:$0xf]
        %v880 = vld [vmem:[%s683 + $0x304] sm:$0xf]
        %v881 = vld [vmem:[%s683 + $0x308] sm:$0xf]
        %v882 = vld [vmem:[%s683 + $0x30c] sm:$0xf]
        %v883 = vld [vmem:[%s683 + $0x310] sm:$0xf]
        %v884 = vld [vmem:[%s683 + $0x314] sm:$0xf]
        %v885 = vld [vmem:[%s683 + $0x318] sm:$0xf]
        %v886 = vld [vmem:[%s683 + $0x31c] sm:$0xf]
        %v887 = vld [vmem:[%s683 + $0x320] sm:$0xf]
        %v888 = vld [vmem:[%s683 + $0x324] sm:$0xf]
        %v889 = vld [vmem:[%s683 + $0x328] sm:$0xf]
        %v890 = vld [vmem:[%s683 + $0x32c] sm:$0xf]
        %v891 = vld [vmem:[%s683 + $0x330] sm:$0xf]
        %v892 = vld [vmem:[%s683 + $0x334] sm:$0xf]
        %v893 = vld [vmem:[%s683 + $0x338] sm:$0xf]
        %v894 = vld [vmem:[%s683 + $0x33c] sm:$0xf]
        %v895 = vld [vmem:[%s683 + $0x340] sm:$0xf]
        %v896 = vld [vmem:[%s683 + $0x344] sm:$0xf]
        %v897 = vld [vmem:[%s683 + $0x348] sm:$0xf]
        %v898 = vld [vmem:[%s683 + $0x34c] sm:$0xf]
        %v899 = vld [vmem:[%s683 + $0x350] sm:$0xf]
        %v900 = vld [vmem:[%s683 + $0x354] sm:$0xf]
        %v901 = vld [vmem:[%s683 + $0x358] sm:$0xf]
        %v902 = vld [vmem:[%s683 + $0x35c] sm:$0xf]
        %v903 = vld [vmem:[%s683 + $0x360] sm:$0xf]
        %v904 = vld [vmem:[%s683 + $0x364] sm:$0xf]
        %v905 = vld [vmem:[%s683 + $0x368] sm:$0xf]
        %v906 = vld [vmem:[%s683 + $0x36c] sm:$0xf]
        %v907 = vld [vmem:[%s683 + $0x370] sm:$0xf]
        %v908 = vld [vmem:[%s683 + $0x374] sm:$0xf]
        %v909 = vld [vmem:[%s683 + $0x378] sm:$0xf]
        %v910 = vld [vmem:[%s683 + $0x37c] sm:$0xf]
        %v911 = vld [vmem:[%s683 + $0x380] sm:$0xf]
        %v912 = vld [vmem:[%s683 + $0x384] sm:$0xf]
        %v913 = vld [vmem:[%s683 + $0x388] sm:$0xf]
        %v914 = vld [vmem:[%s683 + $0x38c] sm:$0xf]
        %v915 = vld [vmem:[%s683 + $0x390] sm:$0xf]
        %v916 = vld [vmem:[%s683 + $0x394] sm:$0xf]
        %v917 = vld [vmem:[%s683 + $0x398] sm:$0xf]
        %v918 = vld [vmem:[%s683 + $0x39c] sm:$0xf]
        %v919 = vld [vmem:[%s683 + $0x3a0] sm:$0xf]
        %v920 = vld [vmem:[%s683 + $0x3a4] sm:$0xf]
        %v921 = vld [vmem:[%s683 + $0x3a8] sm:$0xf]
        %v922 = vld [vmem:[%s683 + $0x3ac] sm:$0xf]
        %v923 = vld [vmem:[%s683 + $0x3b0] sm:$0xf]
        %v924 = vld [vmem:[%s683 + $0x3b4] sm:$0xf]
        %v925 = vld [vmem:[%s683 + $0x3b8] sm:$0xf]
        %v926 = vld [vmem:[%s683 + $0x3bc] sm:$0xf]
        %v927 = vld [vmem:[%s683 + $0x3c0] sm:$0xf]
        %v928 = vld [vmem:[%s683 + $0x3c4] sm:$0xf]
        %v929 = vld [vmem:[%s683 + $0x3c8] sm:$0xf]
        %v930 = vld [vmem:[%s683 + $0x3cc] sm:$0xf]
        %v931 = vld [vmem:[%s683 + $0x3d0] sm:$0xf]
        %v932 = vld [vmem:[%s683 + $0x3d4] sm:$0xf]
        %v933 = vld [vmem:[%s683 + $0x3d8] sm:$0xf]
        %v934 = vld [vmem:[%s683 + $0x3dc] sm:$0xf]
        %v935 = vld [vmem:[%s683 + $0x3e0] sm:$0xf]
        %v936 = vld [vmem:[%s683 + $0x3e4] sm:$0xf]
        %v937 = vld [vmem:[%s683 + $0x3e8] sm:$0xf]
        %v938 = vld [vmem:[%s683 + $0x3ec] sm:$0xf]
        %v939 = vld [vmem:[%s683 + $0x3f0] sm:$0xf]
        %v940 = vld [vmem:[%s683 + $0x3f4] sm:$0xf]
        %v941 = vld [vmem:[%s683 + $0x3f8] sm:$0xf]
        %v942 = vld [vmem:[%s683 + $0x3fc] sm:$0xf]
        %v943 = vld [vmem:[%s1] sm:$0xf]
        %v944 = vld [vmem:[%s1 + $0x4] sm:$0xf]
        %v945 = vld [vmem:[%s1 + $0x8] sm:$0xf]
        %v946 = vld [vmem:[%s1 + $0xc] sm:$0xf]
        %v947 = vld [vmem:[%s1 + $0x10] sm:$0x3]
        %v948 = vld [vmem:[%s2] sm:$0x1]
        %v950 = vperm.slane %v948, 0
        %v1208 = vunpack.c.l.b16 %v687
        %v1209 = vunpack.c.l.b16 %v688
        %v1210 = vunpack.c.l.b16 %v689
        %v1211 = vunpack.c.l.b16 %v690
        %v1212 = vunpack.c.l.b16 %v691
        %v1213 = vunpack.c.l.b16 %v692
        %v1214 = vunpack.c.l.b16 %v693
        %v1215 = vunpack.c.l.b16 %v694
        %v1216 = vunpack.c.l.b16 %v695
        %v1217 = vunpack.c.l.b16 %v696
        %v1218 = vunpack.c.l.b16 %v697
        %v1219 = vunpack.c.l.b16 %v698
        %v1220 = vunpack.c.l.b16 %v699
        %v1221 = vunpack.c.l.b16 %v700
        %v1222 = vunpack.c.l.b16 %v701
        %v1223 = vunpack.c.l.b16 %v702
        %v1224 = vunpack.c.l.b16 %v703
        %v1225 = vunpack.c.l.b16 %v704
        %v1226 = vunpack.c.l.b16 %v705
        %v1227 = vunpack.c.l.b16 %v706
        %v1228 = vunpack.c.l.b16 %v707
        %v1229 = vunpack.c.l.b16 %v708
        %v1230 = vunpack.c.l.b16 %v709
        %v1231 = vunpack.c.l.b16 %v710
        %v1232 = vunpack.c.l.b16 %v711
        %v1233 = vunpack.c.l.b16 %v712
        %v1234 = vunpack.c.l.b16 %v713
        %v1235 = vunpack.c.l.b16 %v714
        %v1236 = vunpack.c.l.b16 %v715
        %v1237 = vunpack.c.l.b16 %v716
        %v1238 = vunpack.c.l.b16 %v717
        %v1239 = vunpack.c.l.b16 %v718
        %v1240 = vunpack.c.l.b16 %v719
        %v1241 = vunpack.c.l.b16 %v720
        %v1242 = vunpack.c.l.b16 %v721
        %v1243 = vunpack.c.l.b16 %v722
        %v1244 = vunpack.c.l.b16 %v723
        %v1245 = vunpack.c.l.b16 %v724
        %v1246 = vunpack.c.l.b16 %v725
        %v1247 = vunpack.c.l.b16 %v726
        %v1248 = vunpack.c.l.b16 %v727
        %v1249 = vunpack.c.l.b16 %v728
        %v1250 = vunpack.c.l.b16 %v729
        %v1251 = vunpack.c.l.b16 %v730
        %v1252 = vunpack.c.l.b16 %v731
        %v1253 = vunpack.c.l.b16 %v732
        %v1254 = vunpack.c.l.b16 %v733
        %v1255 = vunpack.c.l.b16 %v734
        %v1256 = vunpack.c.l.b16 %v735
        %v1257 = vunpack.c.l.b16 %v736
        %v1258 = vunpack.c.l.b16 %v737
        %v1259 = vunpack.c.l.b16 %v738
        %v1260 = vunpack.c.l.b16 %v739
        %v1261 = vunpack.c.l.b16 %v740
        %v1262 = vunpack.c.l.b16 %v741
        %v1263 = vunpack.c.l.b16 %v742
        %v1264 = vunpack.c.l.b16 %v743
        %v1265 = vunpack.c.l.b16 %v744
        %v1266 = vunpack.c.l.b16 %v745
        %v1267 = vunpack.c.l.b16 %v746
        %v1268 = vunpack.c.l.b16 %v747
        %v1269 = vunpack.c.l.b16 %v748
        %v1270 = vunpack.c.l.b16 %v749
        %v1271 = vunpack.c.l.b16 %v750
        %v1272 = vunpack.c.l.b16 %v751
        %v1273 = vunpack.c.l.b16 %v752
        %v1274 = vunpack.c.l.b16 %v753
        %v1275 = vunpack.c.l.b16 %v754
        %v1276 = vunpack.c.l.b16 %v755
        %v1277 = vunpack.c.l.b16 %v756
        %v1278 = vunpack.c.l.b16 %v757
        %v1279 = vunpack.c.l.b16 %v758
        %v1280 = vunpack.c.l.b16 %v759
        %v1281 = vunpack.c.l.b16 %v760
        %v1282 = vunpack.c.l.b16 %v761
        %v1283 = vunpack.c.l.b16 %v762
        %v1284 = vunpack.c.l.b16 %v763
        %v1285 = vunpack.c.l.b16 %v764
        %v1286 = vunpack.c.l.b16 %v765
        %v1287 = vunpack.c.l.b16 %v766
        %v1288 = vunpack.c.l.b16 %v767
        %v1289 = vunpack.c.l.b16 %v768
        %v1290 = vunpack.c.l.b16 %v769
        %v1291 = vunpack.c.l.b16 %v770
        %v1292 = vunpack.c.l.b16 %v771
        %v1293 = vunpack.c.l.b16 %v772
        %v1294 = vunpack.c.l.b16 %v773
        %v1295 = vunpack.c.l.b16 %v774
        %v1296 = vunpack.c.l.b16 %v775
        %v1297 = vunpack.c.l.b16 %v776
        %v1298 = vunpack.c.l.b16 %v777
        %v1299 = vunpack.c.l.b16 %v778
        %v1300 = vunpack.c.l.b16 %v779
        %v1301 = vunpack.c.l.b16 %v780
        %v1302 = vunpack.c.l.b16 %v781
        %v1303 = vunpack.c.l.b16 %v782
        %v1304 = vunpack.c.l.b16 %v783
        %v1305 = vunpack.c.l.b16 %v784
        %v1306 = vunpack.c.l.b16 %v785
        %v1307 = vunpack.c.l.b16 %v786
        %v1308 = vunpack.c.l.b16 %v787
        %v1309 = vunpack.c.l.b16 %v788
        %v1310 = vunpack.c.l.b16 %v789
        %v1311 = vunpack.c.l.b16 %v790
        %v1312 = vunpack.c.l.b16 %v791
        %v1313 = vunpack.c.l.b16 %v792
        %v1314 = vunpack.c.l.b16 %v793
        %v1315 = vunpack.c.l.b16 %v794
        %v1316 = vunpack.c.l.b16 %v795
        %v1317 = vunpack.c.l.b16 %v796
        %v1318 = vunpack.c.l.b16 %v797
        %v1319 = vunpack.c.l.b16 %v798
        %v1320 = vunpack.c.l.b16 %v799
        %v1321 = vunpack.c.l.b16 %v800
        %v1322 = vunpack.c.l.b16 %v801
        %v1323 = vunpack.c.l.b16 %v802
        %v1324 = vunpack.c.l.b16 %v803
        %v1325 = vunpack.c.l.b16 %v804
        %v1326 = vunpack.c.l.b16 %v805
        %v1327 = vunpack.c.l.b16 %v806
        %v1328 = vunpack.c.l.b16 %v807
        %v1329 = vunpack.c.l.b16 %v808
        %v1330 = vunpack.c.l.b16 %v809
        %v1331 = vunpack.c.l.b16 %v810
        %v1332 = vunpack.c.l.b16 %v811
        %v1333 = vunpack.c.l.b16 %v812
        %v1334 = vunpack.c.l.b16 %v813
        %v1335 = vunpack.c.l.b16 %v814
        %v1336 = vunpack.c.l.b16 %v815
        %v1337 = vunpack.c.l.b16 %v816
        %v1338 = vunpack.c.l.b16 %v817
        %v1339 = vunpack.c.l.b16 %v818
        %v1340 = vunpack.c.l.b16 %v819
        %v1341 = vunpack.c.l.b16 %v820
        %v1342 = vunpack.c.l.b16 %v821
        %v1343 = vunpack.c.l.b16 %v822
        %v1344 = vunpack.c.l.b16 %v823
        %v1345 = vunpack.c.l.b16 %v824
        %v1346 = vunpack.c.l.b16 %v825
        %v1347 = vunpack.c.l.b16 %v826
        %v1348 = vunpack.c.l.b16 %v827
        %v1349 = vunpack.c.l.b16 %v828
        %v1350 = vunpack.c.l.b16 %v829
        %v1351 = vunpack.c.l.b16 %v830
        %v1352 = vunpack.c.l.b16 %v831
        %v1353 = vunpack.c.l.b16 %v832
        %v1354 = vunpack.c.l.b16 %v833
        %v1355 = vunpack.c.l.b16 %v834
        %v1356 = vunpack.c.l.b16 %v835
        %v1357 = vunpack.c.l.b16 %v836
        %v1358 = vunpack.c.l.b16 %v837
        %v1359 = vunpack.c.l.b16 %v838
        %v1360 = vunpack.c.l.b16 %v839
        %v1361 = vunpack.c.l.b16 %v840
        %v1362 = vunpack.c.l.b16 %v841
        %v1363 = vunpack.c.l.b16 %v842
        %v1364 = vunpack.c.l.b16 %v843
        %v1365 = vunpack.c.l.b16 %v844
        %v1366 = vunpack.c.l.b16 %v845
        %v1367 = vunpack.c.l.b16 %v846
        %v1368 = vunpack.c.l.b16 %v847
        %v1369 = vunpack.c.l.b16 %v848
        %v1370 = vunpack.c.l.b16 %v849
        %v1371 = vunpack.c.l.b16 %v850
        %v1372 = vunpack.c.l.b16 %v851
        %v1373 = vunpack.c.l.b16 %v852
        %v1374 = vunpack.c.l.b16 %v853
        %v1375 = vunpack.c.l.b16 %v854
        %v1376 = vunpack.c.l.b16 %v855
        %v1377 = vunpack.c.l.b16 %v856
        %v1378 = vunpack.c.l.b16 %v857
        %v1379 = vunpack.c.l.b16 %v858
        %v1380 = vunpack.c.l.b16 %v859
        %v1381 = vunpack.c.l.b16 %v860
        %v1382 = vunpack.c.l.b16 %v861
        %v1383 = vunpack.c.l.b16 %v862
        %v1384 = vunpack.c.l.b16 %v863
        %v1385 = vunpack.c.l.b16 %v864
        %v1386 = vunpack.c.l.b16 %v865
        %v1387 = vunpack.c.l.b16 %v866
        %v1388 = vunpack.c.l.b16 %v867
        %v1389 = vunpack.c.l.b16 %v868
        %v1390 = vunpack.c.l.b16 %v869
        %v1391 = vunpack.c.l.b16 %v870
        %v1392 = vunpack.c.l.b16 %v871
        %v1393 = vunpack.c.l.b16 %v872
        %v1394 = vunpack.c.l.b16 %v873
        %v1395 = vunpack.c.l.b16 %v874
        %v1396 = vunpack.c.l.b16 %v875
        %v1397 = vunpack.c.l.b16 %v876
        %v1398 = vunpack.c.l.b16 %v877
        %v1399 = vunpack.c.l.b16 %v878
        %v1400 = vunpack.c.l.b16 %v879
        %v1401 = vunpack.c.l.b16 %v880
        %v1402 = vunpack.c.l.b16 %v881
        %v1403 = vunpack.c.l.b16 %v882
        %v1404 = vunpack.c.l.b16 %v883
        %v1405 = vunpack.c.l.b16 %v884
        %v1406 = vunpack.c.l.b16 %v885
        %v1407 = vunpack.c.l.b16 %v886
        %v1408 = vunpack.c.l.b16 %v887
        %v1409 = vunpack.c.l.b16 %v888
        %v1410 = vunpack.c.l.b16 %v889
        %v1411 = vunpack.c.l.b16 %v890
        %v1412 = vunpack.c.l.b16 %v891
        %v1413 = vunpack.c.l.b16 %v892
        %v1414 = vunpack.c.l.b16 %v893
        %v1415 = vunpack.c.l.b16 %v894
        %v1416 = vunpack.c.l.b16 %v895
        %v1417 = vunpack.c.l.b16 %v896
        %v1418 = vunpack.c.l.b16 %v897
        %v1419 = vunpack.c.l.b16 %v898
        %v1420 = vunpack.c.l.b16 %v899
        %v1421 = vunpack.c.l.b16 %v900
        %v1422 = vunpack.c.l.b16 %v901
        %v1423 = vunpack.c.l.b16 %v902
        %v1424 = vunpack.c.l.b16 %v903
        %v1425 = vunpack.c.l.b16 %v904
        %v1426 = vunpack.c.l.b16 %v905
        %v1427 = vunpack.c.l.b16 %v906
        %v1428 = vunpack.c.l.b16 %v907
        %v1429 = vunpack.c.l.b16 %v908
        %v1430 = vunpack.c.l.b16 %v909
        %v1431 = vunpack.c.l.b16 %v910
        %v1432 = vunpack.c.l.b16 %v911
        %v1433 = vunpack.c.l.b16 %v912
        %v1434 = vunpack.c.l.b16 %v913
        %v1435 = vunpack.c.l.b16 %v914
        %v1436 = vunpack.c.l.b16 %v915
        %v1437 = vunpack.c.l.b16 %v916
        %v1438 = vunpack.c.l.b16 %v917
        %v1439 = vunpack.c.l.b16 %v918
        %v1440 = vunpack.c.l.b16 %v919
        %v1441 = vunpack.c.l.b16 %v920
        %v1442 = vunpack.c.l.b16 %v921
        %v1443 = vunpack.c.l.b16 %v922
        %v1444 = vunpack.c.l.b16 %v923
        %v1445 = vunpack.c.l.b16 %v924
        %v1446 = vunpack.c.l.b16 %v925
        %v1447 = vunpack.c.l.b16 %v926
        %v1448 = vunpack.c.l.b16 %v927
        %v1449 = vunpack.c.l.b16 %v928
        %v1450 = vunpack.c.l.b16 %v929
        %v1451 = vunpack.c.l.b16 %v930
        %v1452 = vunpack.c.l.b16 %v931
        %v1453 = vunpack.c.l.b16 %v932
        %v1454 = vunpack.c.l.b16 %v933
        %v1455 = vunpack.c.l.b16 %v934
        %v1456 = vunpack.c.l.b16 %v935
        %v1457 = vunpack.c.l.b16 %v936
        %v1458 = vunpack.c.l.b16 %v937
        %v1459 = vunpack.c.l.b16 %v938
        %v1460 = vunpack.c.l.b16 %v939
        %v1461 = vunpack.c.l.b16 %v940
        %v1462 = vunpack.c.l.b16 %v941
        %v1463 = vunpack.c.l.b16 %v942
        %v1464 = vpack.c.b16 %v1209, %v1208
        %v1465 = vpack.c.b16 %v1211, %v1210
        %v1466 = vpack.c.b16 %v1213, %v1212
        %v1467 = vpack.c.b16 %v1215, %v1214
        %v1468 = vpack.c.b16 %v1217, %v1216
        %v1469 = vpack.c.b16 %v1219, %v1218
        %v1470 = vpack.c.b16 %v1221, %v1220
        %v1471 = vpack.c.b16 %v1223, %v1222
        %v1472 = vpack.c.b16 %v1225, %v1224
        %v1473 = vpack.c.b16 %v1227, %v1226
        %v1474 = vpack.c.b16 %v1229, %v1228
        %v1475 = vpack.c.b16 %v1231, %v1230
        %v1476 = vpack.c.b16 %v1233, %v1232
        %v1477 = vpack.c.b16 %v1235, %v1234
        %v1478 = vpack.c.b16 %v1237, %v1236
        %v1479 = vpack.c.b16 %v1239, %v1238
        %v1480 = vpack.c.b16 %v1241, %v1240
        %v1481 = vpack.c.b16 %v1243, %v1242
        %v1482 = vpack.c.b16 %v1245, %v1244
        %v1483 = vpack.c.b16 %v1247, %v1246
        %v1484 = vpack.c.b16 %v1249, %v1248
        %v1485 = vpack.c.b16 %v1251, %v1250
        %v1486 = vpack.c.b16 %v1253, %v1252
        %v1487 = vpack.c.b16 %v1255, %v1254
        %v1488 = vpack.c.b16 %v1257, %v1256
        %v1489 = vpack.c.b16 %v1259, %v1258
        %v1490 = vpack.c.b16 %v1261, %v1260
        %v1491 = vpack.c.b16 %v1263, %v1262
        %v1492 = vpack.c.b16 %v1265, %v1264
        %v1493 = vpack.c.b16 %v1267, %v1266
        %v1494 = vpack.c.b16 %v1269, %v1268
        %v1495 = vpack.c.b16 %v1271, %v1270
        %v1496 = vpack.c.b16 %v1273, %v1272
        %v1497 = vpack.c.b16 %v1275, %v1274
        %v1498 = vpack.c.b16 %v1277, %v1276
        %v1499 = vpack.c.b16 %v1279, %v1278
        %v1500 = vpack.c.b16 %v1281, %v1280
        %v1501 = vpack.c.b16 %v1283, %v1282
        %v1502 = vpack.c.b16 %v1285, %v1284
        %v1503 = vpack.c.b16 %v1287, %v1286
        %v1504 = vpack.c.b16 %v1289, %v1288
        %v1505 = vpack.c.b16 %v1291, %v1290
        %v1506 = vpack.c.b16 %v1293, %v1292
        %v1507 = vpack.c.b16 %v1295, %v1294
        %v1508 = vpack.c.b16 %v1297, %v1296
        %v1509 = vpack.c.b16 %v1299, %v1298
        %v1510 = vpack.c.b16 %v1301, %v1300
        %v1511 = vpack.c.b16 %v1303, %v1302
        %v1512 = vpack.c.b16 %v1305, %v1304
        %v1513 = vpack.c.b16 %v1307, %v1306
        %v1514 = vpack.c.b16 %v1309, %v1308
        %v1515 = vpack.c.b16 %v1311, %v1310
        %v1516 = vpack.c.b16 %v1313, %v1312
        %v1517 = vpack.c.b16 %v1315, %v1314
        %v1518 = vpack.c.b16 %v1317, %v1316
        %v1519 = vpack.c.b16 %v1319, %v1318
        %v1520 = vpack.c.b16 %v1321, %v1320
        %v1521 = vpack.c.b16 %v1323, %v1322
        %v1522 = vpack.c.b16 %v1325, %v1324
        %v1523 = vpack.c.b16 %v1327, %v1326
        %v1524 = vpack.c.b16 %v1329, %v1328
        %v1525 = vpack.c.b16 %v1331, %v1330
        %v1526 = vpack.c.b16 %v1333, %v1332
        %v1527 = vpack.c.b16 %v1335, %v1334
        %v1528 = vpack.c.b16 %v1337, %v1336
        %v1529 = vpack.c.b16 %v1339, %v1338
        %v1530 = vpack.c.b16 %v1341, %v1340
        %v1531 = vpack.c.b16 %v1343, %v1342
        %v1532 = vpack.c.b16 %v1345, %v1344
        %v1533 = vpack.c.b16 %v1347, %v1346
        %v1534 = vpack.c.b16 %v1349, %v1348
        %v1535 = vpack.c.b16 %v1351, %v1350
        %v1536 = vpack.c.b16 %v1353, %v1352
        %v1537 = vpack.c.b16 %v1355, %v1354
        %v1538 = vpack.c.b16 %v1357, %v1356
        %v1539 = vpack.c.b16 %v1359, %v1358
        %v1540 = vpack.c.b16 %v1361, %v1360
        %v1541 = vpack.c.b16 %v1363, %v1362
        %v1542 = vpack.c.b16 %v1365, %v1364
        %v1543 = vpack.c.b16 %v1367, %v1366
        %v1544 = vpack.c.b16 %v1369, %v1368
        %v1545 = vpack.c.b16 %v1371, %v1370
        %v1546 = vpack.c.b16 %v1373, %v1372
        %v1547 = vpack.c.b16 %v1375, %v1374
        %v1548 = vpack.c.b16 %v1377, %v1376
        %v1549 = vpack.c.b16 %v1379, %v1378
        %v1550 = vpack.c.b16 %v1381, %v1380
        %v1551 = vpack.c.b16 %v1383, %v1382
        %v1552 = vpack.c.b16 %v1385, %v1384
        %v1553 = vpack.c.b16 %v1387, %v1386
        %v1554 = vpack.c.b16 %v1389, %v1388
        %v1555 = vpack.c.b16 %v1391, %v1390
        %v1556 = vpack.c.b16 %v1393, %v1392
        %v1557 = vpack.c.b16 %v1395, %v1394
        %v1558 = vpack.c.b16 %v1397, %v1396
        %v1559 = vpack.c.b16 %v1399, %v1398
        %v1560 = vpack.c.b16 %v1401, %v1400
        %v1561 = vpack.c.b16 %v1403, %v1402
        %v1562 = vpack.c.b16 %v1405, %v1404
        %v1563 = vpack.c.b16 %v1407, %v1406
        %v1564 = vpack.c.b16 %v1409, %v1408
        %v1565 = vpack.c.b16 %v1411, %v1410
        %v1566 = vpack.c.b16 %v1413, %v1412
        %v1567 = vpack.c.b16 %v1415, %v1414
        %v1568 = vpack.c.b16 %v1417, %v1416
        %v1569 = vpack.c.b16 %v1419, %v1418
        %v1570 = vpack.c.b16 %v1421, %v1420
        %v1571 = vpack.c.b16 %v1423, %v1422
        %v1572 = vpack.c.b16 %v1425, %v1424
        %v1573 = vpack.c.b16 %v1427, %v1426
        %v1574 = vpack.c.b16 %v1429, %v1428
        %v1575 = vpack.c.b16 %v1431, %v1430
        %v1576 = vpack.c.b16 %v1433, %v1432
        %v1577 = vpack.c.b16 %v1435, %v1434
        %v1578 = vpack.c.b16 %v1437, %v1436
        %v1579 = vpack.c.b16 %v1439, %v1438
        %v1580 = vpack.c.b16 %v1441, %v1440
        %v1581 = vpack.c.b16 %v1443, %v1442
        %v1582 = vpack.c.b16 %v1445, %v1444
        %v1583 = vpack.c.b16 %v1447, %v1446
        %v1584 = vpack.c.b16 %v1449, %v1448
        %v1585 = vpack.c.b16 %v1451, %v1450
        %v1586 = vpack.c.b16 %v1453, %v1452
        %v1587 = vpack.c.b16 %v1455, %v1454
        %v1588 = vpack.c.b16 %v1457, %v1456
        %v1589 = vpack.c.b16 %v1459, %v1458
        %v1590 = vpack.c.b16 %v1461, %v1460
        %v1591 = vpack.c.b16 %v1463, %v1462
        %v1597 = vunpack.c.l.b16 %v943
        %v1598 = vunpack.c.l.b16 %v944
        %v1599 = vunpack.c.l.b16 %v945
        %v1600 = vunpack.c.l.b16 %v946
        %v1601 = vunpack.c.l.b16 %v947
        %v1602 = vpack.c.b16 %v1598, %v1597
        %v1603 = vpack.c.b16 %v1600, %v1599
        %v1604 = vpack.c.b16 %v1601, %v1601
        %vm1607 = vcmask 293888
        %v1609 = vsel %vm1607, %v1464, 0
        %v1612 = vsel %vm1607, %v1465, 0
        %v1615 = vsel %vm1607, %v1466, 0
        %v1618 = vsel %vm1607, %v1467, 0
        %v1621 = vsel %vm1607, %v1468, 0
        %v1624 = vsel %vm1607, %v1469, 0
        %v1627 = vsel %vm1607, %v1470, 0
        %v1630 = vsel %vm1607, %v1471, 0
        %v1633 = vsel %vm1607, %v1472, 0
        %v1636 = vsel %vm1607, %v1473, 0
        %v1639 = vsel %vm1607, %v1474, 0
        %v1642 = vsel %vm1607, %v1475, 0
        %v1645 = vsel %vm1607, %v1476, 0
        %v1648 = vsel %vm1607, %v1477, 0
        %v1651 = vsel %vm1607, %v1478, 0
        %v1654 = vsel %vm1607, %v1479, 0
        %v1657 = vsel %vm1607, %v1480, 0
        %v1660 = vsel %vm1607, %v1481, 0
        %v1663 = vsel %vm1607, %v1482, 0
        %v1666 = vsel %vm1607, %v1483, 0
        %v1669 = vsel %vm1607, %v1484, 0
        %v1672 = vsel %vm1607, %v1485, 0
        %v1675 = vsel %vm1607, %v1486, 0
        %v1678 = vsel %vm1607, %v1487, 0
        %v1681 = vsel %vm1607, %v1488, 0
        %v1684 = vsel %vm1607, %v1489, 0
        %v1687 = vsel %vm1607, %v1490, 0
        %v1690 = vsel %vm1607, %v1491, 0
        %v1693 = vsel %vm1607, %v1492, 0
        %v1696 = vsel %vm1607, %v1493, 0
        %v1699 = vsel %vm1607, %v1494, 0
        %v1702 = vsel %vm1607, %v1495, 0
        %v1705 = vsel %vm1607, %v1496, 0
        %v1708 = vsel %vm1607, %v1497, 0
        %v1711 = vsel %vm1607, %v1498, 0
        %v1714 = vsel %vm1607, %v1499, 0
        %v1717 = vsel %vm1607, %v1500, 0
        %v1720 = vsel %vm1607, %v1501, 0
        %v1723 = vsel %vm1607, %v1502, 0
        %v1726 = vsel %vm1607, %v1503, 0
        %v1729 = vsel %vm1607, %v1504, 0
        %v1732 = vsel %vm1607, %v1505, 0
        %v1735 = vsel %vm1607, %v1506, 0
        %v1738 = vsel %vm1607, %v1507, 0
        %v1741 = vsel %vm1607, %v1508, 0
        %v1744 = vsel %vm1607, %v1509, 0
        %v1747 = vsel %vm1607, %v1510, 0
        %v1750 = vsel %vm1607, %v1511, 0
        %v1753 = vsel %vm1607, %v1512, 0
        %v1756 = vsel %vm1607, %v1513, 0
        %v1759 = vsel %vm1607, %v1514, 0
        %v1762 = vsel %vm1607, %v1515, 0
        %v1765 = vsel %vm1607, %v1516, 0
        %v1768 = vsel %vm1607, %v1517, 0
        %v1771 = vsel %vm1607, %v1518, 0
        %v1774 = vsel %vm1607, %v1519, 0
        %v1777 = vsel %vm1607, %v1520, 0
        %v1780 = vsel %vm1607, %v1521, 0
        %v1783 = vsel %vm1607, %v1522, 0
        %v1786 = vsel %vm1607, %v1523, 0
        %v1789 = vsel %vm1607, %v1524, 0
        %v1792 = vsel %vm1607, %v1525, 0
        %v1795 = vsel %vm1607, %v1526, 0
        %v1798 = vsel %vm1607, %v1527, 0
        %v1801 = vsel %vm1607, %v1528, 0
        %v1804 = vsel %vm1607, %v1529, 0
        %v1807 = vsel %vm1607, %v1530, 0
        %v1810 = vsel %vm1607, %v1531, 0
        %v1813 = vsel %vm1607, %v1532, 0
        %v1816 = vsel %vm1607, %v1533, 0
        %v1819 = vsel %vm1607, %v1534, 0
        %v1822 = vsel %vm1607, %v1535, 0
        %v1825 = vsel %vm1607, %v1536, 0
        %v1828 = vsel %vm1607, %v1537, 0
        %v1831 = vsel %vm1607, %v1538, 0
        %v1834 = vsel %vm1607, %v1539, 0
        %v1837 = vsel %vm1607, %v1540, 0
        %v1840 = vsel %vm1607, %v1541, 0
        %v1843 = vsel %vm1607, %v1542, 0
        %v1846 = vsel %vm1607, %v1543, 0
        %v1849 = vsel %vm1607, %v1544, 0
        %v1852 = vsel %vm1607, %v1545, 0
        %v1855 = vsel %vm1607, %v1546, 0
        %v1858 = vsel %vm1607, %v1547, 0
        %v1861 = vsel %vm1607, %v1548, 0
        %v1864 = vsel %vm1607, %v1549, 0
        %v1867 = vsel %vm1607, %v1550, 0
        %v1870 = vsel %vm1607, %v1551, 0
        %v1873 = vsel %vm1607, %v1552, 0
        %v1876 = vsel %vm1607, %v1553, 0
        %v1879 = vsel %vm1607, %v1554, 0
        %v1882 = vsel %vm1607, %v1555, 0
        %v1885 = vsel %vm1607, %v1556, 0
        %v1888 = vsel %vm1607, %v1557, 0
        %v1891 = vsel %vm1607, %v1558, 0
        %v1894 = vsel %vm1607, %v1559, 0
        %v1897 = vsel %vm1607, %v1560, 0
        %v1900 = vsel %vm1607, %v1561, 0
        %v1903 = vsel %vm1607, %v1562, 0
        %v1906 = vsel %vm1607, %v1563, 0
        %v1909 = vsel %vm1607, %v1564, 0
        %v1912 = vsel %vm1607, %v1565, 0
        %v1915 = vsel %vm1607, %v1566, 0
        %v1918 = vsel %vm1607, %v1567, 0
        %v1921 = vsel %vm1607, %v1568, 0
        %v1924 = vsel %vm1607, %v1569, 0
        %v1927 = vsel %vm1607, %v1570, 0
        %v1930 = vsel %vm1607, %v1571, 0
        %v1933 = vsel %vm1607, %v1572, 0
        %v1936 = vsel %vm1607, %v1573, 0
        %v1939 = vsel %vm1607, %v1574, 0
        %v1942 = vsel %vm1607, %v1575, 0
        %v1945 = vsel %vm1607, %v1576, 0
        %v1948 = vsel %vm1607, %v1577, 0
        %v1951 = vsel %vm1607, %v1578, 0
        %v1954 = vsel %vm1607, %v1579, 0
        %v1957 = vsel %vm1607, %v1580, 0
        %v1960 = vsel %vm1607, %v1581, 0
        %v1963 = vsel %vm1607, %v1582, 0
        %v1966 = vsel %vm1607, %v1583, 0
        %v1969 = vsel %vm1607, %v1584, 0
        %v1972 = vsel %vm1607, %v1585, 0
        %v1975 = vsel %vm1607, %v1586, 0
        %v1978 = vsel %vm1607, %v1587, 0
        %v1981 = vsel %vm1607, %v1588, 0
        %v1984 = vsel %vm1607, %v1589, 0
        %v1987 = vsel %vm1607, %v1590, 0
        %v1990 = vsel %vm1607, %v1591, 0
        %vm1992 = vcmask 1041408
        %v1994 = vsel %vm1992, %v1604, 0
        %1996 = vmatpush.bf16.msra.mxu0 0
        %1997 = vmatpush.bf16.msra.mxu0 0
        %1998 = vmatpush.bf16.msra.mxu0 0
        %1999 = vmatpush.bf16.msra.mxu0 0
        %2000 = vmatpush.bf16.msra.mxu0 0
        %2001 = vmatpush.bf16.msra.mxu0 %v1994
        %2002 = vmatpush.bf16.msra.mxu0 %v1603
        %2003 = vmatpush.bf16.msra.mxu0 %v1602
        %2004 = vmatmul.bf16.gmra.mxu0 %v1609
        %v2005 = vpop.f32.mrf.mxu0
        %v2006 = vadd.f32 %v950, %v2005
        %v2007 = vpop.f32.mrf.mxu0
        %v2008 = vadd.f32 %v950, %v2007
        %2009 = vmatmul.bf16.gmra.mxu0 %v1612
        %v2010 = vpop.f32.mrf.mxu0
        %v2011 = vadd.f32 %v950, %v2010
        %v2012 = vpop.f32.mrf.mxu0
        %v2013 = vadd.f32 %v950, %v2012
        %2014 = vmatmul.bf16.gmra.mxu0 %v1615
        %v2015 = vpop.f32.mrf.mxu0
        %v2016 = vadd.f32 %v950, %v2015
        %v2017 = vpop.f32.mrf.mxu0
        %v2018 = vadd.f32 %v950, %v2017
        %2019 = vmatmul.bf16.gmra.mxu0 %v1618
        %v2020 = vpop.f32.mrf.mxu0
        %v2021 = vadd.f32 %v950, %v2020
        %v2022 = vpop.f32.mrf.mxu0
        %v2023 = vadd.f32 %v950, %v2022
        %2024 = vmatmul.bf16.gmra.mxu0 %v1621
        %v2025 = vpop.f32.mrf.mxu0
        %v2026 = vadd.f32 %v950, %v2025
        %v2027 = vpop.f32.mrf.mxu0
        %v2028 = vadd.f32 %v950, %v2027
        %2029 = vmatmul.bf16.gmra.mxu0 %v1624
        %v2030 = vpop.f32.mrf.mxu0
        %v2031 = vadd.f32 %v950, %v2030
        %v2032 = vpop.f32.mrf.mxu0
        %v2033 = vadd.f32 %v950, %v2032
        %2034 = vmatmul.bf16.gmra.mxu0 %v1627
        %v2035 = vpop.f32.mrf.mxu0
        %v2036 = vadd.f32 %v950, %v2035
        %v2037 = vpop.f32.mrf.mxu0
        %v2038 = vadd.f32 %v950, %v2037
        %2039 = vmatmul.bf16.gmra.mxu0 %v1630
        %v2040 = vpop.f32.mrf.mxu0
        %v2041 = vadd.f32 %v950, %v2040
        %v2042 = vpop.f32.mrf.mxu0
        %v2043 = vadd.f32 %v950, %v2042
        %2044 = vmatmul.bf16.gmra.mxu0 %v1633
        %v2045 = vpop.f32.mrf.mxu0
        %v2046 = vadd.f32 %v950, %v2045
        %v2047 = vpop.f32.mrf.mxu0
        %v2048 = vadd.f32 %v950, %v2047
        %2049 = vmatmul.bf16.gmra.mxu0 %v1636
        %v2050 = vpop.f32.mrf.mxu0
        %v2051 = vadd.f32 %v950, %v2050
        %v2052 = vpop.f32.mrf.mxu0
        %v2053 = vadd.f32 %v950, %v2052
        %2054 = vmatmul.bf16.gmra.mxu0 %v1639
        %v2055 = vpop.f32.mrf.mxu0
        %v2056 = vadd.f32 %v950, %v2055
        %v2057 = vpop.f32.mrf.mxu0
        %v2058 = vadd.f32 %v950, %v2057
        %2059 = vmatmul.bf16.gmra.mxu0 %v1642
        %v2060 = vpop.f32.mrf.mxu0
        %v2061 = vadd.f32 %v950, %v2060
        %v2062 = vpop.f32.mrf.mxu0
        %v2063 = vadd.f32 %v950, %v2062
        %2064 = vmatmul.bf16.gmra.mxu0 %v1645
        %v2065 = vpop.f32.mrf.mxu0
        %v2066 = vadd.f32 %v950, %v2065
        %v2067 = vpop.f32.mrf.mxu0
        %v2068 = vadd.f32 %v950, %v2067
        %2069 = vmatmul.bf16.gmra.mxu0 %v1648
        %v2070 = vpop.f32.mrf.mxu0
        %v2071 = vadd.f32 %v950, %v2070
        %v2072 = vpop.f32.mrf.mxu0
        %v2073 = vadd.f32 %v950, %v2072
        %2074 = vmatmul.bf16.gmra.mxu0 %v1651
        %v2075 = vpop.f32.mrf.mxu0
        %v2076 = vadd.f32 %v950, %v2075
        %v2077 = vpop.f32.mrf.mxu0
        %v2078 = vadd.f32 %v950, %v2077
        %2079 = vmatmul.bf16.gmra.mxu0 %v1654
        %v2080 = vpop.f32.mrf.mxu0
        %v2081 = vadd.f32 %v950, %v2080
        %v2082 = vpop.f32.mrf.mxu0
        %v2083 = vadd.f32 %v950, %v2082
        %2084 = vmatmul.bf16.gmra.mxu0 %v1657
        %v2085 = vpop.f32.mrf.mxu0
        %v2086 = vadd.f32 %v950, %v2085
        %v2087 = vpop.f32.mrf.mxu0
        %v2088 = vadd.f32 %v950, %v2087
        %2089 = vmatmul.bf16.gmra.mxu0 %v1660
        %v2090 = vpop.f32.mrf.mxu0
        %v2091 = vadd.f32 %v950, %v2090
        %v2092 = vpop.f32.mrf.mxu0
        %v2093 = vadd.f32 %v950, %v2092
        %2094 = vmatmul.bf16.gmra.mxu0 %v1663
        %v2095 = vpop.f32.mrf.mxu0
        %v2096 = vadd.f32 %v950, %v2095
        %v2097 = vpop.f32.mrf.mxu0
        %v2098 = vadd.f32 %v950, %v2097
        %2099 = vmatmul.bf16.gmra.mxu0 %v1666
        %v2100 = vpop.f32.mrf.mxu0
        %v2101 = vadd.f32 %v950, %v2100
        %v2102 = vpop.f32.mrf.mxu0
        %v2103 = vadd.f32 %v950, %v2102
        %2104 = vmatmul.bf16.gmra.mxu0 %v1669
        %v2105 = vpop.f32.mrf.mxu0
        %v2106 = vadd.f32 %v950, %v2105
        %v2107 = vpop.f32.mrf.mxu0
        %v2108 = vadd.f32 %v950, %v2107
        %2109 = vmatmul.bf16.gmra.mxu0 %v1672
        %v2110 = vpop.f32.mrf.mxu0
        %v2111 = vadd.f32 %v950, %v2110
        %v2112 = vpop.f32.mrf.mxu0
        %v2113 = vadd.f32 %v950, %v2112
        %2114 = vmatmul.bf16.gmra.mxu0 %v1675
        %v2115 = vpop.f32.mrf.mxu0
        %v2116 = vadd.f32 %v950, %v2115
        %v2117 = vpop.f32.mrf.mxu0
        %v2118 = vadd.f32 %v950, %v2117
        %2119 = vmatmul.bf16.gmra.mxu0 %v1678
        %v2120 = vpop.f32.mrf.mxu0
        %v2121 = vadd.f32 %v950, %v2120
        %v2122 = vpop.f32.mrf.mxu0
        %v2123 = vadd.f32 %v950, %v2122
        %2124 = vmatmul.bf16.gmra.mxu0 %v1681
        %v2125 = vpop.f32.mrf.mxu0
        %v2126 = vadd.f32 %v950, %v2125
        %v2127 = vpop.f32.mrf.mxu0
        %v2128 = vadd.f32 %v950, %v2127
        %2129 = vmatmul.bf16.gmra.mxu0 %v1684
        %v2130 = vpop.f32.mrf.mxu0
        %v2131 = vadd.f32 %v950, %v2130
        %v2132 = vpop.f32.mrf.mxu0
        %v2133 = vadd.f32 %v950, %v2132
        %2134 = vmatmul.bf16.gmra.mxu0 %v1687
        %v2135 = vpop.f32.mrf.mxu0
        %v2136 = vadd.f32 %v950, %v2135
        %v2137 = vpop.f32.mrf.mxu0
        %v2138 = vadd.f32 %v950, %v2137
        %2139 = vmatmul.bf16.gmra.mxu0 %v1690
        %v2140 = vpop.f32.mrf.mxu0
        %v2141 = vadd.f32 %v950, %v2140
        %v2142 = vpop.f32.mrf.mxu0
        %v2143 = vadd.f32 %v950, %v2142
        %2144 = vmatmul.bf16.gmra.mxu0 %v1693
        %v2145 = vpop.f32.mrf.mxu0
        %v2146 = vadd.f32 %v950, %v2145
        %v2147 = vpop.f32.mrf.mxu0
        %v2148 = vadd.f32 %v950, %v2147
        %2149 = vmatmul.bf16.gmra.mxu0 %v1696
        %v2150 = vpop.f32.mrf.mxu0
        %v2151 = vadd.f32 %v950, %v2150
        %v2152 = vpop.f32.mrf.mxu0
        %v2153 = vadd.f32 %v950, %v2152
        %2154 = vmatmul.bf16.gmra.mxu0 %v1699
        %v2155 = vpop.f32.mrf.mxu0
        %v2156 = vadd.f32 %v950, %v2155
        %v2157 = vpop.f32.mrf.mxu0
        %v2158 = vadd.f32 %v950, %v2157
        %2159 = vmatmul.bf16.gmra.mxu0 %v1702
        %v2160 = vpop.f32.mrf.mxu0
        %v2161 = vadd.f32 %v950, %v2160
        %v2162 = vpop.f32.mrf.mxu0
        %v2163 = vadd.f32 %v950, %v2162
        %2164 = vmatmul.bf16.gmra.mxu0 %v1705
        %v2165 = vpop.f32.mrf.mxu0
        %v2166 = vadd.f32 %v950, %v2165
        %v2167 = vpop.f32.mrf.mxu0
        %v2168 = vadd.f32 %v950, %v2167
        %2169 = vmatmul.bf16.gmra.mxu0 %v1708
        %v2170 = vpop.f32.mrf.mxu0
        %v2171 = vadd.f32 %v950, %v2170
        %v2172 = vpop.f32.mrf.mxu0
        %v2173 = vadd.f32 %v950, %v2172
        %2174 = vmatmul.bf16.gmra.mxu0 %v1711
        %v2175 = vpop.f32.mrf.mxu0
        %v2176 = vadd.f32 %v950, %v2175
        %v2177 = vpop.f32.mrf.mxu0
        %v2178 = vadd.f32 %v950, %v2177
        %2179 = vmatmul.bf16.gmra.mxu0 %v1714
        %v2180 = vpop.f32.mrf.mxu0
        %v2181 = vadd.f32 %v950, %v2180
        %v2182 = vpop.f32.mrf.mxu0
        %v2183 = vadd.f32 %v950, %v2182
        %2184 = vmatmul.bf16.gmra.mxu0 %v1717
        %v2185 = vpop.f32.mrf.mxu0
        %v2186 = vadd.f32 %v950, %v2185
        %v2187 = vpop.f32.mrf.mxu0
        %v2188 = vadd.f32 %v950, %v2187
        %2189 = vmatmul.bf16.gmra.mxu0 %v1720
        %v2190 = vpop.f32.mrf.mxu0
        %v2191 = vadd.f32 %v950, %v2190
        %v2192 = vpop.f32.mrf.mxu0
        %v2193 = vadd.f32 %v950, %v2192
        %2194 = vmatmul.bf16.gmra.mxu0 %v1723
        %v2195 = vpop.f32.mrf.mxu0
        %v2196 = vadd.f32 %v950, %v2195
        %v2197 = vpop.f32.mrf.mxu0
        %v2198 = vadd.f32 %v950, %v2197
        %2199 = vmatmul.bf16.gmra.mxu0 %v1726
        %v2200 = vpop.f32.mrf.mxu0
        %v2201 = vadd.f32 %v950, %v2200
        %v2202 = vpop.f32.mrf.mxu0
        %v2203 = vadd.f32 %v950, %v2202
        %2204 = vmatmul.bf16.gmra.mxu0 %v1729
        %v2205 = vpop.f32.mrf.mxu0
        %v2206 = vadd.f32 %v950, %v2205
        %v2207 = vpop.f32.mrf.mxu0
        %v2208 = vadd.f32 %v950, %v2207
        %2209 = vmatmul.bf16.gmra.mxu0 %v1732
        %v2210 = vpop.f32.mrf.mxu0
        %v2211 = vadd.f32 %v950, %v2210
        %v2212 = vpop.f32.mrf.mxu0
        %v2213 = vadd.f32 %v950, %v2212
        %2214 = vmatmul.bf16.gmra.mxu0 %v1735
        %v2215 = vpop.f32.mrf.mxu0
        %v2216 = vadd.f32 %v950, %v2215
        %v2217 = vpop.f32.mrf.mxu0
        %v2218 = vadd.f32 %v950, %v2217
        %2219 = vmatmul.bf16.gmra.mxu0 %v1738
        %v2220 = vpop.f32.mrf.mxu0
        %v2221 = vadd.f32 %v950, %v2220
        %v2222 = vpop.f32.mrf.mxu0
        %v2223 = vadd.f32 %v950, %v2222
        %2224 = vmatmul.bf16.gmra.mxu0 %v1741
        %v2225 = vpop.f32.mrf.mxu0
        %v2226 = vadd.f32 %v950, %v2225
        %v2227 = vpop.f32.mrf.mxu0
        %v2228 = vadd.f32 %v950, %v2227
        %2229 = vmatmul.bf16.gmra.mxu0 %v1744
        %v2230 = vpop.f32.mrf.mxu0
        %v2231 = vadd.f32 %v950, %v2230
        %v2232 = vpop.f32.mrf.mxu0
        %v2233 = vadd.f32 %v950, %v2232
        %2234 = vmatmul.bf16.gmra.mxu0 %v1747
        %v2235 = vpop.f32.mrf.mxu0
        %v2236 = vadd.f32 %v950, %v2235
        %v2237 = vpop.f32.mrf.mxu0
        %v2238 = vadd.f32 %v950, %v2237
        %2239 = vmatmul.bf16.gmra.mxu0 %v1750
        %v2240 = vpop.f32.mrf.mxu0
        %v2241 = vadd.f32 %v950, %v2240
        %v2242 = vpop.f32.mrf.mxu0
        %v2243 = vadd.f32 %v950, %v2242
        %2244 = vmatmul.bf16.gmra.mxu0 %v1753
        %v2245 = vpop.f32.mrf.mxu0
        %v2246 = vadd.f32 %v950, %v2245
        %v2247 = vpop.f32.mrf.mxu0
        %v2248 = vadd.f32 %v950, %v2247
        %2249 = vmatmul.bf16.gmra.mxu0 %v1756
        %v2250 = vpop.f32.mrf.mxu0
        %v2251 = vadd.f32 %v950, %v2250
        %v2252 = vpop.f32.mrf.mxu0
        %v2253 = vadd.f32 %v950, %v2252
        %2254 = vmatmul.bf16.gmra.mxu0 %v1759
        %v2255 = vpop.f32.mrf.mxu0
        %v2256 = vadd.f32 %v950, %v2255
        %v2257 = vpop.f32.mrf.mxu0
        %v2258 = vadd.f32 %v950, %v2257
        %2259 = vmatmul.bf16.gmra.mxu0 %v1762
        %v2260 = vpop.f32.mrf.mxu0
        %v2261 = vadd.f32 %v950, %v2260
        %v2262 = vpop.f32.mrf.mxu0
        %v2263 = vadd.f32 %v950, %v2262
        %2264 = vmatmul.bf16.gmra.mxu0 %v1765
        %v2265 = vpop.f32.mrf.mxu0
        %v2266 = vadd.f32 %v950, %v2265
        %v2267 = vpop.f32.mrf.mxu0
        %v2268 = vadd.f32 %v950, %v2267
        %2269 = vmatmul.bf16.gmra.mxu0 %v1768
        %v2270 = vpop.f32.mrf.mxu0
        %v2271 = vadd.f32 %v950, %v2270
        %v2272 = vpop.f32.mrf.mxu0
        %v2273 = vadd.f32 %v950, %v2272
        %2274 = vmatmul.bf16.gmra.mxu0 %v1771
        %v2275 = vpop.f32.mrf.mxu0
        %v2276 = vadd.f32 %v950, %v2275
        %v2277 = vpop.f32.mrf.mxu0
        %v2278 = vadd.f32 %v950, %v2277
        %2279 = vmatmul.bf16.gmra.mxu0 %v1774
        %v2280 = vpop.f32.mrf.mxu0
        %v2281 = vadd.f32 %v950, %v2280
        %v2282 = vpop.f32.mrf.mxu0
        %v2283 = vadd.f32 %v950, %v2282
        %2284 = vmatmul.bf16.gmra.mxu0 %v1777
        %v2285 = vpop.f32.mrf.mxu0
        %v2286 = vadd.f32 %v950, %v2285
        %v2287 = vpop.f32.mrf.mxu0
        %v2288 = vadd.f32 %v950, %v2287
        %2289 = vmatmul.bf16.gmra.mxu0 %v1780
        %v2290 = vpop.f32.mrf.mxu0
        %v2291 = vadd.f32 %v950, %v2290
        %v2292 = vpop.f32.mrf.mxu0
        %v2293 = vadd.f32 %v950, %v2292
        %2294 = vmatmul.bf16.gmra.mxu0 %v1783
        %v2295 = vpop.f32.mrf.mxu0
        %v2296 = vadd.f32 %v950, %v2295
        %v2297 = vpop.f32.mrf.mxu0
        %v2298 = vadd.f32 %v950, %v2297
        %2299 = vmatmul.bf16.gmra.mxu0 %v1786
        %v2300 = vpop.f32.mrf.mxu0
        %v2301 = vadd.f32 %v950, %v2300
        %v2302 = vpop.f32.mrf.mxu0
        %v2303 = vadd.f32 %v950, %v2302
        %2304 = vmatmul.bf16.gmra.mxu0 %v1789
        %v2305 = vpop.f32.mrf.mxu0
        %v2306 = vadd.f32 %v950, %v2305
        %v2307 = vpop.f32.mrf.mxu0
        %v2308 = vadd.f32 %v950, %v2307
        %2309 = vmatmul.bf16.gmra.mxu0 %v1792
        %v2310 = vpop.f32.mrf.mxu0
        %v2311 = vadd.f32 %v950, %v2310
        %v2312 = vpop.f32.mrf.mxu0
        %v2313 = vadd.f32 %v950, %v2312
        %2314 = vmatmul.bf16.gmra.mxu0 %v1795
        %v2315 = vpop.f32.mrf.mxu0
        %v2316 = vadd.f32 %v950, %v2315
        %v2317 = vpop.f32.mrf.mxu0
        %v2318 = vadd.f32 %v950, %v2317
        %2319 = vmatmul.bf16.gmra.mxu0 %v1798
        %v2320 = vpop.f32.mrf.mxu0
        %v2321 = vadd.f32 %v950, %v2320
        %v2322 = vpop.f32.mrf.mxu0
        %v2323 = vadd.f32 %v950, %v2322
        %2324 = vmatmul.bf16.gmra.mxu0 %v1801
        %v2325 = vpop.f32.mrf.mxu0
        %v2326 = vadd.f32 %v950, %v2325
        %v2327 = vpop.f32.mrf.mxu0
        %v2328 = vadd.f32 %v950, %v2327
        %2329 = vmatmul.bf16.gmra.mxu0 %v1804
        %v2330 = vpop.f32.mrf.mxu0
        %v2331 = vadd.f32 %v950, %v2330
        %v2332 = vpop.f32.mrf.mxu0
        %v2333 = vadd.f32 %v950, %v2332
        %2334 = vmatmul.bf16.gmra.mxu0 %v1807
        %v2335 = vpop.f32.mrf.mxu0
        %v2336 = vadd.f32 %v950, %v2335
        %v2337 = vpop.f32.mrf.mxu0
        %v2338 = vadd.f32 %v950, %v2337
        %2339 = vmatmul.bf16.gmra.mxu0 %v1810
        %v2340 = vpop.f32.mrf.mxu0
        %v2341 = vadd.f32 %v950, %v2340
        %v2342 = vpop.f32.mrf.mxu0
        %v2343 = vadd.f32 %v950, %v2342
        %2344 = vmatmul.bf16.gmra.mxu0 %v1813
        %v2345 = vpop.f32.mrf.mxu0
        %v2346 = vadd.f32 %v950, %v2345
        %v2347 = vpop.f32.mrf.mxu0
        %v2348 = vadd.f32 %v950, %v2347
        %2349 = vmatmul.bf16.gmra.mxu0 %v1816
        %v2350 = vpop.f32.mrf.mxu0
        %v2351 = vadd.f32 %v950, %v2350
        %v2352 = vpop.f32.mrf.mxu0
        %v2353 = vadd.f32 %v950, %v2352
        %2354 = vmatmul.bf16.gmra.mxu0 %v1819
        %v2355 = vpop.f32.mrf.mxu0
        %v2356 = vadd.f32 %v950, %v2355
        %v2357 = vpop.f32.mrf.mxu0
        %v2358 = vadd.f32 %v950, %v2357
        %2359 = vmatmul.bf16.gmra.mxu0 %v1822
        %v2360 = vpop.f32.mrf.mxu0
        %v2361 = vadd.f32 %v950, %v2360
        %v2362 = vpop.f32.mrf.mxu0
        %v2363 = vadd.f32 %v950, %v2362
        %2364 = vmatmul.bf16.gmra.mxu0 %v1825
        %v2365 = vpop.f32.mrf.mxu0
        %v2366 = vadd.f32 %v950, %v2365
        %v2367 = vpop.f32.mrf.mxu0
        %v2368 = vadd.f32 %v950, %v2367
        %2369 = vmatmul.bf16.gmra.mxu0 %v1828
        %v2370 = vpop.f32.mrf.mxu0
        %v2371 = vadd.f32 %v950, %v2370
        %v2372 = vpop.f32.mrf.mxu0
        %v2373 = vadd.f32 %v950, %v2372
        %2374 = vmatmul.bf16.gmra.mxu0 %v1831
        %v2375 = vpop.f32.mrf.mxu0
        %v2376 = vadd.f32 %v950, %v2375
        %v2377 = vpop.f32.mrf.mxu0
        %v2378 = vadd.f32 %v950, %v2377
        %2379 = vmatmul.bf16.gmra.mxu0 %v1834
        %v2380 = vpop.f32.mrf.mxu0
        %v2381 = vadd.f32 %v950, %v2380
        %v2382 = vpop.f32.mrf.mxu0
        %v2383 = vadd.f32 %v950, %v2382
        %2384 = vmatmul.bf16.gmra.mxu0 %v1837
        %v2385 = vpop.f32.mrf.mxu0
        %v2386 = vadd.f32 %v950, %v2385
        %v2387 = vpop.f32.mrf.mxu0
        %v2388 = vadd.f32 %v950, %v2387
        %2389 = vmatmul.bf16.gmra.mxu0 %v1840
        %v2390 = vpop.f32.mrf.mxu0
        %v2391 = vadd.f32 %v950, %v2390
        %v2392 = vpop.f32.mrf.mxu0
        %v2393 = vadd.f32 %v950, %v2392
        %2394 = vmatmul.bf16.gmra.mxu0 %v1843
        %v2395 = vpop.f32.mrf.mxu0
        %v2396 = vadd.f32 %v950, %v2395
        %v2397 = vpop.f32.mrf.mxu0
        %v2398 = vadd.f32 %v950, %v2397
        %2399 = vmatmul.bf16.gmra.mxu0 %v1846
        %v2400 = vpop.f32.mrf.mxu0
        %v2401 = vadd.f32 %v950, %v2400
        %v2402 = vpop.f32.mrf.mxu0
        %v2403 = vadd.f32 %v950, %v2402
        %2404 = vmatmul.bf16.gmra.mxu0 %v1849
        %v2405 = vpop.f32.mrf.mxu0
        %v2406 = vadd.f32 %v950, %v2405
        %v2407 = vpop.f32.mrf.mxu0
        %v2408 = vadd.f32 %v950, %v2407
        %2409 = vmatmul.bf16.gmra.mxu0 %v1852
        %v2410 = vpop.f32.mrf.mxu0
        %v2411 = vadd.f32 %v950, %v2410
        %v2412 = vpop.f32.mrf.mxu0
        %v2413 = vadd.f32 %v950, %v2412
        %2414 = vmatmul.bf16.gmra.mxu0 %v1855
        %v2415 = vpop.f32.mrf.mxu0
        %v2416 = vadd.f32 %v950, %v2415
        %v2417 = vpop.f32.mrf.mxu0
        %v2418 = vadd.f32 %v950, %v2417
        %2419 = vmatmul.bf16.gmra.mxu0 %v1858
        %v2420 = vpop.f32.mrf.mxu0
        %v2421 = vadd.f32 %v950, %v2420
        %v2422 = vpop.f32.mrf.mxu0
        %v2423 = vadd.f32 %v950, %v2422
        %2424 = vmatmul.bf16.gmra.mxu0 %v1861
        %v2425 = vpop.f32.mrf.mxu0
        %v2426 = vadd.f32 %v950, %v2425
        %v2427 = vpop.f32.mrf.mxu0
        %v2428 = vadd.f32 %v950, %v2427
        %2429 = vmatmul.bf16.gmra.mxu0 %v1864
        %v2430 = vpop.f32.mrf.mxu0
        %v2431 = vadd.f32 %v950, %v2430
        %v2432 = vpop.f32.mrf.mxu0
        %v2433 = vadd.f32 %v950, %v2432
        %2434 = vmatmul.bf16.gmra.mxu0 %v1867
        %v2435 = vpop.f32.mrf.mxu0
        %v2436 = vadd.f32 %v950, %v2435
        %v2437 = vpop.f32.mrf.mxu0
        %v2438 = vadd.f32 %v950, %v2437
        %2439 = vmatmul.bf16.gmra.mxu0 %v1870
        %v2440 = vpop.f32.mrf.mxu0
        %v2441 = vadd.f32 %v950, %v2440
        %v2442 = vpop.f32.mrf.mxu0
        %v2443 = vadd.f32 %v950, %v2442
        %2444 = vmatmul.bf16.gmra.mxu0 %v1873
        %v2445 = vpop.f32.mrf.mxu0
        %v2446 = vadd.f32 %v950, %v2445
        %v2447 = vpop.f32.mrf.mxu0
        %v2448 = vadd.f32 %v950, %v2447
        %2449 = vmatmul.bf16.gmra.mxu0 %v1876
        %v2450 = vpop.f32.mrf.mxu0
        %v2451 = vadd.f32 %v950, %v2450
        %v2452 = vpop.f32.mrf.mxu0
        %v2453 = vadd.f32 %v950, %v2452
        %2454 = vmatmul.bf16.gmra.mxu0 %v1879
        %v2455 = vpop.f32.mrf.mxu0
        %v2456 = vadd.f32 %v950, %v2455
        %v2457 = vpop.f32.mrf.mxu0
        %v2458 = vadd.f32 %v950, %v2457
        %2459 = vmatmul.bf16.gmra.mxu0 %v1882
        %v2460 = vpop.f32.mrf.mxu0
        %v2461 = vadd.f32 %v950, %v2460
        %v2462 = vpop.f32.mrf.mxu0
        %v2463 = vadd.f32 %v950, %v2462
        %2464 = vmatmul.bf16.gmra.mxu0 %v1885
        %v2465 = vpop.f32.mrf.mxu0
        %v2466 = vadd.f32 %v950, %v2465
        %v2467 = vpop.f32.mrf.mxu0
        %v2468 = vadd.f32 %v950, %v2467
        %2469 = vmatmul.bf16.gmra.mxu0 %v1888
        %v2470 = vpop.f32.mrf.mxu0
        %v2471 = vadd.f32 %v950, %v2470
        %v2472 = vpop.f32.mrf.mxu0
        %v2473 = vadd.f32 %v950, %v2472
        %2474 = vmatmul.bf16.gmra.mxu0 %v1891
        %v2475 = vpop.f32.mrf.mxu0
        %v2476 = vadd.f32 %v950, %v2475
        %v2477 = vpop.f32.mrf.mxu0
        %v2478 = vadd.f32 %v950, %v2477
        %2479 = vmatmul.bf16.gmra.mxu0 %v1894
        %v2480 = vpop.f32.mrf.mxu0
        %v2481 = vadd.f32 %v950, %v2480
        %v2482 = vpop.f32.mrf.mxu0
        %v2483 = vadd.f32 %v950, %v2482
        %2484 = vmatmul.bf16.gmra.mxu0 %v1897
        %v2485 = vpop.f32.mrf.mxu0
        %v2486 = vadd.f32 %v950, %v2485
        %v2487 = vpop.f32.mrf.mxu0
        %v2488 = vadd.f32 %v950, %v2487
        %2489 = vmatmul.bf16.gmra.mxu0 %v1900
        %v2490 = vpop.f32.mrf.mxu0
        %v2491 = vadd.f32 %v950, %v2490
        %v2492 = vpop.f32.mrf.mxu0
        %v2493 = vadd.f32 %v950, %v2492
        %2494 = vmatmul.bf16.gmra.mxu0 %v1903
        %v2495 = vpop.f32.mrf.mxu0
        %v2496 = vadd.f32 %v950, %v2495
        %v2497 = vpop.f32.mrf.mxu0
        %v2498 = vadd.f32 %v950, %v2497
        %2499 = vmatmul.bf16.gmra.mxu0 %v1906
        %v2500 = vpop.f32.mrf.mxu0
        %v2501 = vadd.f32 %v950, %v2500
        %v2502 = vpop.f32.mrf.mxu0
        %v2503 = vadd.f32 %v950, %v2502
        %2504 = vmatmul.bf16.gmra.mxu0 %v1909
        %v2505 = vpop.f32.mrf.mxu0
        %v2506 = vadd.f32 %v950, %v2505
        %v2507 = vpop.f32.mrf.mxu0
        %v2508 = vadd.f32 %v950, %v2507
        %2509 = vmatmul.bf16.gmra.mxu0 %v1912
        %v2510 = vpop.f32.mrf.mxu0
        %v2511 = vadd.f32 %v950, %v2510
        %v2512 = vpop.f32.mrf.mxu0
        %v2513 = vadd.f32 %v950, %v2512
        %2514 = vmatmul.bf16.gmra.mxu0 %v1915
        %v2515 = vpop.f32.mrf.mxu0
        %v2516 = vadd.f32 %v950, %v2515
        %v2517 = vpop.f32.mrf.mxu0
        %v2518 = vadd.f32 %v950, %v2517
        %2519 = vmatmul.bf16.gmra.mxu0 %v1918
        %v2520 = vpop.f32.mrf.mxu0
        %v2521 = vadd.f32 %v950, %v2520
        %v2522 = vpop.f32.mrf.mxu0
        %v2523 = vadd.f32 %v950, %v2522
        %2524 = vmatmul.bf16.gmra.mxu0 %v1921
        %v2525 = vpop.f32.mrf.mxu0
        %v2526 = vadd.f32 %v950, %v2525
        %v2527 = vpop.f32.mrf.mxu0
        %v2528 = vadd.f32 %v950, %v2527
        %2529 = vmatmul.bf16.gmra.mxu0 %v1924
        %v2530 = vpop.f32.mrf.mxu0
        %v2531 = vadd.f32 %v950, %v2530
        %v2532 = vpop.f32.mrf.mxu0
        %v2533 = vadd.f32 %v950, %v2532
        %2534 = vmatmul.bf16.gmra.mxu0 %v1927
        %v2535 = vpop.f32.mrf.mxu0
        %v2536 = vadd.f32 %v950, %v2535
        %v2537 = vpop.f32.mrf.mxu0
        %v2538 = vadd.f32 %v950, %v2537
        %2539 = vmatmul.bf16.gmra.mxu0 %v1930
        %v2540 = vpop.f32.mrf.mxu0
        %v2541 = vadd.f32 %v950, %v2540
        %v2542 = vpop.f32.mrf.mxu0
        %v2543 = vadd.f32 %v950, %v2542
        %2544 = vmatmul.bf16.gmra.mxu0 %v1933
        %v2545 = vpop.f32.mrf.mxu0
        %v2546 = vadd.f32 %v950, %v2545
        %v2547 = vpop.f32.mrf.mxu0
        %v2548 = vadd.f32 %v950, %v2547
        %2549 = vmatmul.bf16.gmra.mxu0 %v1936
        %v2550 = vpop.f32.mrf.mxu0
        %v2551 = vadd.f32 %v950, %v2550
        %v2552 = vpop.f32.mrf.mxu0
        %v2553 = vadd.f32 %v950, %v2552
        %2554 = vmatmul.bf16.gmra.mxu0 %v1939
        %v2555 = vpop.f32.mrf.mxu0
        %v2556 = vadd.f32 %v950, %v2555
        %v2557 = vpop.f32.mrf.mxu0
        %v2558 = vadd.f32 %v950, %v2557
        %2559 = vmatmul.bf16.gmra.mxu0 %v1942
        %v2560 = vpop.f32.mrf.mxu0
        %v2561 = vadd.f32 %v950, %v2560
        %v2562 = vpop.f32.mrf.mxu0
        %v2563 = vadd.f32 %v950, %v2562
        %2564 = vmatmul.bf16.gmra.mxu0 %v1945
        %v2565 = vpop.f32.mrf.mxu0
        %v2566 = vadd.f32 %v950, %v2565
        %v2567 = vpop.f32.mrf.mxu0
        %v2568 = vadd.f32 %v950, %v2567
        %2569 = vmatmul.bf16.gmra.mxu0 %v1948
        %v2570 = vpop.f32.mrf.mxu0
        %v2571 = vadd.f32 %v950, %v2570
        %v2572 = vpop.f32.mrf.mxu0
        %v2573 = vadd.f32 %v950, %v2572
        %2574 = vmatmul.bf16.gmra.mxu0 %v1951
        %v2575 = vpop.f32.mrf.mxu0
        %v2576 = vadd.f32 %v950, %v2575
        %v2577 = vpop.f32.mrf.mxu0
        %v2578 = vadd.f32 %v950, %v2577
        %2579 = vmatmul.bf16.gmra.mxu0 %v1954
        %v2580 = vpop.f32.mrf.mxu0
        %v2581 = vadd.f32 %v950, %v2580
        %v2582 = vpop.f32.mrf.mxu0
        %v2583 = vadd.f32 %v950, %v2582
        %2584 = vmatmul.bf16.gmra.mxu0 %v1957
        %v2585 = vpop.f32.mrf.mxu0
        %v2586 = vadd.f32 %v950, %v2585
        %v2587 = vpop.f32.mrf.mxu0
        %v2588 = vadd.f32 %v950, %v2587
        %2589 = vmatmul.bf16.gmra.mxu0 %v1960
        %v2590 = vpop.f32.mrf.mxu0
        %v2591 = vadd.f32 %v950, %v2590
        %v2592 = vpop.f32.mrf.mxu0
        %v2593 = vadd.f32 %v950, %v2592
        %2594 = vmatmul.bf16.gmra.mxu0 %v1963
        %v2595 = vpop.f32.mrf.mxu0
        %v2596 = vadd.f32 %v950, %v2595
        %v2597 = vpop.f32.mrf.mxu0
        %v2598 = vadd.f32 %v950, %v2597
        %2599 = vmatmul.bf16.gmra.mxu0 %v1966
        %v2600 = vpop.f32.mrf.mxu0
        %v2601 = vadd.f32 %v950, %v2600
        %v2602 = vpop.f32.mrf.mxu0
        %v2603 = vadd.f32 %v950, %v2602
        %2604 = vmatmul.bf16.gmra.mxu0 %v1969
        %v2605 = vpop.f32.mrf.mxu0
        %v2606 = vadd.f32 %v950, %v2605
        %v2607 = vpop.f32.mrf.mxu0
        %v2608 = vadd.f32 %v950, %v2607
        %2609 = vmatmul.bf16.gmra.mxu0 %v1972
        %v2610 = vpop.f32.mrf.mxu0
        %v2611 = vadd.f32 %v950, %v2610
        %v2612 = vpop.f32.mrf.mxu0
        %v2613 = vadd.f32 %v950, %v2612
        %2614 = vmatmul.bf16.gmra.mxu0 %v1975
        %v2615 = vpop.f32.mrf.mxu0
        %v2616 = vadd.f32 %v950, %v2615
        %v2617 = vpop.f32.mrf.mxu0
        %v2618 = vadd.f32 %v950, %v2617
        %2619 = vmatmul.bf16.gmra.mxu0 %v1978
        %v2620 = vpop.f32.mrf.mxu0
        %v2621 = vadd.f32 %v950, %v2620
        %v2622 = vpop.f32.mrf.mxu0
        %v2623 = vadd.f32 %v950, %v2622
        %2624 = vmatmul.bf16.gmra.mxu0 %v1981
        %v2625 = vpop.f32.mrf.mxu0
        %v2626 = vadd.f32 %v950, %v2625
        %v2627 = vpop.f32.mrf.mxu0
        %v2628 = vadd.f32 %v950, %v2627
        %2629 = vmatmul.bf16.gmra.mxu0 %v1984
        %v2630 = vpop.f32.mrf.mxu0
        %v2631 = vadd.f32 %v950, %v2630
        %v2632 = vpop.f32.mrf.mxu0
        %v2633 = vadd.f32 %v950, %v2632
        %2634 = vmatmul.bf16.gmra.mxu0 %v1987
        %v2635 = vpop.f32.mrf.mxu0
        %v2636 = vadd.f32 %v950, %v2635
        %v2637 = vpop.f32.mrf.mxu0
        %v2638 = vadd.f32 %v950, %v2637
        %2639 = vmatmul.bf16.gmra.mxu0 %v1990
        %v2640 = vpop.f32.mrf.mxu0
        %v2641 = vadd.f32 %v950, %v2640
        %v2642 = vpop.f32.mrf.mxu0
        %v2643 = vadd.f32 %v950, %v2642
        %2644 = vdwg.mxu0
        %2645 = vst [vmem:[%s676] sm:$0xff] %v2006
        %2646 = vst [vmem:[%s676 + $0x8] sm:$0xff] %v2008
        %2647 = vst [vmem:[%s676 + $0x10] sm:$0xff] %v2011
        %2648 = vst [vmem:[%s676 + $0x18] sm:$0xff] %v2013
        %2649 = vst [vmem:[%s676 + $0x20] sm:$0xff] %v2016
        %2650 = vst [vmem:[%s676 + $0x28] sm:$0xff] %v2018
        %2651 = vst [vmem:[%s676 + $0x30] sm:$0xff] %v2021
        %2652 = vst [vmem:[%s676 + $0x38] sm:$0xff] %v2023
        %2653 = vst [vmem:[%s676 + $0x40] sm:$0xff] %v2026
        %2654 = vst [vmem:[%s676 + $0x48] sm:$0xff] %v2028
        %2655 = vst [vmem:[%s676 + $0x50] sm:$0xff] %v2031
        %2656 = vst [vmem:[%s676 + $0x58] sm:$0xff] %v2033
        %2657 = vst [vmem:[%s676 + $0x60] sm:$0xff] %v2036
        %2658 = vst [vmem:[%s676 + $0x68] sm:$0xff] %v2038
        %2659 = vst [vmem:[%s676 + $0x70] sm:$0xff] %v2041
        %2660 = vst [vmem:[%s676 + $0x78] sm:$0xff] %v2043
        %2661 = vst [vmem:[%s676 + $0x80] sm:$0xff] %v2046
        %2662 = vst [vmem:[%s676 + $0x88] sm:$0xff] %v2048
        %2663 = vst [vmem:[%s676 + $0x90] sm:$0xff] %v2051
        %2664 = vst [vmem:[%s676 + $0x98] sm:$0xff] %v2053
        %2665 = vst [vmem:[%s676 + $0xa0] sm:$0xff] %v2056
        %2666 = vst [vmem:[%s676 + $0xa8] sm:$0xff] %v2058
        %2667 = vst [vmem:[%s676 + $0xb0] sm:$0xff] %v2061
        %2668 = vst [vmem:[%s676 + $0xb8] sm:$0xff] %v2063
        %2669 = vst [vmem:[%s676 + $0xc0] sm:$0xff] %v2066
        %2670 = vst [vmem:[%s676 + $0xc8] sm:$0xff] %v2068
        %2671 = vst [vmem:[%s676 + $0xd0] sm:$0xff] %v2071
        %2672 = vst [vmem:[%s676 + $0xd8] sm:$0xff] %v2073
        %2673 = vst [vmem:[%s676 + $0xe0] sm:$0xff] %v2076
        %2674 = vst [vmem:[%s676 + $0xe8] sm:$0xff] %v2078
        %2675 = vst [vmem:[%s676 + $0xf0] sm:$0xff] %v2081
        %2676 = vst [vmem:[%s676 + $0xf8] sm:$0xff] %v2083
        %2677 = vst [vmem:[%s676 + $0x100] sm:$0xff] %v2086
        %2678 = vst [vmem:[%s676 + $0x108] sm:$0xff] %v2088
        %2679 = vst [vmem:[%s676 + $0x110] sm:$0xff] %v2091
        %2680 = vst [vmem:[%s676 + $0x118] sm:$0xff] %v2093
        %2681 = vst [vmem:[%s676 + $0x120] sm:$0xff] %v2096
        %2682 = vst [vmem:[%s676 + $0x128] sm:$0xff] %v2098
        %2683 = vst [vmem:[%s676 + $0x130] sm:$0xff] %v2101
        %2684 = vst [vmem:[%s676 + $0x138] sm:$0xff] %v2103
        %2685 = vst [vmem:[%s676 + $0x140] sm:$0xff] %v2106
        %2686 = vst [vmem:[%s676 + $0x148] sm:$0xff] %v2108
        %2687 = vst [vmem:[%s676 + $0x150] sm:$0xff] %v2111
        %2688 = vst [vmem:[%s676 + $0x158] sm:$0xff] %v2113
        %2689 = vst [vmem:[%s676 + $0x160] sm:$0xff] %v2116
        %2690 = vst [vmem:[%s676 + $0x168] sm:$0xff] %v2118
        %2691 = vst [vmem:[%s676 + $0x170] sm:$0xff] %v2121
        %2692 = vst [vmem:[%s676 + $0x178] sm:$0xff] %v2123
        %2693 = vst [vmem:[%s676 + $0x180] sm:$0xff] %v2126
        %2694 = vst [vmem:[%s676 + $0x188] sm:$0xff] %v2128
        %2695 = vst [vmem:[%s676 + $0x190] sm:$0xff] %v2131
        %2696 = vst [vmem:[%s676 + $0x198] sm:$0xff] %v2133
        %2697 = vst [vmem:[%s676 + $0x1a0] sm:$0xff] %v2136
        %2698 = vst [vmem:[%s676 + $0x1a8] sm:$0xff] %v2138
        %2699 = vst [vmem:[%s676 + $0x1b0] sm:$0xff] %v2141
        %2700 = vst [vmem:[%s676 + $0x1b8] sm:$0xff] %v2143
        %2701 = vst [vmem:[%s676 + $0x1c0] sm:$0xff] %v2146
        %2702 = vst [vmem:[%s676 + $0x1c8] sm:$0xff] %v2148
        %2703 = vst [vmem:[%s676 + $0x1d0] sm:$0xff] %v2151
        %2704 = vst [vmem:[%s676 + $0x1d8] sm:$0xff] %v2153
        %2705 = vst [vmem:[%s676 + $0x1e0] sm:$0xff] %v2156
        %2706 = vst [vmem:[%s676 + $0x1e8] sm:$0xff] %v2158
        %2707 = vst [vmem:[%s676 + $0x1f0] sm:$0xff] %v2161
        %2708 = vst [vmem:[%s676 + $0x1f8] sm:$0xff] %v2163
        %2709 = vst [vmem:[%s676 + $0x200] sm:$0xff] %v2166
        %2710 = vst [vmem:[%s676 + $0x208] sm:$0xff] %v2168
        %2711 = vst [vmem:[%s676 + $0x210] sm:$0xff] %v2171
        %2712 = vst [vmem:[%s676 + $0x218] sm:$0xff] %v2173
        %2713 = vst [vmem:[%s676 + $0x220] sm:$0xff] %v2176
        %2714 = vst [vmem:[%s676 + $0x228] sm:$0xff] %v2178
        %2715 = vst [vmem:[%s676 + $0x230] sm:$0xff] %v2181
        %2716 = vst [vmem:[%s676 + $0x238] sm:$0xff] %v2183
        %2717 = vst [vmem:[%s676 + $0x240] sm:$0xff] %v2186
        %2718 = vst [vmem:[%s676 + $0x248] sm:$0xff] %v2188
        %2719 = vst [vmem:[%s676 + $0x250] sm:$0xff] %v2191
        %2720 = vst [vmem:[%s676 + $0x258] sm:$0xff] %v2193
        %2721 = vst [vmem:[%s676 + $0x260] sm:$0xff] %v2196
        %2722 = vst [vmem:[%s676 + $0x268] sm:$0xff] %v2198
        %2723 = vst [vmem:[%s676 + $0x270] sm:$0xff] %v2201
        %2724 = vst [vmem:[%s676 + $0x278] sm:$0xff] %v2203
        %2725 = vst [vmem:[%s676 + $0x280] sm:$0xff] %v2206
        %2726 = vst [vmem:[%s676 + $0x288] sm:$0xff] %v2208
        %2727 = vst [vmem:[%s676 + $0x290] sm:$0xff] %v2211
        %2728 = vst [vmem:[%s676 + $0x298] sm:$0xff] %v2213
        %2729 = vst [vmem:[%s676 + $0x2a0] sm:$0xff] %v2216
        %2730 = vst [vmem:[%s676 + $0x2a8] sm:$0xff] %v2218
        %2731 = vst [vmem:[%s676 + $0x2b0] sm:$0xff] %v2221
        %2732 = vst [vmem:[%s676 + $0x2b8] sm:$0xff] %v2223
        %2733 = vst [vmem:[%s676 + $0x2c0] sm:$0xff] %v2226
        %2734 = vst [vmem:[%s676 + $0x2c8] sm:$0xff] %v2228
        %2735 = vst [vmem:[%s676 + $0x2d0] sm:$0xff] %v2231
        %2736 = vst [vmem:[%s676 + $0x2d8] sm:$0xff] %v2233
        %2737 = vst [vmem:[%s676 + $0x2e0] sm:$0xff] %v2236
        %2738 = vst [vmem:[%s676 + $0x2e8] sm:$0xff] %v2238
        %2739 = vst [vmem:[%s676 + $0x2f0] sm:$0xff] %v2241
        %2740 = vst [vmem:[%s676 + $0x2f8] sm:$0xff] %v2243
        %2741 = vst [vmem:[%s676 + $0x300] sm:$0xff] %v2246
        %2742 = vst [vmem:[%s676 + $0x308] sm:$0xff] %v2248
        %2743 = vst [vmem:[%s676 + $0x310] sm:$0xff] %v2251
        %2744 = vst [vmem:[%s676 + $0x318] sm:$0xff] %v2253
        %2745 = vst [vmem:[%s676 + $0x320] sm:$0xff] %v2256
        %2746 = vst [vmem:[%s676 + $0x328] sm:$0xff] %v2258
        %2747 = vst [vmem:[%s676 + $0x330] sm:$0xff] %v2261
        %2748 = vst [vmem:[%s676 + $0x338] sm:$0xff] %v2263
        %2749 = vst [vmem:[%s676 + $0x340] sm:$0xff] %v2266
        %2750 = vst [vmem:[%s676 + $0x348] sm:$0xff] %v2268
        %2751 = vst [vmem:[%s676 + $0x350] sm:$0xff] %v2271
        %2752 = vst [vmem:[%s676 + $0x358] sm:$0xff] %v2273
        %2753 = vst [vmem:[%s676 + $0x360] sm:$0xff] %v2276
        %2754 = vst [vmem:[%s676 + $0x368] sm:$0xff] %v2278
        %2755 = vst [vmem:[%s676 + $0x370] sm:$0xff] %v2281
        %2756 = vst [vmem:[%s676 + $0x378] sm:$0xff] %v2283
        %2757 = vst [vmem:[%s676 + $0x380] sm:$0xff] %v2286
        %2758 = vst [vmem:[%s676 + $0x388] sm:$0xff] %v2288
        %2759 = vst [vmem:[%s676 + $0x390] sm:$0xff] %v2291
        %2760 = vst [vmem:[%s676 + $0x398] sm:$0xff] %v2293
        %2761 = vst [vmem:[%s676 + $0x3a0] sm:$0xff] %v2296
        %2762 = vst [vmem:[%s676 + $0x3a8] sm:$0xff] %v2298
        %2763 = vst [vmem:[%s676 + $0x3b0] sm:$0xff] %v2301
        %2764 = vst [vmem:[%s676 + $0x3b8] sm:$0xff] %v2303
        %2765 = vst [vmem:[%s676 + $0x3c0] sm:$0xff] %v2306
        %2766 = vst [vmem:[%s676 + $0x3c8] sm:$0xff] %v2308
        %2767 = vst [vmem:[%s676 + $0x3d0] sm:$0xff] %v2311
        %2768 = vst [vmem:[%s676 + $0x3d8] sm:$0xff] %v2313
        %2769 = vst [vmem:[%s676 + $0x3e0] sm:$0xff] %v2316
        %2770 = vst [vmem:[%s676 + $0x3e8] sm:$0xff] %v2318
        %2771 = vst [vmem:[%s676 + $0x3f0] sm:$0xff] %v2321
        %2772 = vst [vmem:[%s676 + $0x3f8] sm:$0xff] %v2323
        %2773 = vst [vmem:[%s676 + $0x400] sm:$0xff] %v2326
        %2774 = vst [vmem:[%s676 + $0x408] sm:$0xff] %v2328
        %2775 = vst [vmem:[%s676 + $0x410] sm:$0xff] %v2331
        %2776 = vst [vmem:[%s676 + $0x418] sm:$0xff] %v2333
        %2777 = vst [vmem:[%s676 + $0x420] sm:$0xff] %v2336
        %2778 = vst [vmem:[%s676 + $0x428] sm:$0xff] %v2338
        %2779 = vst [vmem:[%s676 + $0x430] sm:$0xff] %v2341
        %2780 = vst [vmem:[%s676 + $0x438] sm:$0xff] %v2343
        %2781 = vst [vmem:[%s676 + $0x440] sm:$0xff] %v2346
        %2782 = vst [vmem:[%s676 + $0x448] sm:$0xff] %v2348
        %2783 = vst [vmem:[%s676 + $0x450] sm:$0xff] %v2351
        %2784 = vst [vmem:[%s676 + $0x458] sm:$0xff] %v2353
        %2785 = vst [vmem:[%s676 + $0x460] sm:$0xff] %v2356
        %2786 = vst [vmem:[%s676 + $0x468] sm:$0xff] %v2358
        %2787 = vst [vmem:[%s676 + $0x470] sm:$0xff] %v2361
        %2788 = vst [vmem:[%s676 + $0x478] sm:$0xff] %v2363
        %2789 = vst [vmem:[%s676 + $0x480] sm:$0xff] %v2366
        %2790 = vst [vmem:[%s676 + $0x488] sm:$0xff] %v2368
        %2791 = vst [vmem:[%s676 + $0x490] sm:$0xff] %v2371
        %2792 = vst [vmem:[%s676 + $0x498] sm:$0xff] %v2373
        %2793 = vst [vmem:[%s676 + $0x4a0] sm:$0xff] %v2376
        %2794 = vst [vmem:[%s676 + $0x4a8] sm:$0xff] %v2378
        %2795 = vst [vmem:[%s676 + $0x4b0] sm:$0xff] %v2381
        %2796 = vst [vmem:[%s676 + $0x4b8] sm:$0xff] %v2383
        %2797 = vst [vmem:[%s676 + $0x4c0] sm:$0xff] %v2386
        %2798 = vst [vmem:[%s676 + $0x4c8] sm:$0xff] %v2388
        %2799 = vst [vmem:[%s676 + $0x4d0] sm:$0xff] %v2391
        %2800 = vst [vmem:[%s676 + $0x4d8] sm:$0xff] %v2393
        %2801 = vst [vmem:[%s676 + $0x4e0] sm:$0xff] %v2396
        %2802 = vst [vmem:[%s676 + $0x4e8] sm:$0xff] %v2398
        %2803 = vst [vmem:[%s676 + $0x4f0] sm:$0xff] %v2401
        %2804 = vst [vmem:[%s676 + $0x4f8] sm:$0xff] %v2403
        %2805 = vst [vmem:[%s676 + $0x500] sm:$0xff] %v2406
        %2806 = vst [vmem:[%s676 + $0x508] sm:$0xff] %v2408
        %2807 = vst [vmem:[%s676 + $0x510] sm:$0xff] %v2411
        %2808 = vst [vmem:[%s676 + $0x518] sm:$0xff] %v2413
        %2809 = vst [vmem:[%s676 + $0x520] sm:$0xff] %v2416
        %2810 = vst [vmem:[%s676 + $0x528] sm:$0xff] %v2418
        %2811 = vst [vmem:[%s676 + $0x530] sm:$0xff] %v2421
        %2812 = vst [vmem:[%s676 + $0x538] sm:$0xff] %v2423
        %2813 = vst [vmem:[%s676 + $0x540] sm:$0xff] %v2426
        %2814 = vst [vmem:[%s676 + $0x548] sm:$0xff] %v2428
        %2815 = vst [vmem:[%s676 + $0x550] sm:$0xff] %v2431
        %2816 = vst [vmem:[%s676 + $0x558] sm:$0xff] %v2433
        %2817 = vst [vmem:[%s676 + $0x560] sm:$0xff] %v2436
        %2818 = vst [vmem:[%s676 + $0x568] sm:$0xff] %v2438
        %2819 = vst [vmem:[%s676 + $0x570] sm:$0xff] %v2441
        %2820 = vst [vmem:[%s676 + $0x578] sm:$0xff] %v2443
        %2821 = vst [vmem:[%s676 + $0x580] sm:$0xff] %v2446
        %2822 = vst [vmem:[%s676 + $0x588] sm:$0xff] %v2448
        %2823 = vst [vmem:[%s676 + $0x590] sm:$0xff] %v2451
        %2824 = vst [vmem:[%s676 + $0x598] sm:$0xff] %v2453
        %2825 = vst [vmem:[%s676 + $0x5a0] sm:$0xff] %v2456
        %2826 = vst [vmem:[%s676 + $0x5a8] sm:$0xff] %v2458
        %2827 = vst [vmem:[%s676 + $0x5b0] sm:$0xff] %v2461
        %2828 = vst [vmem:[%s676 + $0x5b8] sm:$0xff] %v2463
        %2829 = vst [vmem:[%s676 + $0x5c0] sm:$0xff] %v2466
        %2830 = vst [vmem:[%s676 + $0x5c8] sm:$0xff] %v2468
        %2831 = vst [vmem:[%s676 + $0x5d0] sm:$0xff] %v2471
        %2832 = vst [vmem:[%s676 + $0x5d8] sm:$0xff] %v2473
        %2833 = vst [vmem:[%s676 + $0x5e0] sm:$0xff] %v2476
        %2834 = vst [vmem:[%s676 + $0x5e8] sm:$0xff] %v2478
        %2835 = vst [vmem:[%s676 + $0x5f0] sm:$0xff] %v2481
        %2836 = vst [vmem:[%s676 + $0x5f8] sm:$0xff] %v2483
        %2837 = vst [vmem:[%s676 + $0x600] sm:$0xff] %v2486
        %2838 = vst [vmem:[%s676 + $0x608] sm:$0xff] %v2488
        %2839 = vst [vmem:[%s676 + $0x610] sm:$0xff] %v2491
        %2840 = vst [vmem:[%s676 + $0x618] sm:$0xff] %v2493
        %2841 = vst [vmem:[%s676 + $0x620] sm:$0xff] %v2496
        %2842 = vst [vmem:[%s676 + $0x628] sm:$0xff] %v2498
        %2843 = vst [vmem:[%s676 + $0x630] sm:$0xff] %v2501
        %2844 = vst [vmem:[%s676 + $0x638] sm:$0xff] %v2503
        %2845 = vst [vmem:[%s676 + $0x640] sm:$0xff] %v2506
        %2846 = vst [vmem:[%s676 + $0x648] sm:$0xff] %v2508
        %2847 = vst [vmem:[%s676 + $0x650] sm:$0xff] %v2511
        %2848 = vst [vmem:[%s676 + $0x658] sm:$0xff] %v2513
        %2849 = vst [vmem:[%s676 + $0x660] sm:$0xff] %v2516
        %2850 = vst [vmem:[%s676 + $0x668] sm:$0xff] %v2518
        %2851 = vst [vmem:[%s676 + $0x670] sm:$0xff] %v2521
        %2852 = vst [vmem:[%s676 + $0x678] sm:$0xff] %v2523
        %2853 = vst [vmem:[%s676 + $0x680] sm:$0xff] %v2526
        %2854 = vst [vmem:[%s676 + $0x688] sm:$0xff] %v2528
        %2855 = vst [vmem:[%s676 + $0x690] sm:$0xff] %v2531
        %2856 = vst [vmem:[%s676 + $0x698] sm:$0xff] %v2533
        %2857 = vst [vmem:[%s676 + $0x6a0] sm:$0xff] %v2536
        %2858 = vst [vmem:[%s676 + $0x6a8] sm:$0xff] %v2538
        %2859 = vst [vmem:[%s676 + $0x6b0] sm:$0xff] %v2541
        %2860 = vst [vmem:[%s676 + $0x6b8] sm:$0xff] %v2543
        %2861 = vst [vmem:[%s676 + $0x6c0] sm:$0xff] %v2546
        %2862 = vst [vmem:[%s676 + $0x6c8] sm:$0xff] %v2548
        %2863 = vst [vmem:[%s676 + $0x6d0] sm:$0xff] %v2551
        %2864 = vst [vmem:[%s676 + $0x6d8] sm:$0xff] %v2553
        %2865 = vst [vmem:[%s676 + $0x6e0] sm:$0xff] %v2556
        %2866 = vst [vmem:[%s676 + $0x6e8] sm:$0xff] %v2558
        %2867 = vst [vmem:[%s676 + $0x6f0] sm:$0xff] %v2561
        %2868 = vst [vmem:[%s676 + $0x6f8] sm:$0xff] %v2563
        %2869 = vst [vmem:[%s676 + $0x700] sm:$0xff] %v2566
        %2870 = vst [vmem:[%s676 + $0x708] sm:$0xff] %v2568
        %2871 = vst [vmem:[%s676 + $0x710] sm:$0xff] %v2571
        %2872 = vst [vmem:[%s676 + $0x718] sm:$0xff] %v2573
        %2873 = vst [vmem:[%s676 + $0x720] sm:$0xff] %v2576
        %2874 = vst [vmem:[%s676 + $0x728] sm:$0xff] %v2578
        %2875 = vst [vmem:[%s676 + $0x730] sm:$0xff] %v2581
        %2876 = vst [vmem:[%s676 + $0x738] sm:$0xff] %v2583
        %2877 = vst [vmem:[%s676 + $0x740] sm:$0xff] %v2586
        %2878 = vst [vmem:[%s676 + $0x748] sm:$0xff] %v2588
        %2879 = vst [vmem:[%s676 + $0x750] sm:$0xff] %v2591
        %2880 = vst [vmem:[%s676 + $0x758] sm:$0xff] %v2593
        %2881 = vst [vmem:[%s676 + $0x760] sm:$0xff] %v2596
        %2882 = vst [vmem:[%s676 + $0x768] sm:$0xff] %v2598
        %2883 = vst [vmem:[%s676 + $0x770] sm:$0xff] %v2601
        %2884 = vst [vmem:[%s676 + $0x778] sm:$0xff] %v2603
        %2885 = vst [vmem:[%s676 + $0x780] sm:$0xff] %v2606
        %2886 = vst [vmem:[%s676 + $0x788] sm:$0xff] %v2608
        %2887 = vst [vmem:[%s676 + $0x790] sm:$0xff] %v2611
        %2888 = vst [vmem:[%s676 + $0x798] sm:$0xff] %v2613
        %2889 = vst [vmem:[%s676 + $0x7a0] sm:$0xff] %v2616
        %2890 = vst [vmem:[%s676 + $0x7a8] sm:$0xff] %v2618
        %2891 = vst [vmem:[%s676 + $0x7b0] sm:$0xff] %v2621
        %2892 = vst [vmem:[%s676 + $0x7b8] sm:$0xff] %v2623
        %2893 = vst [vmem:[%s676 + $0x7c0] sm:$0xff] %v2626
        %2894 = vst [vmem:[%s676 + $0x7c8] sm:$0xff] %v2628
        %2895 = vst [vmem:[%s676 + $0x7d0] sm:$0xff] %v2631
        %2896 = vst [vmem:[%s676 + $0x7d8] sm:$0xff] %v2633
        %2897 = vst [vmem:[%s676 + $0x7e0] sm:$0xff] %v2636
        %2898 = vst [vmem:[%s676 + $0x7e8] sm:$0xff] %v2638
        %2899 = vst [vmem:[%s676 + $0x7f0] sm:$0xff] %v2641
        %2900 = vst [vmem:[%s676 + $0x7f8] sm:$0xff] %v2643
        %s2901 = smul.u32 %s40, 8
        %v2902 = vadd.f32 %v2006, %v2008
        %v2903 = vadd.f32 %v2902, %v2011
        %v2904 = vadd.f32 %v2903, %v2013
        %v2905 = vadd.f32 %v2904, %v2016
        %v2906 = vadd.f32 %v2905, %v2018
        %v2907 = vadd.f32 %v2906, %v2021
        %v2908 = vadd.f32 %v2907, %v2023
        %v2909 = vadd.f32 %v2908, %v2026
        %v2910 = vadd.f32 %v2909, %v2028
        %v2911 = vadd.f32 %v2910, %v2031
        %v2912 = vadd.f32 %v2911, %v2033
        %v2913 = vadd.f32 %v2912, %v2036
        %v2914 = vadd.f32 %v2913, %v2038
        %v2915 = vadd.f32 %v2914, %v2041
        %v2916 = vadd.f32 %v2915, %v2043
        %v2917 = vadd.f32 %v2916, %v2046
        %v2918 = vadd.f32 %v2917, %v2048
        %v2919 = vadd.f32 %v2918, %v2051
        %v2920 = vadd.f32 %v2919, %v2053
        %v2921 = vadd.f32 %v2920, %v2056
        %v2922 = vadd.f32 %v2921, %v2058
        %v2923 = vadd.f32 %v2922, %v2061
        %v2924 = vadd.f32 %v2923, %v2063
        %v2925 = vadd.f32 %v2924, %v2066
        %v2926 = vadd.f32 %v2925, %v2068
        %v2927 = vadd.f32 %v2926, %v2071
        %v2928 = vadd.f32 %v2927, %v2073
        %v2929 = vadd.f32 %v2928, %v2076
        %v2930 = vadd.f32 %v2929, %v2078
        %v2931 = vadd.f32 %v2930, %v2081
        %v2932 = vadd.f32 %v2931, %v2083
        %v2933 = vrot.slane %v2932, 4
        %v2934 = vadd.f32 %v2932, %v2933
        %v2935 = vrot.slane %v2934, 2
        %v2936 = vadd.f32 %v2934, %v2935
        %v2937 = vrot.slane %v2936, 1
        %v2938 = vadd.f32 %v2936, %v2937
        %v2939 = vadd.f32 %v2086, %v2088
        %v2940 = vadd.f32 %v2939, %v2091
        %v2941 = vadd.f32 %v2940, %v2093
        %v2942 = vadd.f32 %v2941, %v2096
        %v2943 = vadd.f32 %v2942, %v2098
        %v2944 = vadd.f32 %v2943, %v2101
        %v2945 = vadd.f32 %v2944, %v2103
        %v2946 = vadd.f32 %v2945, %v2106
        %v2947 = vadd.f32 %v2946, %v2108
        %v2948 = vadd.f32 %v2947, %v2111
        %v2949 = vadd.f32 %v2948, %v2113
        %v2950 = vadd.f32 %v2949, %v2116
        %v2951 = vadd.f32 %v2950, %v2118
        %v2952 = vadd.f32 %v2951, %v2121
        %v2953 = vadd.f32 %v2952, %v2123
        %v2954 = vadd.f32 %v2953, %v2126
        %v2955 = vadd.f32 %v2954, %v2128
        %v2956 = vadd.f32 %v2955, %v2131
        %v2957 = vadd.f32 %v2956, %v2133
        %v2958 = vadd.f32 %v2957, %v2136
        %v2959 = vadd.f32 %v2958, %v2138
        %v2960 = vadd.f32 %v2959, %v2141
        %v2961 = vadd.f32 %v2960, %v2143
        %v2962 = vadd.f32 %v2961, %v2146
        %v2963 = vadd.f32 %v2962, %v2148
        %v2964 = vadd.f32 %v2963, %v2151
        %v2965 = vadd.f32 %v2964, %v2153
        %v2966 = vadd.f32 %v2965, %v2156
        %v2967 = vadd.f32 %v2966, %v2158
        %v2968 = vadd.f32 %v2967, %v2161
        %v2969 = vadd.f32 %v2968, %v2163
        %v2970 = vrot.slane %v2969, 4
        %v2971 = vadd.f32 %v2969, %v2970
        %v2972 = vrot.slane %v2971, 2
        %v2973 = vadd.f32 %v2971, %v2972
        %v2974 = vrot.slane %v2973, 1
        %v2975 = vadd.f32 %v2973, %v2974
        %v2976 = vadd.f32 %v2166, %v2168
        %v2977 = vadd.f32 %v2976, %v2171
        %v2978 = vadd.f32 %v2977, %v2173
        %v2979 = vadd.f32 %v2978, %v2176
        %v2980 = vadd.f32 %v2979, %v2178
        %v2981 = vadd.f32 %v2980, %v2181
        %v2982 = vadd.f32 %v2981, %v2183
        %v2983 = vadd.f32 %v2982, %v2186
        %v2984 = vadd.f32 %v2983, %v2188
        %v2985 = vadd.f32 %v2984, %v2191
        %v2986 = vadd.f32 %v2985, %v2193
        %v2987 = vadd.f32 %v2986, %v2196
        %v2988 = vadd.f32 %v2987, %v2198
        %v2989 = vadd.f32 %v2988, %v2201
        %v2990 = vadd.f32 %v2989, %v2203
        %v2991 = vadd.f32 %v2990, %v2206
        %v2992 = vadd.f32 %v2991, %v2208
        %v2993 = vadd.f32 %v2992, %v2211
        %v2994 = vadd.f32 %v2993, %v2213
        %v2995 = vadd.f32 %v2994, %v2216
        %v2996 = vadd.f32 %v2995, %v2218
        %v2997 = vadd.f32 %v2996, %v2221
        %v2998 = vadd.f32 %v2997, %v2223
        %v2999 = vadd.f32 %v2998, %v2226
        %v3000 = vadd.f32 %v2999, %v2228
        %v3001 = vadd.f32 %v3000, %v2231
        %v3002 = vadd.f32 %v3001, %v2233
        %v3003 = vadd.f32 %v3002, %v2236
        %v3004 = vadd.f32 %v3003, %v2238
        %v3005 = vadd.f32 %v3004, %v2241
        %v3006 = vadd.f32 %v3005, %v2243
        %v3007 = vrot.slane %v3006, 4
        %v3008 = vadd.f32 %v3006, %v3007
        %v3009 = vrot.slane %v3008, 2
        %v3010 = vadd.f32 %v3008, %v3009
        %v3011 = vrot.slane %v3010, 1
        %v3012 = vadd.f32 %v3010, %v3011
        %v3013 = vadd.f32 %v2246, %v2248
        %v3014 = vadd.f32 %v3013, %v2251
        %v3015 = vadd.f32 %v3014, %v2253
        %v3016 = vadd.f32 %v3015, %v2256
        %v3017 = vadd.f32 %v3016, %v2258
        %v3018 = vadd.f32 %v3017, %v2261
        %v3019 = vadd.f32 %v3018, %v2263
        %v3020 = vadd.f32 %v3019, %v2266
        %v3021 = vadd.f32 %v3020, %v2268
        %v3022 = vadd.f32 %v3021, %v2271
        %v3023 = vadd.f32 %v3022, %v2273
        %v3024 = vadd.f32 %v3023, %v2276
        %v3025 = vadd.f32 %v3024, %v2278
        %v3026 = vadd.f32 %v3025, %v2281
        %v3027 = vadd.f32 %v3026, %v2283
        %v3028 = vadd.f32 %v3027, %v2286
        %v3029 = vadd.f32 %v3028, %v2288
        %v3030 = vadd.f32 %v3029, %v2291
        %v3031 = vadd.f32 %v3030, %v2293
        %v3032 = vadd.f32 %v3031, %v2296
        %v3033 = vadd.f32 %v3032, %v2298
        %v3034 = vadd.f32 %v3033, %v2301
        %v3035 = vadd.f32 %v3034, %v2303
        %v3036 = vadd.f32 %v3035, %v2306
        %v3037 = vadd.f32 %v3036, %v2308
        %v3038 = vadd.f32 %v3037, %v2311
        %v3039 = vadd.f32 %v3038, %v2313
        %v3040 = vadd.f32 %v3039, %v2316
        %v3041 = vadd.f32 %v3040, %v2318
        %v3042 = vadd.f32 %v3041, %v2321
        %v3043 = vadd.f32 %v3042, %v2323
        %v3044 = vrot.slane %v3043, 4
        %v3045 = vadd.f32 %v3043, %v3044
        %v3046 = vrot.slane %v3045, 2
        %v3047 = vadd.f32 %v3045, %v3046
        %v3048 = vrot.slane %v3047, 1
        %v3049 = vadd.f32 %v3047, %v3048
        %v3050 = vadd.f32 %v2326, %v2328
        %v3051 = vadd.f32 %v3050, %v2331
        %v3052 = vadd.f32 %v3051, %v2333
        %v3053 = vadd.f32 %v3052, %v2336
        %v3054 = vadd.f32 %v3053, %v2338
        %v3055 = vadd.f32 %v3054, %v2341
        %v3056 = vadd.f32 %v3055, %v2343
        %v3057 = vadd.f32 %v3056, %v2346
        %v3058 = vadd.f32 %v3057, %v2348
        %v3059 = vadd.f32 %v3058, %v2351
        %v3060 = vadd.f32 %v3059, %v2353
        %v3061 = vadd.f32 %v3060, %v2356
        %v3062 = vadd.f32 %v3061, %v2358
        %v3063 = vadd.f32 %v3062, %v2361
        %v3064 = vadd.f32 %v3063, %v2363
        %v3065 = vadd.f32 %v3064, %v2366
        %v3066 = vadd.f32 %v3065, %v2368
        %v3067 = vadd.f32 %v3066, %v2371
        %v3068 = vadd.f32 %v3067, %v2373
        %v3069 = vadd.f32 %v3068, %v2376
        %v3070 = vadd.f32 %v3069, %v2378
        %v3071 = vadd.f32 %v3070, %v2381
        %v3072 = vadd.f32 %v3071, %v2383
        %v3073 = vadd.f32 %v3072, %v2386
        %v3074 = vadd.f32 %v3073, %v2388
        %v3075 = vadd.f32 %v3074, %v2391
        %v3076 = vadd.f32 %v3075, %v2393
        %v3077 = vadd.f32 %v3076, %v2396
        %v3078 = vadd.f32 %v3077, %v2398
        %v3079 = vadd.f32 %v3078, %v2401
        %v3080 = vadd.f32 %v3079, %v2403
        %v3081 = vrot.slane %v3080, 4
        %v3082 = vadd.f32 %v3080, %v3081
        %v3083 = vrot.slane %v3082, 2
        %v3084 = vadd.f32 %v3082, %v3083
        %v3085 = vrot.slane %v3084, 1
        %v3086 = vadd.f32 %v3084, %v3085
        %v3087 = vadd.f32 %v2406, %v2408
        %v3088 = vadd.f32 %v3087, %v2411
        %v3089 = vadd.f32 %v3088, %v2413
        %v3090 = vadd.f32 %v3089, %v2416
        %v3091 = vadd.f32 %v3090, %v2418
        %v3092 = vadd.f32 %v3091, %v2421
        %v3093 = vadd.f32 %v3092, %v2423
        %v3094 = vadd.f32 %v3093, %v2426
        %v3095 = vadd.f32 %v3094, %v2428
        %v3096 = vadd.f32 %v3095, %v2431
        %v3097 = vadd.f32 %v3096, %v2433
        %v3098 = vadd.f32 %v3097, %v2436
        %v3099 = vadd.f32 %v3098, %v2438
        %v3100 = vadd.f32 %v3099, %v2441
        %v3101 = vadd.f32 %v3100, %v2443
        %v3102 = vadd.f32 %v3101, %v2446
        %v3103 = vadd.f32 %v3102, %v2448
        %v3104 = vadd.f32 %v3103, %v2451
        %v3105 = vadd.f32 %v3104, %v2453
        %v3106 = vadd.f32 %v3105, %v2456
        %v3107 = vadd.f32 %v3106, %v2458
        %v3108 = vadd.f32 %v3107, %v2461
        %v3109 = vadd.f32 %v3108, %v2463
        %v3110 = vadd.f32 %v3109, %v2466
        %v3111 = vadd.f32 %v3110, %v2468
        %v3112 = vadd.f32 %v3111, %v2471
        %v3113 = vadd.f32 %v3112, %v2473
        %v3114 = vadd.f32 %v3113, %v2476
        %v3115 = vadd.f32 %v3114, %v2478
        %v3116 = vadd.f32 %v3115, %v2481
        %v3117 = vadd.f32 %v3116, %v2483
        %v3118 = vrot.slane %v3117, 4
        %v3119 = vadd.f32 %v3117, %v3118
        %v3120 = vrot.slane %v3119, 2
        %v3121 = vadd.f32 %v3119, %v3120
        %v3122 = vrot.slane %v3121, 1
        %v3123 = vadd.f32 %v3121, %v3122
        %v3124 = vadd.f32 %v2486, %v2488
        %v3125 = vadd.f32 %v3124, %v2491
        %v3126 = vadd.f32 %v3125, %v2493
        %v3127 = vadd.f32 %v3126, %v2496
        %v3128 = vadd.f32 %v3127, %v2498
        %v3129 = vadd.f32 %v3128, %v2501
        %v3130 = vadd.f32 %v3129, %v2503
        %v3131 = vadd.f32 %v3130, %v2506
        %v3132 = vadd.f32 %v3131, %v2508
        %v3133 = vadd.f32 %v3132, %v2511
        %v3134 = vadd.f32 %v3133, %v2513
        %v3135 = vadd.f32 %v3134, %v2516
        %v3136 = vadd.f32 %v3135, %v2518
        %v3137 = vadd.f32 %v3136, %v2521
        %v3138 = vadd.f32 %v3137, %v2523
        %v3139 = vadd.f32 %v3138, %v2526
        %v3140 = vadd.f32 %v3139, %v2528
        %v3141 = vadd.f32 %v3140, %v2531
        %v3142 = vadd.f32 %v3141, %v2533
        %v3143 = vadd.f32 %v3142, %v2536
        %v3144 = vadd.f32 %v3143, %v2538
        %v3145 = vadd.f32 %v3144, %v2541
        %v3146 = vadd.f32 %v3145, %v2543
        %v3147 = vadd.f32 %v3146, %v2546
        %v3148 = vadd.f32 %v3147, %v2548
        %v3149 = vadd.f32 %v3148, %v2551
        %v3150 = vadd.f32 %v3149, %v2553
        %v3151 = vadd.f32 %v3150, %v2556
        %v3152 = vadd.f32 %v3151, %v2558
        %v3153 = vadd.f32 %v3152, %v2561
        %v3154 = vadd.f32 %v3153, %v2563
        %v3155 = vrot.slane %v3154, 4
        %v3156 = vadd.f32 %v3154, %v3155
        %v3157 = vrot.slane %v3156, 2
        %v3158 = vadd.f32 %v3156, %v3157
        %v3159 = vrot.slane %v3158, 1
        %v3160 = vadd.f32 %v3158, %v3159
        %v3161 = vadd.f32 %v2566, %v2568
        %v3162 = vadd.f32 %v3161, %v2571
        %v3163 = vadd.f32 %v3162, %v2573
        %v3164 = vadd.f32 %v3163, %v2576
        %v3165 = vadd.f32 %v3164, %v2578
        %v3166 = vadd.f32 %v3165, %v2581
        %v3167 = vadd.f32 %v3166, %v2583
        %v3168 = vadd.f32 %v3167, %v2586
        %v3169 = vadd.f32 %v3168, %v2588
        %v3170 = vadd.f32 %v3169, %v2591
        %v3171 = vadd.f32 %v3170, %v2593
        %v3172 = vadd.f32 %v3171, %v2596
        %v3173 = vadd.f32 %v3172, %v2598
        %v3174 = vadd.f32 %v3173, %v2601
        %v3175 = vadd.f32 %v3174, %v2603
        %v3176 = vadd.f32 %v3175, %v2606
        %v3177 = vadd.f32 %v3176, %v2608
        %v3178 = vadd.f32 %v3177, %v2611
        %v3179 = vadd.f32 %v3178, %v2613
        %v3180 = vadd.f32 %v3179, %v2616
        %v3181 = vadd.f32 %v3180, %v2618
        %v3182 = vadd.f32 %v3181, %v2621
        %v3183 = vadd.f32 %v3182, %v2623
        %v3184 = vadd.f32 %v3183, %v2626
        %v3185 = vadd.f32 %v3184, %v2628
        %v3186 = vadd.f32 %v3185, %v2631
        %v3187 = vadd.f32 %v3186, %v2633
        %v3188 = vadd.f32 %v3187, %v2636
        %v3189 = vadd.f32 %v3188, %v2638
        %v3190 = vadd.f32 %v3189, %v2641
        %v3191 = vadd.f32 %v3190, %v2643
        %v3192 = vrot.slane %v3191, 4
        %v3193 = vadd.f32 %v3191, %v3192
        %v3194 = vrot.slane %v3193, 2
        %v3195 = vadd.f32 %v3193, %v3194
        %v3196 = vrot.slane %v3195, 1
        %v3197 = vadd.f32 %v3195, %v3196
        %v3198 = vrcp.pop 256.0
        %v3199 = vmul.f32 256.0, %v3198
        %v3200 = vsub.f32 1.0, %v3199
        %v3201 = vmul.f32 %v3198, %v3200
        %v3202 = vadd.f32 %v3198, %v3201
        %vm3203 = vweird.f32 %v3198
        %v3204 = vsel %vm3203, %v3198, %v3202
        %v3205 = vmul.f32 %v2938, %v3204
        %v3206 = vmul.f32 %v2975, %v3204
        %v3207 = vmul.f32 %v3012, %v3204
        %v3208 = vmul.f32 %v3049, %v3204
        %v3209 = vmul.f32 %v3086, %v3204
        %v3210 = vmul.f32 %v3123, %v3204
        %v3211 = vmul.f32 %v3160, %v3204
        %v3212 = vmul.f32 %v3197, %v3204
        %vm3221 = vcmask 1041409
        %v3222 = vsel %vm3221, %v3206, %v3205
        %vm3223 = vcmask 1042434
        %v3224 = vsel %vm3223, %v3207, %v3222
        %vm3225 = vcmask 1043459
        %v3226 = vsel %vm3225, %v3208, %v3224
        %vm3227 = vcmask 1044484
        %v3228 = vsel %vm3227, %v3209, %v3226
        %vm3229 = vcmask 1045509
        %v3230 = vsel %vm3229, %v3210, %v3228
        %vm3231 = vcmask 1046534
        %v3232 = vsel %vm3231, %v3211, %v3230
        %vm3233 = vcmask 1047559
        %v3234 = vsel %vm3233, %v3212, %v3232
        %s3236 = scalar_lea.vmem [#allocation2], %s2901
        %3237 = vst [vmem:[%s3236] sm:$0xff] %v3234
        %p3238 = scmp.eq.s32.totalorder %s40, 1
        // Predicated region
        $region105: #{resnext_lstm_forward.1} parent=103 // pred_check
          %p3239 = pneg %p3238
        $region106: #{resnext_lstm_forward.1} parent=103 // pred_check_branch
          %3241 = sbr.rel (%p3239) target = $region108
        $region107: #{resnext_lstm_forward.1} parent=103 // pred_region
          %v3242 = vld [vmem:[#allocation2] sm:$0xff]
          %v3243 = vld [vmem:[#allocation2 + $0x8] sm:$0xff]
          %v3244 = vpack.c.bf16 %v3243, %v3242
          %v3245 = vld [vmem:[%s3] sm:$0xf]
          %v3246 = vld [vmem:[%s3 + $0x4] sm:$0xf]
          %v3247 = vld [vmem:[%s3 + $0x8] sm:$0xf]
          %v3248 = vld [vmem:[%s3 + $0xc] sm:$0xf]
          %v3249 = vld [vmem:[%s3 + $0x10] sm:$0xf]
          %v3250 = vld [vmem:[%s3 + $0x14] sm:$0xf]
          %v3251 = vld [vmem:[%s3 + $0x18] sm:$0xf]
          %v3252 = vld [vmem:[%s3 + $0x1c] sm:$0xf]
          %v3253 = vld [vmem:[%s3 + $0x20] sm:$0xf]
          %v3254 = vld [vmem:[%s3 + $0x24] sm:$0xf]
          %v3255 = vld [vmem:[%s3 + $0x28] sm:$0xf]
          %v3256 = vld [vmem:[%s3 + $0x2c] sm:$0xf]
          %v3257 = vld [vmem:[%s3 + $0x30] sm:$0xf]
          %v3258 = vld [vmem:[%s3 + $0x34] sm:$0xf]
          %v3259 = vld [vmem:[%s3 + $0x38] sm:$0xf]
          %v3260 = vld [vmem:[%s3 + $0x3c] sm:$0xf]
          %v3261 = vld [vmem:[%s5] sm:$0x1]
          %v3263 = vperm.slane %v3261, 0
          %v3281 = vunpack.c.l.b16 %v3245
          %v3282 = vunpack.c.l.b16 %v3246
          %v3283 = vunpack.c.l.b16 %v3247
          %v3284 = vunpack.c.l.b16 %v3248
          %v3285 = vunpack.c.l.b16 %v3249
          %v3286 = vunpack.c.l.b16 %v3250
          %v3287 = vunpack.c.l.b16 %v3251
          %v3288 = vunpack.c.l.b16 %v3252
          %v3289 = vunpack.c.l.b16 %v3253
          %v3290 = vunpack.c.l.b16 %v3254
          %v3291 = vunpack.c.l.b16 %v3255
          %v3292 = vunpack.c.l.b16 %v3256
          %v3293 = vunpack.c.l.b16 %v3257
          %v3294 = vunpack.c.l.b16 %v3258
          %v3295 = vunpack.c.l.b16 %v3259
          %v3296 = vunpack.c.l.b16 %v3260
          %v3297 = vpack.c.b16 %v3282, %v3281
          %v3298 = vpack.c.b16 %v3284, %v3283
          %v3299 = vpack.c.b16 %v3286, %v3285
          %v3300 = vpack.c.b16 %v3288, %v3287
          %v3301 = vpack.c.b16 %v3290, %v3289
          %v3302 = vpack.c.b16 %v3292, %v3291
          %v3303 = vpack.c.b16 %v3294, %v3293
          %v3304 = vpack.c.b16 %v3296, %v3295
          %3313 = vmatpush.bf16.msra.mxu0 %v3304
          %3314 = vmatpush.bf16.msra.mxu0 %v3303
          %3315 = vmatpush.bf16.msra.mxu0 %v3302
          %3316 = vmatpush.bf16.msra.mxu0 %v3301
          %3317 = vmatpush.bf16.msra.mxu0 %v3300
          %3318 = vmatpush.bf16.msra.mxu0 %v3299
          %3319 = vmatpush.bf16.msra.mxu0 %v3298
          %3320 = vmatpush.bf16.msra.mxu0 %v3297
          %3321 = vmatmul.bf16.gmra.mxu0 %v3244
          %v3322 = vpop.f32.mrf.mxu0
          %v3323 = vadd.f32 %v3263, %v3322
          %v3324 = vpop.f32.mrf.mxu0
          %v3325 = vadd.f32 %v3263, %v3324
          %3326 = vdwg.mxu0
          %v3327 = vld [vmem:[%s4] sm:$0xff]
          %v3328 = vld [vmem:[%s4 + $0x8] sm:$0xff]
          %v3329 = vld [vmem:[%s4 + $0x10] sm:$0xff]
          %v3330 = vld [vmem:[%s4 + $0x18] sm:$0xff]
          %vm3331 = vcmask 261120
          %v3333 = vsel %vm3331, 0.0, 0
          %3335 = vmatpush.msra.mxu0 0.0
          %3336 = vmatpush.msra.mxu0 0.0
          %3337 = vmatpush.msra.mxu0 0.0
          %3338 = vmatpush.msra.mxu0 0.0
          %3339 = vmatpush.msra.mxu0 0.0
          %3340 = vmatpush.msra.mxu0 0.0
          %3341 = vmatpush.msra.mxu0 0.0
          %3342 = vmatpush.msra.mxu0 0.0
          %3343 = vmatpush.msra.mxu0 0.0
          %3344 = vmatpush.msra.mxu0 0.0
          %3345 = vmatpush.msra.mxu0 0.0
          %3346 = vmatpush.msra.mxu0 0.0
          %3347 = vmatpush.msra.mxu0 %v3330
          %3348 = vmatpush.msra.mxu0 %v3329
          %3349 = vmatpush.msra.mxu0 %v3328
          %3350 = vmatpush.msra.mxu0 %v3327
          %3351 = vmatmul.f32.gmra.mxu0 %v3333
          %v3352 = vpop.f32.mrf.mxu0
          %v3353 = vadd.f32 0.0, %v3352
          %3354 = vdwg.mxu0
          %v3355 = vadd.f32 %v3323, %v3353
          %v3356 = vxor.u32 %v3355, 2147483648
          %v3357 = vmul.f32 %v3356, 1.442695
          %v3358 = vpow.pop %v3357
          %v3359 = vadd.f32 %v3358, 1.0
          %v3360 = vrcp.pop %v3359
          %v3361 = vmul.f32 %v3359, %v3360
          %v3362 = vsub.f32 1.0, %v3361
          %v3363 = vmul.f32 %v3360, %v3362
          %v3364 = vadd.f32 %v3360, %v3363
          %vm3365 = vweird.f32 %v3359
          %vm3366 = vweird.f32 %v3360
          %vm3367 = vmor %vm3365, %vm3366
          %v3368 = vsel %vm3367, %v3360, %v3364
          %v3369 = vand.u32 2147483647, %v3359
          %vm3370 = vcmp.eq.f32.partialorder %v3369, 8.507059e+37
          %v3371 = vand.u32 %v3359, 2147483648
          %v3372 = vor.u32 1.1754944e-38, %v3371
          %v3373 = vsel %vm3370, %v3372, %v3368
          %v3374 = vmul.f32 1.0, %v3373
          %v3375 = vtanh.pop %v3355
          %v3376 = vmul.f32 %v3374, 0.0
          %3378 = vrot.lane.b32.xlu0 %v3375, 64
          %v3379 = vpop.permute.xlu0 %3378
          %v3381 = vmul.f32 %v3374, %v3379
          %3383 = vrot.lane.b32.xlu0 %v3381, 32
          %v3384 = vpop.permute.xlu0 %3383
          %v3386 = vadd.f32 %v3376, %v3384
          %v3387 = vtanh.pop %v3386
          %3389 = vrot.lane.b32.xlu0 %v3387, 64
          %v3390 = vpop.permute.xlu0 %3389
          %v3392 = vmul.f32 %v3374, %v3390
          %3394 = vrot.lane.b32.xlu0 %v3392, 32
          %v3395 = vpop.permute.xlu0 %3394
          %v3396 = vsel %vm3331, %v3395, 0
          %3398 = vmatpush.msra.mxu0 0.0
          %3399 = vmatpush.msra.mxu0 0.0
          %3400 = vmatpush.msra.mxu0 0.0
          %3401 = vmatpush.msra.mxu0 0.0
          %3402 = vmatpush.msra.mxu0 0.0
          %3403 = vmatpush.msra.mxu0 0.0
          %3404 = vmatpush.msra.mxu0 0.0
          %3405 = vmatpush.msra.mxu0 0.0
          %3406 = vmatpush.msra.mxu0 0.0
          %3407 = vmatpush.msra.mxu0 0.0
          %3408 = vmatpush.msra.mxu0 0.0
          %3409 = vmatpush.msra.mxu0 0.0
          %3410 = vmatpush.msra.mxu0 %v3330
          %3411 = vmatpush.msra.mxu0 %v3329
          %3412 = vmatpush.msra.mxu0 %v3328
          %3413 = vmatpush.msra.mxu0 %v3327
          %3414 = vmatmul.f32.gmra.mxu0 %v3396
          %v3415 = vpop.f32.mrf.mxu0
          %v3416 = vadd.f32 0.0, %v3415
          %3417 = vdwg.mxu0
          %v3418 = vadd.f32 %v3325, %v3416
          %v3419 = vxor.u32 %v3418, 2147483648
          %v3420 = vmul.f32 %v3419, 1.442695
          %v3421 = vpow.pop %v3420
          %v3422 = vadd.f32 %v3421, 1.0
          %v3423 = vrcp.pop %v3422
          %v3424 = vmul.f32 %v3422, %v3423
          %v3425 = vsub.f32 1.0, %v3424
          %v3426 = vmul.f32 %v3423, %v3425
          %v3427 = vadd.f32 %v3423, %v3426
          %vm3428 = vweird.f32 %v3422
          %vm3429 = vweird.f32 %v3423
          %vm3430 = vmor %vm3428, %vm3429
          %v3431 = vsel %vm3430, %v3423, %v3427
          %v3432 = vand.u32 2147483647, %v3422
          %vm3433 = vcmp.eq.f32.partialorder %v3432, 8.507059e+37
          %v3434 = vand.u32 %v3422, 2147483648
          %v3435 = vor.u32 1.1754944e-38, %v3434
          %v3436 = vsel %vm3433, %v3435, %v3431
          %v3437 = vmul.f32 1.0, %v3436
          %v3438 = vtanh.pop %v3418
          %v3439 = vmul.f32 %v3437, %v3386
          %3441 = vrot.lane.b32.xlu0 %v3438, 64
          %v3442 = vpop.permute.xlu0 %3441
          %v3444 = vmul.f32 %v3437, %v3442
          %3446 = vrot.lane.b32.xlu0 %v3444, 32
          %v3447 = vpop.permute.xlu0 %3446
          %v3449 = vadd.f32 %v3439, %v3447
          %v3450 = vtanh.pop %v3449
          %3452 = vrot.lane.b32.xlu0 %v3450, 64
          %v3453 = vpop.permute.xlu0 %3452
          %v3455 = vmul.f32 %v3437, %v3453
          %v3456 = vld [vmem:[%s6] sm:$0xf]
          %v3457 = vld [vmem:[%s6 + $0x4] sm:$0xf]
          %v3458 = vld [vmem:[%s6 + $0x8] sm:$0xf]
          %v3459 = vld [vmem:[%s6 + $0xc] sm:$0xf]
          %v3460 = vld [vmem:[%s6 + $0x10] sm:$0xf]
          %v3461 = vld [vmem:[%s6 + $0x14] sm:$0xf]
          %v3462 = vld [vmem:[%s6 + $0x18] sm:$0xf]
          %v3463 = vld [vmem:[%s6 + $0x1c] sm:$0xf]
          %v3464 = vld [vmem:[%s6 + $0x20] sm:$0xf]
          %v3465 = vld [vmem:[%s6 + $0x24] sm:$0xf]
          %v3466 = vld [vmem:[%s6 + $0x28] sm:$0xf]
          %v3467 = vld [vmem:[%s6 + $0x2c] sm:$0xf]
          %v3468 = vld [vmem:[%s6 + $0x30] sm:$0xf]
          %v3469 = vld [vmem:[%s6 + $0x34] sm:$0xf]
          %v3470 = vld [vmem:[%s6 + $0x38] sm:$0xf]
          %v3471 = vld [vmem:[%s6 + $0x3c] sm:$0xf]
          %v3472 = vld [vmem:[%s8] sm:$0x1]
          %v3474 = vperm.slane %v3472, 0
          %v3492 = vunpack.c.l.b16 %v3456
          %v3493 = vunpack.c.l.b16 %v3457
          %v3494 = vunpack.c.l.b16 %v3458
          %v3495 = vunpack.c.l.b16 %v3459
          %v3496 = vunpack.c.l.b16 %v3460
          %v3497 = vunpack.c.l.b16 %v3461
          %v3498 = vunpack.c.l.b16 %v3462
          %v3499 = vunpack.c.l.b16 %v3463
          %v3500 = vunpack.c.l.b16 %v3464
          %v3501 = vunpack.c.l.b16 %v3465
          %v3502 = vunpack.c.l.b16 %v3466
          %v3503 = vunpack.c.l.b16 %v3467
          %v3504 = vunpack.c.l.b16 %v3468
          %v3505 = vunpack.c.l.b16 %v3469
          %v3506 = vunpack.c.l.b16 %v3470
          %v3507 = vunpack.c.l.b16 %v3471
          %v3508 = vpack.c.b16 %v3493, %v3492
          %v3509 = vpack.c.b16 %v3495, %v3494
          %v3510 = vpack.c.b16 %v3497, %v3496
          %v3511 = vpack.c.b16 %v3499, %v3498
          %v3512 = vpack.c.b16 %v3501, %v3500
          %v3513 = vpack.c.b16 %v3503, %v3502
          %v3514 = vpack.c.b16 %v3505, %v3504
          %v3515 = vpack.c.b16 %v3507, %v3506
          %3524 = vmatpush.bf16.msra.mxu0 %v3515
          %3525 = vmatpush.bf16.msra.mxu0 %v3514
          %3526 = vmatpush.bf16.msra.mxu0 %v3513
          %3527 = vmatpush.bf16.msra.mxu0 %v3512
          %3528 = vmatpush.bf16.msra.mxu0 %v3511
          %3529 = vmatpush.bf16.msra.mxu0 %v3510
          %3530 = vmatpush.bf16.msra.mxu0 %v3509
          %3531 = vmatpush.bf16.msra.mxu0 %v3508
          %3532 = vmatmul.bf16.gmra.mxu0 %v3244
          %v3533 = vpop.f32.mrf.mxu0
          %v3534 = vadd.f32 %v3474, %v3533
          %v3535 = vpop.f32.mrf.mxu0
          %v3536 = vadd.f32 %v3474, %v3535
          %3537 = vdwg.mxu0
          %v3538 = vld [vmem:[%s7] sm:$0xff]
          %v3539 = vld [vmem:[%s7 + $0x8] sm:$0xff]
          %v3540 = vld [vmem:[%s7 + $0x10] sm:$0xff]
          %v3541 = vld [vmem:[%s7 + $0x18] sm:$0xff]
          %3542 = vmatpush.msra.mxu0 0.0
          %3543 = vmatpush.msra.mxu0 0.0
          %3544 = vmatpush.msra.mxu0 0.0
          %3545 = vmatpush.msra.mxu0 0.0
          %3546 = vmatpush.msra.mxu0 0.0
          %3547 = vmatpush.msra.mxu0 0.0
          %3548 = vmatpush.msra.mxu0 0.0
          %3549 = vmatpush.msra.mxu0 0.0
          %3550 = vmatpush.msra.mxu0 0.0
          %3551 = vmatpush.msra.mxu0 0.0
          %3552 = vmatpush.msra.mxu0 0.0
          %3553 = vmatpush.msra.mxu0 0.0
          %3554 = vmatpush.msra.mxu0 %v3541
          %3555 = vmatpush.msra.mxu0 %v3540
          %3556 = vmatpush.msra.mxu0 %v3539
          %3557 = vmatpush.msra.mxu0 %v3538
          %3558 = vmatmul.f32.gmra.mxu0 %v3333
          %v3559 = vpop.f32.mrf.mxu0
          %v3560 = vadd.f32 0.0, %v3559
          %3561 = vdwg.mxu0
          %v3562 = vadd.f32 %v3536, %v3560
          %v3563 = vxor.u32 %v3562, 2147483648
          %v3564 = vmul.f32 %v3563, 1.442695
          %v3565 = vpow.pop %v3564
          %v3566 = vadd.f32 %v3565, 1.0
          %v3567 = vrcp.pop %v3566
          %v3568 = vmul.f32 %v3566, %v3567
          %v3569 = vsub.f32 1.0, %v3568
          %v3570 = vmul.f32 %v3567, %v3569
          %v3571 = vadd.f32 %v3567, %v3570
          %vm3572 = vweird.f32 %v3566
          %vm3573 = vweird.f32 %v3567
          %vm3574 = vmor %vm3572, %vm3573
          %v3575 = vsel %vm3574, %v3567, %v3571
          %v3576 = vand.u32 2147483647, %v3566
          %vm3577 = vcmp.eq.f32.partialorder %v3576, 8.507059e+37
          %v3578 = vand.u32 %v3566, 2147483648
          %v3579 = vor.u32 1.1754944e-38, %v3578
          %v3580 = vsel %vm3577, %v3579, %v3575
          %v3581 = vmul.f32 1.0, %v3580
          %v3582 = vtanh.pop %v3562
          %v3583 = vmul.f32 %v3581, 0.0
          %3585 = vrot.lane.b32.xlu0 %v3582, 64
          %v3586 = vpop.permute.xlu0 %3585
          %v3588 = vmul.f32 %v3581, %v3586
          %3590 = vrot.lane.b32.xlu0 %v3588, 32
          %v3591 = vpop.permute.xlu0 %3590
          %v3593 = vadd.f32 %v3583, %v3591
          %v3594 = vtanh.pop %v3593
          %3596 = vrot.lane.b32.xlu0 %v3594, 64
          %v3597 = vpop.permute.xlu0 %3596
          %v3599 = vmul.f32 %v3581, %v3597
          %3601 = vrot.lane.b32.xlu0 %v3599, 32
          %v3602 = vpop.permute.xlu0 %3601
          %v3603 = vsel %vm3331, %v3602, 0
          %3605 = vmatpush.msra.mxu0 0.0
          %3606 = vmatpush.msra.mxu0 0.0
          %3607 = vmatpush.msra.mxu0 0.0
          %3608 = vmatpush.msra.mxu0 0.0
          %3609 = vmatpush.msra.mxu0 0.0
          %3610 = vmatpush.msra.mxu0 0.0
          %3611 = vmatpush.msra.mxu0 0.0
          %3612 = vmatpush.msra.mxu0 0.0
          %3613 = vmatpush.msra.mxu0 0.0
          %3614 = vmatpush.msra.mxu0 0.0
          %3615 = vmatpush.msra.mxu0 0.0
          %3616 = vmatpush.msra.mxu0 0.0
          %3617 = vmatpush.msra.mxu0 %v3541
          %3618 = vmatpush.msra.mxu0 %v3540
          %3619 = vmatpush.msra.mxu0 %v3539
          %3620 = vmatpush.msra.mxu0 %v3538
          %3621 = vmatmul.f32.gmra.mxu0 %v3603
          %v3622 = vpop.f32.mrf.mxu0
          %v3623 = vadd.f32 0.0, %v3622
          %3624 = vdwg.mxu0
          %v3625 = vadd.f32 %v3534, %v3623
          %v3626 = vxor.u32 %v3625, 2147483648
          %v3627 = vmul.f32 %v3626, 1.442695
          %v3628 = vpow.pop %v3627
          %v3629 = vadd.f32 %v3628, 1.0
          %v3630 = vrcp.pop %v3629
          %v3631 = vmul.f32 %v3629, %v3630
          %v3632 = vsub.f32 1.0, %v3631
          %v3633 = vmul.f32 %v3630, %v3632
          %v3634 = vadd.f32 %v3630, %v3633
          %vm3635 = vweird.f32 %v3629
          %vm3636 = vweird.f32 %v3630
          %vm3637 = vmor %vm3635, %vm3636
          %v3638 = vsel %vm3637, %v3630, %v3634
          %v3639 = vand.u32 2147483647, %v3629
          %vm3640 = vcmp.eq.f32.partialorder %v3639, 8.507059e+37
          %v3641 = vand.u32 %v3629, 2147483648
          %v3642 = vor.u32 1.1754944e-38, %v3641
          %v3643 = vsel %vm3640, %v3642, %v3638
          %v3644 = vmul.f32 1.0, %v3643
          %v3645 = vtanh.pop %v3625
          %v3646 = vmul.f32 %v3644, %v3593
          %3648 = vrot.lane.b32.xlu0 %v3645, 64
          %v3649 = vpop.permute.xlu0 %3648
          %v3651 = vmul.f32 %v3644, %v3649
          %3653 = vrot.lane.b32.xlu0 %v3651, 32
          %v3654 = vpop.permute.xlu0 %3653
          %v3656 = vadd.f32 %v3646, %v3654
          %v3657 = vtanh.pop %v3656
          %3659 = vrot.lane.b32.xlu0 %v3657, 64
          %v3660 = vpop.permute.xlu0 %3659
          %v3662 = vmul.f32 %v3644, %v3660
          %3664 = vrot.lane.b32.xlu0 %v3455, 32
          %v3665 = vpop.permute.xlu0 %3664
          %3669 = vrot.lane.b32.xlu0 %v3662, 64
          %v3670 = vpop.permute.xlu0 %3669
          %3671 = vrot.lane.b32.xlu0 %v3599, 64
          %v3672 = vpop.permute.xlu0 %3671
          %v3675 = vsel %vm3331, %v3395, %v3670
          %v3676 = vsel %vm3331, %v3665, %v3672
          %v3677 = vpack.c.bf16 %v3676, %v3675
          %v3678 = vld [vmem:[%s9] sm:$0xf]
          %v3679 = vld [vmem:[%s9 + $0x4] sm:$0xf]
          %v3680 = vld [vmem:[%s9 + $0x8] sm:$0xf]
          %v3681 = vld [vmem:[%s9 + $0xc] sm:$0xf]
          %v3682 = vld [vmem:[%s9 + $0x10] sm:$0xf]
          %v3683 = vld [vmem:[%s9 + $0x14] sm:$0xf]
          %v3684 = vld [vmem:[%s9 + $0x18] sm:$0xf]
          %v3685 = vld [vmem:[%s9 + $0x1c] sm:$0xf]
          %v3686 = vld [vmem:[%s11] sm:$0x1]
          %v3688 = vperm.slane %v3686, 0
          %v3698 = vunpack.c.l.b16 %v3678
          %v3699 = vunpack.c.l.b16 %v3679
          %v3700 = vunpack.c.l.b16 %v3680
          %v3701 = vunpack.c.l.b16 %v3681
          %v3702 = vunpack.c.l.b16 %v3682
          %v3703 = vunpack.c.l.b16 %v3683
          %v3704 = vunpack.c.l.b16 %v3684
          %v3705 = vunpack.c.l.b16 %v3685
          %v3706 = vpack.c.b16 %v3699, %v3698
          %v3707 = vpack.c.b16 %v3701, %v3700
          %v3708 = vpack.c.b16 %v3703, %v3702
          %v3709 = vpack.c.b16 %v3705, %v3704
          %vm3714 = vcmask 523264
          %v3716 = vsel %vm3714, %v3677, 0
          %3718 = vmatpush.bf16.msra.mxu0 0
          %3719 = vmatpush.bf16.msra.mxu0 0
          %3720 = vmatpush.bf16.msra.mxu0 0
          %3721 = vmatpush.bf16.msra.mxu0 0
          %3722 = vmatpush.bf16.msra.mxu0 %v3709
          %3723 = vmatpush.bf16.msra.mxu0 %v3708
          %3724 = vmatpush.bf16.msra.mxu0 %v3707
          %3725 = vmatpush.bf16.msra.mxu0 %v3706
          %3726 = vmatmul.bf16.gmra.mxu0 %v3716
          %v3727 = vpop.f32.mrf.mxu0
          %v3728 = vadd.f32 %v3688, %v3727
          %v3729 = vpop.f32.mrf.mxu0
          %v3730 = vadd.f32 %v3688, %v3729
          %3731 = vdwg.mxu0
          %v3732 = vld [vmem:[%s10] sm:$0xff]
          %v3733 = vld [vmem:[%s10 + $0x8] sm:$0xff]
          %v3734 = vld [vmem:[%s10 + $0x10] sm:$0xff]
          %v3735 = vld [vmem:[%s10 + $0x18] sm:$0xff]
          %3736 = vmatpush.msra.mxu0 0.0
          %3737 = vmatpush.msra.mxu0 0.0
          %3738 = vmatpush.msra.mxu0 0.0
          %3739 = vmatpush.msra.mxu0 0.0
          %3740 = vmatpush.msra.mxu0 0.0
          %3741 = vmatpush.msra.mxu0 0.0
          %3742 = vmatpush.msra.mxu0 0.0
          %3743 = vmatpush.msra.mxu0 0.0
          %3744 = vmatpush.msra.mxu0 0.0
          %3745 = vmatpush.msra.mxu0 0.0
          %3746 = vmatpush.msra.mxu0 0.0
          %3747 = vmatpush.msra.mxu0 0.0
          %3748 = vmatpush.msra.mxu0 %v3735
          %3749 = vmatpush.msra.mxu0 %v3734
          %3750 = vmatpush.msra.mxu0 %v3733
          %3751 = vmatpush.msra.mxu0 %v3732
          %3752 = vmatmul.f32.gmra.mxu0 %v3333
          %v3753 = vpop.f32.mrf.mxu0
          %v3754 = vadd.f32 0.0, %v3753
          %3755 = vdwg.mxu0
          %v3756 = vadd.f32 %v3728, %v3754
          %v3757 = vxor.u32 %v3756, 2147483648
          %v3758 = vmul.f32 %v3757, 1.442695
          %v3759 = vpow.pop %v3758
          %v3760 = vadd.f32 %v3759, 1.0
          %v3761 = vrcp.pop %v3760
          %v3762 = vmul.f32 %v3760, %v3761
          %v3763 = vsub.f32 1.0, %v3762
          %v3764 = vmul.f32 %v3761, %v3763
          %v3765 = vadd.f32 %v3761, %v3764
          %vm3766 = vweird.f32 %v3760
          %vm3767 = vweird.f32 %v3761
          %vm3768 = vmor %vm3766, %vm3767
          %v3769 = vsel %vm3768, %v3761, %v3765
          %v3770 = vand.u32 2147483647, %v3760
          %vm3771 = vcmp.eq.f32.partialorder %v3770, 8.507059e+37
          %v3772 = vand.u32 %v3760, 2147483648
          %v3773 = vor.u32 1.1754944e-38, %v3772
          %v3774 = vsel %vm3771, %v3773, %v3769
          %v3775 = vmul.f32 1.0, %v3774
          %v3776 = vtanh.pop %v3756
          %v3777 = vmul.f32 %v3775, 0.0
          %3779 = vrot.lane.b32.xlu0 %v3776, 64
          %v3780 = vpop.permute.xlu0 %3779
          %v3782 = vmul.f32 %v3775, %v3780
          %3784 = vrot.lane.b32.xlu0 %v3782, 32
          %v3785 = vpop.permute.xlu0 %3784
          %v3787 = vadd.f32 %v3777, %v3785
          %v3788 = vtanh.pop %v3787
          %3790 = vrot.lane.b32.xlu0 %v3788, 64
          %v3791 = vpop.permute.xlu0 %3790
          %v3793 = vmul.f32 %v3775, %v3791
          %3795 = vrot.lane.b32.xlu0 %v3793, 32
          %v3796 = vpop.permute.xlu0 %3795
          %v3797 = vsel %vm3331, %v3796, 0
          %3799 = vmatpush.msra.mxu0 0.0
          %3800 = vmatpush.msra.mxu0 0.0
          %3801 = vmatpush.msra.mxu0 0.0
          %3802 = vmatpush.msra.mxu0 0.0
          %3803 = vmatpush.msra.mxu0 0.0
          %3804 = vmatpush.msra.mxu0 0.0
          %3805 = vmatpush.msra.mxu0 0.0
          %3806 = vmatpush.msra.mxu0 0.0
          %3807 = vmatpush.msra.mxu0 0.0
          %3808 = vmatpush.msra.mxu0 0.0
          %3809 = vmatpush.msra.mxu0 0.0
          %3810 = vmatpush.msra.mxu0 0.0
          %3811 = vmatpush.msra.mxu0 %v3735
          %3812 = vmatpush.msra.mxu0 %v3734
          %3813 = vmatpush.msra.mxu0 %v3733
          %3814 = vmatpush.msra.mxu0 %v3732
          %3815 = vmatmul.f32.gmra.mxu0 %v3797
          %v3816 = vpop.f32.mrf.mxu0
          %v3817 = vadd.f32 0.0, %v3816
          %3818 = vdwg.mxu0
          %v3819 = vadd.f32 %v3730, %v3817
          %v3820 = vxor.u32 %v3819, 2147483648
          %v3821 = vmul.f32 %v3820, 1.442695
          %v3822 = vpow.pop %v3821
          %v3823 = vadd.f32 %v3822, 1.0
          %v3824 = vrcp.pop %v3823
          %v3825 = vmul.f32 %v3823, %v3824
          %v3826 = vsub.f32 1.0, %v3825
          %v3827 = vmul.f32 %v3824, %v3826
          %v3828 = vadd.f32 %v3824, %v3827
          %vm3829 = vweird.f32 %v3823
          %vm3830 = vweird.f32 %v3824
          %vm3831 = vmor %vm3829, %vm3830
          %v3832 = vsel %vm3831, %v3824, %v3828
          %v3833 = vand.u32 2147483647, %v3823
          %vm3834 = vcmp.eq.f32.partialorder %v3833, 8.507059e+37
          %v3835 = vand.u32 %v3823, 2147483648
          %v3836 = vor.u32 1.1754944e-38, %v3835
          %v3837 = vsel %vm3834, %v3836, %v3832
          %v3838 = vmul.f32 1.0, %v3837
          %v3839 = vtanh.pop %v3819
          %v3840 = vmul.f32 %v3838, %v3787
          %3842 = vrot.lane.b32.xlu0 %v3839, 64
          %v3843 = vpop.permute.xlu0 %3842
          %v3845 = vmul.f32 %v3838, %v3843
          %3847 = vrot.lane.b32.xlu0 %v3845, 32
          %v3848 = vpop.permute.xlu0 %3847
          %v3850 = vadd.f32 %v3840, %v3848
          %v3851 = vtanh.pop %v3850
          %3853 = vrot.lane.b32.xlu0 %v3851, 64
          %v3854 = vpop.permute.xlu0 %3853
          %v3856 = vmul.f32 %v3838, %v3854
          %v3857 = vld [vmem:[%s12] sm:$0xf]
          %v3858 = vld [vmem:[%s12 + $0x4] sm:$0xf]
          %v3859 = vld [vmem:[%s12 + $0x8] sm:$0xf]
          %v3860 = vld [vmem:[%s12 + $0xc] sm:$0xf]
          %v3861 = vld [vmem:[%s12 + $0x10] sm:$0xf]
          %v3862 = vld [vmem:[%s12 + $0x14] sm:$0xf]
          %v3863 = vld [vmem:[%s12 + $0x18] sm:$0xf]
          %v3864 = vld [vmem:[%s12 + $0x1c] sm:$0xf]
          %v3865 = vld [vmem:[%s14] sm:$0x1]
          %v3867 = vperm.slane %v3865, 0
          %v3877 = vunpack.c.l.b16 %v3857
          %v3878 = vunpack.c.l.b16 %v3858
          %v3879 = vunpack.c.l.b16 %v3859
          %v3880 = vunpack.c.l.b16 %v3860
          %v3881 = vunpack.c.l.b16 %v3861
          %v3882 = vunpack.c.l.b16 %v3862
          %v3883 = vunpack.c.l.b16 %v3863
          %v3884 = vunpack.c.l.b16 %v3864
          %v3885 = vpack.c.b16 %v3878, %v3877
          %v3886 = vpack.c.b16 %v3880, %v3879
          %v3887 = vpack.c.b16 %v3882, %v3881
          %v3888 = vpack.c.b16 %v3884, %v3883
          %3893 = vmatpush.bf16.msra.mxu0 0
          %3894 = vmatpush.bf16.msra.mxu0 0
          %3895 = vmatpush.bf16.msra.mxu0 0
          %3896 = vmatpush.bf16.msra.mxu0 0
          %3897 = vmatpush.bf16.msra.mxu0 %v3888
          %3898 = vmatpush.bf16.msra.mxu0 %v3887
          %3899 = vmatpush.bf16.msra.mxu0 %v3886
          %3900 = vmatpush.bf16.msra.mxu0 %v3885
          %3901 = vmatmul.bf16.gmra.mxu0 %v3716
          %v3902 = vpop.f32.mrf.mxu0
          %v3903 = vadd.f32 %v3867, %v3902
          %v3904 = vpop.f32.mrf.mxu0
          %v3905 = vadd.f32 %v3867, %v3904
          %3906 = vdwg.mxu0
          %v3907 = vld [vmem:[%s13] sm:$0xff]
          %v3908 = vld [vmem:[%s13 + $0x8] sm:$0xff]
          %v3909 = vld [vmem:[%s13 + $0x10] sm:$0xff]
          %v3910 = vld [vmem:[%s13 + $0x18] sm:$0xff]
          %3911 = vmatpush.msra.mxu0 0.0
          %3912 = vmatpush.msra.mxu0 0.0
          %3913 = vmatpush.msra.mxu0 0.0
          %3914 = vmatpush.msra.mxu0 0.0
          %3915 = vmatpush.msra.mxu0 0.0
          %3916 = vmatpush.msra.mxu0 0.0
          %3917 = vmatpush.msra.mxu0 0.0
          %3918 = vmatpush.msra.mxu0 0.0
          %3919 = vmatpush.msra.mxu0 0.0
          %3920 = vmatpush.msra.mxu0 0.0
          %3921 = vmatpush.msra.mxu0 0.0
          %3922 = vmatpush.msra.mxu0 0.0
          %3923 = vmatpush.msra.mxu0 %v3910
          %3924 = vmatpush.msra.mxu0 %v3909
          %3925 = vmatpush.msra.mxu0 %v3908
          %3926 = vmatpush.msra.mxu0 %v3907
          %3927 = vmatmul.f32.gmra.mxu0 %v3333
          %v3928 = vpop.f32.mrf.mxu0
          %v3929 = vadd.f32 0.0, %v3928
          %3930 = vdwg.mxu0
          %v3931 = vadd.f32 %v3905, %v3929
          %v3932 = vxor.u32 %v3931, 2147483648
          %v3933 = vmul.f32 %v3932, 1.442695
          %v3934 = vpow.pop %v3933
          %v3935 = vadd.f32 %v3934, 1.0
          %v3936 = vrcp.pop %v3935
          %v3937 = vmul.f32 %v3935, %v3936
          %v3938 = vsub.f32 1.0, %v3937
          %v3939 = vmul.f32 %v3936, %v3938
          %v3940 = vadd.f32 %v3936, %v3939
          %vm3941 = vweird.f32 %v3935
          %vm3942 = vweird.f32 %v3936
          %vm3943 = vmor %vm3941, %vm3942
          %v3944 = vsel %vm3943, %v3936, %v3940
          %v3945 = vand.u32 2147483647, %v3935
          %vm3946 = vcmp.eq.f32.partialorder %v3945, 8.507059e+37
          %v3947 = vand.u32 %v3935, 2147483648
          %v3948 = vor.u32 1.1754944e-38, %v3947
          %v3949 = vsel %vm3946, %v3948, %v3944
          %v3950 = vmul.f32 1.0, %v3949
          %v3951 = vtanh.pop %v3931
          %v3952 = vmul.f32 %v3950, 0.0
          %3954 = vrot.lane.b32.xlu0 %v3951, 64
          %v3955 = vpop.permute.xlu0 %3954
          %v3957 = vmul.f32 %v3950, %v3955
          %3959 = vrot.lane.b32.xlu0 %v3957, 32
          %v3960 = vpop.permute.xlu0 %3959
          %v3962 = vadd.f32 %v3952, %v3960
          %v3963 = vtanh.pop %v3962
          %3965 = vrot.lane.b32.xlu0 %v3963, 64
          %v3966 = vpop.permute.xlu0 %3965
          %v3968 = vmul.f32 %v3950, %v3966
          %3970 = vrot.lane.b32.xlu0 %v3968, 32
          %v3971 = vpop.permute.xlu0 %3970
          %v3972 = vsel %vm3331, %v3971, 0
          %3974 = vmatpush.msra.mxu0 0.0
          %3975 = vmatpush.msra.mxu0 0.0
          %3976 = vmatpush.msra.mxu0 0.0
          %3977 = vmatpush.msra.mxu0 0.0
          %3978 = vmatpush.msra.mxu0 0.0
          %3979 = vmatpush.msra.mxu0 0.0
          %3980 = vmatpush.msra.mxu0 0.0
          %3981 = vmatpush.msra.mxu0 0.0
          %3982 = vmatpush.msra.mxu0 0.0
          %3983 = vmatpush.msra.mxu0 0.0
          %3984 = vmatpush.msra.mxu0 0.0
          %3985 = vmatpush.msra.mxu0 0.0
          %3986 = vmatpush.msra.mxu0 %v3910
          %3987 = vmatpush.msra.mxu0 %v3909
          %3988 = vmatpush.msra.mxu0 %v3908
          %3989 = vmatpush.msra.mxu0 %v3907
          %3990 = vmatmul.f32.gmra.mxu0 %v3972
          %v3991 = vpop.f32.mrf.mxu0
          %v3992 = vadd.f32 0.0, %v3991
          %3993 = vdwg.mxu0
          %v3994 = vadd.f32 %v3903, %v3992
          %v3995 = vxor.u32 %v3994, 2147483648
          %v3996 = vmul.f32 %v3995, 1.442695
          %v3997 = vpow.pop %v3996
          %v3998 = vadd.f32 %v3997, 1.0
          %v3999 = vrcp.pop %v3998
          %v4000 = vmul.f32 %v3998, %v3999
          %v4001 = vsub.f32 1.0, %v4000
          %v4002 = vmul.f32 %v3999, %v4001
          %v4003 = vadd.f32 %v3999, %v4002
          %vm4004 = vweird.f32 %v3998
          %vm4005 = vweird.f32 %v3999
          %vm4006 = vmor %vm4004, %vm4005
          %v4007 = vsel %vm4006, %v3999, %v4003
          %v4008 = vand.u32 2147483647, %v3998
          %vm4009 = vcmp.eq.f32.partialorder %v4008, 8.507059e+37
          %v4010 = vand.u32 %v3998, 2147483648
          %v4011 = vor.u32 1.1754944e-38, %v4010
          %v4012 = vsel %vm4009, %v4011, %v4007
          %v4013 = vmul.f32 1.0, %v4012
          %v4014 = vtanh.pop %v3994
          %v4015 = vmul.f32 %v4013, %v3962
          %4017 = vrot.lane.b32.xlu0 %v4014, 64
          %v4018 = vpop.permute.xlu0 %4017
          %v4020 = vmul.f32 %v4013, %v4018
          %4022 = vrot.lane.b32.xlu0 %v4020, 32
          %v4023 = vpop.permute.xlu0 %4022
          %v4025 = vadd.f32 %v4015, %v4023
          %v4026 = vtanh.pop %v4025
          %4028 = vrot.lane.b32.xlu0 %v4026, 64
          %v4029 = vpop.permute.xlu0 %4028
          %v4031 = vmul.f32 %v4013, %v4029
          %4033 = vrot.lane.b32.xlu0 %v3856, 32
          %v4034 = vpop.permute.xlu0 %4033
          %4038 = vrot.lane.b32.xlu0 %v4031, 64
          %v4039 = vpop.permute.xlu0 %4038
          %4040 = vrot.lane.b32.xlu0 %v3968, 64
          %v4041 = vpop.permute.xlu0 %4040
          %v4044 = vsel %vm3331, %v3796, %v4039
          %v4045 = vsel %vm3331, %v4034, %v4041
          %v4046 = vld [vmem:[%s15] sm:$0xff]
          %v4047 = vld [vmem:[%s15 + $0x8] sm:$0xff]
          %v4048 = vld [vmem:[%s15 + $0x10] sm:$0xff]
          %v4049 = vld [vmem:[%s15 + $0x18] sm:$0xff]
          %v4050 = vld [vmem:[%s15 + $0x20] sm:$0xff]
          %v4051 = vld [vmem:[%s15 + $0x28] sm:$0xff]
          %v4052 = vld [vmem:[%s15 + $0x30] sm:$0xff]
          %v4053 = vld [vmem:[%s15 + $0x38] sm:$0xff]
          %v4054 = vld [vmem:[%s16] sm:$0x1]
          %v4056 = vperm.slane %v4054, 0
          %v4059 = vsel %vm3714, %v4044, 0
          %v4062 = vsel %vm3714, %v4045, 0
          %4064 = vmatpush.msra.mxu0 0.0
          %4065 = vmatpush.msra.mxu0 0.0
          %4066 = vmatpush.msra.mxu0 0.0
          %4067 = vmatpush.msra.mxu0 0.0
          %4068 = vmatpush.msra.mxu0 0.0
          %4069 = vmatpush.msra.mxu0 0.0
          %4070 = vmatpush.msra.mxu0 0.0
          %4071 = vmatpush.msra.mxu0 0.0
          %4072 = vmatpush.msra.mxu0 %v4053
          %4073 = vmatpush.msra.mxu0 %v4052
          %4074 = vmatpush.msra.mxu0 %v4051
          %4075 = vmatpush.msra.mxu0 %v4050
          %4076 = vmatpush.msra.mxu0 %v4049
          %4077 = vmatpush.msra.mxu0 %v4048
          %4078 = vmatpush.msra.mxu0 %v4047
          %4079 = vmatpush.msra.mxu0 %v4046
          %4080 = vmatmul.f32.gmra.mxu0 %v4059
          %v4081 = vpop.f32.mrf.mxu0
          %v4082 = vadd.f32 %v4056, %v4081
          %4083 = vmatmul.f32.gmra.mxu0 %v4062
          %v4084 = vpop.f32.mrf.mxu0
          %v4085 = vadd.f32 %v4056, %v4084
          %4086 = vdwg.mxu0
          %v4087 = vtanh.pop %v4082
          %v4088 = vtanh.pop %v4085
          %v4089 = vld [vmem:[%s17] sm:$0x1]
          %v4091 = vperm.slane %v4089, 0
          %v4093 = vmul.f32 %v4087, %v4091
          %v4094 = vmul.f32 %v4088, %v4091
          %4095 = vadd.xlane.f32.xlu0 %v4093
          %v4096 = vpop.xlane.xlu0 %4095
          %4097 = vadd.xlane.f32.xlu0 %v4094
          %v4098 = vpop.xlane.xlu0 %4097
          %v4099 = vld [vmem:[#allocation3] sm:$0x1]
          %v4101 = vperm.slane %v4099, 0
          %4102 = vset.pattern.permute.xlu0 0
          %4103 = vperm.xlu0 %4102, %v4101
          %v4104 = vpop.permute.xlu0 %4103
          %v4106 = vadd.f32 %v4096, %v4104
          %v4107 = vadd.f32 %v4098, %v4104
          %v4110 = vlaneseq
          %v4111 = vand.u32 %v4110, 127
          %v4112 = vperm.slane %v4106, %v4111
          %v4113 = vperm.slane %v4107, %v4111
          %v4114 = vsel %vm3221, %v4113, %v4112
          %vm4116 = vcmask 58368
          %v4117 = vsel %vm4116, %v4114, -inf
          %4118 = vmax.xlane.f32.xlu0 %v4117
          %v4119 = vpop.xlane.xlu0 %4118
          %v4121 = vperm.slane %v4119, 0
          %v4122 = vperm.slane %v4119, 1
          %v4125 = vsub.f32 %v4106, %v4121
          %v4126 = vsub.f32 %v4107, %v4122
          %v4127 = vmul.f32 %v4125, 1.442695
          %v4128 = vpow.pop %v4127
          %v4129 = vmul.f32 %v4126, 1.442695
          %v4130 = vpow.pop %v4129
          %4133 = vset.pattern.permute.xlu0 0
          %4134 = vperm.xlu0 %4133, %v4128
          %v4135 = vpop.permute.xlu0 %4134
          %4136 = vset.pattern.permute.xlu0 0
          %4137 = vperm.xlu0 %4136, %v4130
          %v4138 = vpop.permute.xlu0 %4137
          %v4139 = vperm.slane %v4135, %v4111
          %v4140 = vperm.slane %v4138, %v4111
          %v4141 = vsel %vm3221, %v4140, %v4139
          %v4143 = vsel %vm4116, %v4141, 0.0
          %4144 = vadd.xlane.f32.xlu0 %v4143
          %v4145 = vpop.xlane.xlu0 %4144
          %v4147 = vperm.slane %v4145, 0
          %v4148 = vperm.slane %v4145, 1
          %v4151 = vrcp.pop %v4147
          %v4152 = vmul.f32 %v4147, %v4151
          %v4153 = vsub.f32 1.0, %v4152
          %v4154 = vmul.f32 %v4151, %v4153
          %v4155 = vadd.f32 %v4151, %v4154
          %vm4156 = vweird.f32 %v4147
          %vm4157 = vweird.f32 %v4151
          %vm4158 = vmor %vm4156, %vm4157
          %v4159 = vsel %vm4158, %v4151, %v4155
          %v4160 = vand.u32 2147483647, %v4147
          %vm4161 = vcmp.eq.f32.partialorder %v4160, 8.507059e+37
          %v4162 = vand.u32 %v4147, 2147483648
          %v4163 = vor.u32 1.1754944e-38, %v4162
          %v4164 = vsel %vm4161, %v4163, %v4159
          %v4165 = vmul.f32 %v4128, %v4164
          %v4166 = vrcp.pop %v4148
          %v4167 = vmul.f32 %v4148, %v4166
          %v4168 = vsub.f32 1.0, %v4167
          %v4169 = vmul.f32 %v4166, %v4168
          %v4170 = vadd.f32 %v4166, %v4169
          %vm4171 = vweird.f32 %v4148
          %vm4172 = vweird.f32 %v4166
          %vm4173 = vmor %vm4171, %vm4172
          %v4174 = vsel %vm4173, %v4166, %v4170
          %v4175 = vand.u32 2147483647, %v4148
          %vm4176 = vcmp.eq.f32.partialorder %v4175, 8.507059e+37
          %v4177 = vand.u32 %v4148, 2147483648
          %v4178 = vor.u32 1.1754944e-38, %v4177
          %v4179 = vsel %vm4176, %v4178, %v4174
          %v4180 = vmul.f32 %v4130, %v4179
          %4182 = vset.pattern.permute.xlu0 0
          %4183 = vperm.xlu0 %4182, %v4165
          %v4184 = vpop.permute.xlu0 %4183
          %4187 = vset.pattern.permute.xlu0 0
          %4188 = vperm.xlu0 %4187, %v4180
          %v4189 = vpop.permute.xlu0 %4188
          %v4191 = vmul.f32 %v4184, %v4044
          %v4192 = vmul.f32 %v4189, %v4045
          %v4193 = vsel %vm3714, %v4191, 0.0
          %v4194 = vrot.slane %v4193, 4
          %v4195 = vadd.f32 %v4193, %v4194
          %v4196 = vrot.slane %v4195, 2
          %v4197 = vadd.f32 %v4195, %v4196
          %v4198 = vrot.slane %v4197, 1
          %v4199 = vadd.f32 %v4197, %v4198
          %v4200 = vsel %vm3714, %v4192, 0.0
          %v4201 = vrot.slane %v4200, 4
          %v4202 = vadd.f32 %v4200, %v4201
          %v4203 = vrot.slane %v4202, 2
          %v4204 = vadd.f32 %v4202, %v4203
          %v4205 = vrot.slane %v4204, 1
          %v4206 = vadd.f32 %v4204, %v4205
          %v4207 = vld [vmem:[%s19] sm:$0xff]
          %v4208 = vld [vmem:[%s19 + $0x8] sm:$0xff]
          %v4209 = vld [vmem:[%s19 + $0x10] sm:$0xff]
          %v4210 = vld [vmem:[%s19 + $0x18] sm:$0xff]
          %v4211 = vld [vmem:[%s19 + $0x20] sm:$0xff]
          %v4212 = vld [vmem:[%s19 + $0x28] sm:$0xff]
          %v4213 = vld [vmem:[%s19 + $0x30] sm:$0xff]
          %v4214 = vld [vmem:[%s19 + $0x38] sm:$0xff]
          %v4215 = vld [vmem:[%s20] sm:$0x1]
          %v4217 = vperm.slane %v4215, 0
          %v4221 = vsel %vm3221, %v4206, %v4199
          %v4222 = vsel %vm3714, %v4221, 0
          %4224 = vmatpush.msra.mxu0 0.0
          %4225 = vmatpush.msra.mxu0 0.0
          %4226 = vmatpush.msra.mxu0 0.0
          %4227 = vmatpush.msra.mxu0 0.0
          %4228 = vmatpush.msra.mxu0 0.0
          %4229 = vmatpush.msra.mxu0 0.0
          %4230 = vmatpush.msra.mxu0 0.0
          %4231 = vmatpush.msra.mxu0 0.0
          %4232 = vmatpush.msra.mxu0 %v4214
          %4233 = vmatpush.msra.mxu0 %v4213
          %4234 = vmatpush.msra.mxu0 %v4212
          %4235 = vmatpush.msra.mxu0 %v4211
          %4236 = vmatpush.msra.mxu0 %v4210
          %4237 = vmatpush.msra.mxu0 %v4209
          %4238 = vmatpush.msra.mxu0 %v4208
          %4239 = vmatpush.msra.mxu0 %v4207
          %4240 = vmatmul.f32.gmra.mxu0 %v4222
          %v4241 = vpop.f32.mrf.mxu0
          %v4242 = vadd.f32 %v4217, %v4241
          %4243 = vdwg.mxu0
          %4244 = vst [vmem:[#allocation6] sm:$0x3] %v4242
        $region108: #{resnext_lstm_forward.1} parent=103 // pred_fallthru
          _
        %s4245 = sand.u32 %s494, 1
        %s4246 = scalar_lea.sflag [#allocation5], %s4245
        %s4247 = sand.u32 %s494, 1
        %s4248 = smul.addr %s4247, 2048
        %s4249 = scalar_lea.vmem [#allocation4], %s4248
        // Predicated region
        $region109: #{resnext_lstm_forward.1} parent=103 // pred_check
          %p4250 = pneg %p504
        $region110: #{resnext_lstm_forward.1} parent=103 // pred_check_branch
          %4252 = sbr.rel (%p4250) target = $region112
        $region111: #{resnext_lstm_forward.1} parent=103 // pred_region
          %s4253 = smul.u32 256, %s40
          %4255 = vsyncadd %s4246, 0
          %s4256 = smul.addr %s4253, 8
          %s4257 = scalar_lea.hbm %s21, %s4256
          %s4258 = sshll.u32 %s4249, 4
          %s4259 = int_to_ptr.vmem [resolvable:$true] %s4258
          %s4260 = sshll.u32 %s4257, 4
          %s4261 = int_to_ptr.hbm [resolvable:$true] %s4260
          %4266 = dma.vmem_to_hbm [thread:$0]  %s4259, 32768, %s4261, %s4246, 128, 128, 8
        $region112: #{resnext_lstm_forward.1} parent=103 // pred_fallthru
          _
        // Predicated region
        $region113: #{resnext_lstm_forward.1} parent=103 // pred_check
          %p4267 = pneg %p525
        $region114: #{resnext_lstm_forward.1} parent=103 // pred_check_branch
          %4269 = sbr.rel (%p4267) target = $region116
        $region115: #{resnext_lstm_forward.1} parent=103 // pred_region
          %4271 = vsyncadd [#allocation7], 0
          %s4273 = sshll.u32 [#allocation6], 4
          %s4274 = int_to_ptr.vmem [resolvable:$true] %s4273
          %s4275 = sshll.u32 %s22, 4
          %s4276 = int_to_ptr.hbm [resolvable:$true] %s4275
          %4278 = dma.vmem_to_hbm [thread:$0]  %s4274, 32, %s4276, [#allocation7]
        $region116: #{resnext_lstm_forward.1} parent=103 // pred_fallthru
          _
        // Predicated region
        $region117: #{resnext_lstm_forward.1} parent=103 // pred_check
          %p4279 = pneg %p525
        $region118: #{resnext_lstm_forward.1} parent=103 // pred_check_branch
          %4281 = sbr.rel (%p4279) target = $region120
        $region119: #{resnext_lstm_forward.1} parent=103 // pred_region
          %4283 = dma.done [#allocation7], 32
        $region120: #{resnext_lstm_forward.1} parent=103 // pred_fallthru
          _
      $region104: #{resnext_lstm_forward.1} parent=5 // pred_fallthru
        _
      %p4284 = scmp.le.s32.totalorder 2, %s35
      // Predicated region
      $region121: #{resnext_lstm_forward.1} parent=5 // pred_check
        %p4285 = pneg %p4284
      $region122: #{resnext_lstm_forward.1} parent=5 // pred_check_branch
        %4287 = sbr.rel (%p4285) target = $region124
      $region123: #{resnext_lstm_forward.1} parent=5 // pred_region
        %s4288 = ssub.s32 %s35, 2
        // Predicated region
        $region125: #{resnext_lstm_forward.1} parent=123 // pred_check
          %p4289 = pneg %p510
        $region126: #{resnext_lstm_forward.1} parent=123 // pred_check_branch
          %4291 = sbr.rel (%p4289) target = $region128
        $region127: #{resnext_lstm_forward.1} parent=123 // pred_region
          %s4292 = sand.u32 %s495, 1
          %s4293 = scalar_lea.sflag [#allocation5], %s4292
          %s4294 = sand.u32 %s495, 1
          %s4295 = smul.addr %s4294, 2048
          %s4296 = scalar_lea.vmem [#allocation4], %s4295
          %4298 = dma.done %s4293, 32768
        $region128: #{resnext_lstm_forward.1} parent=123 // pred_fallthru
          _
      $region124: #{resnext_lstm_forward.1} parent=5 // pred_fallthru
        _
    $region6: #{resnext_lstm_forward.1} parent=1 // loop_footer
      %s39 = sadd.s32 1, %s35
    $region7: #{resnext_lstm_forward.1} parent=1 // loop_footer_branch
      %34 = sbr.rel target = $region3
    $region8: #{resnext_lstm_forward.1} parent=1 // loop_exit
      _
    %4299 = vsyncpa [#allocation5], 1
    %s4300 = scalar_lea.sflag [#allocation5], 1
    %4301 = vsyncpa %s4300, 1
    %4302 = vsyncpa [#allocation7], 1

</llo_original>
